<compile_context>
chip_gen: v7x
topology: tpu7x:2x2x1
jax: 0.10.0
libtpu: 0.0.40
codegen_flags: <defaults>
</compile_context>

<pallas_src>
import functools

import jax
import jax.numpy as jnp
from jax import lax
from jax.experimental import pallas as pl
from jax.experimental.pallas import tpu as pltpu


def _round_up(x, m):
    return (x + m - 1) // m * m


# ----------------------------------------------------------------------------
# Row-tiled fused dense kernels
# ----------------------------------------------------------------------------

def _fc12_kernel(x_ref, w1_ref, b1_ref, w2_ref, b2_ref, o_ref):
    # relu(fc2(relu(fc1(x)))) fused -> one HBM round trip for the activation.
    h = jnp.dot(x_ref[...], w1_ref[...],
                preferred_element_type=jnp.float32) + b1_ref[...]
    h = jnp.maximum(h, 0.0)
    y = jnp.dot(h, w2_ref[...],
                preferred_element_type=jnp.float32) + b2_ref[...]
    o_ref[...] = jnp.maximum(y, 0.0)


def _fc_after_kernel(x_ref, res_ref, w_ref, b_ref, o_ref):
    # residual + relu(fc_after(x)) fused.
    y = jnp.dot(x_ref[...], w_ref[...],
                preferred_element_type=jnp.float32) + b_ref[...]
    o_ref[...] = jnp.maximum(y, 0.0) + res_ref[...]


def _gates1_kernel(x_ref, wf_ref, bf_ref, wr_ref, br_ref, of_ref, or_ref):
    # LSTM layer-1 gate precompute, both directions in one kernel.
    x = x_ref[...]
    of_ref[...] = jnp.dot(x, wf_ref[...],
                          preferred_element_type=jnp.float32) + bf_ref[...]
    or_ref[...] = jnp.dot(x, wr_ref[...],
                          preferred_element_type=jnp.float32) + br_ref[...]


def _gates2_kernel(xf_ref, xr_ref, wff_ref, wfr_ref, bf_ref,
                   wrf_ref, wrr_ref, br_ref, of_ref, or_ref):
    # LSTM layer-2 gate precompute; consumes the fwd/rev hidden streams
    # separately so the bidirectional lane-concat never hits HBM.
    xf = xf_ref[...]
    xr = xr_ref[...]
    of_ref[...] = (jnp.dot(xf, wff_ref[...], preferred_element_type=jnp.float32)
                   + jnp.dot(xr, wfr_ref[...], preferred_element_type=jnp.float32)
                   + bf_ref[...])
    or_ref[...] = (jnp.dot(xf, wrf_ref[...], preferred_element_type=jnp.float32)
                   + jnp.dot(xr, wrr_ref[...], preferred_element_type=jnp.float32)
                   + br_ref[...])


def _fc3_kernel(xf_ref, xr_ref, wf_ref, wr_ref, b_ref, o_ref):
    o_ref[...] = (jnp.dot(xf_ref[...], wf_ref[...], preferred_element_type=jnp.float32)
                  + jnp.dot(xr_ref[...], wr_ref[...], preferred_element_type=jnp.float32)
                  + b_ref[...])


def _rows_call(kernel, row_inputs, full_inputs, out_ns, tm_cap=512):
    """Run `kernel` tiled over the shared leading (row) dim of `row_inputs`.

    kernel signature: (row_refs..., full_refs..., out_refs...).
    Row inputs/outputs are tiled (TM, N) over a "parallel" grid; weights and
    biases (all 2-D) are passed as full blocks.
    """
    M = row_inputs[0].shape[0]
    TM = min(tm_cap, _round_up(M, 8))
    Mp = _round_up(M, TM)
    rows = [jnp.pad(r, ((0, Mp - M), (0, 0))) if Mp != M else r
            for r in row_inputs]

    in_specs = [pl.BlockSpec((TM, r.shape[1]), lambda i: (i, 0)) for r in rows]
    in_specs += [pl.BlockSpec(f.shape, lambda i: (0, 0)) for f in full_inputs]

    out_shape = tuple(jax.ShapeDtypeStruct((Mp, n), jnp.float32) for n in out_ns)
    out_specs = tuple(pl.BlockSpec((TM, n), lambda i: (i, 0)) for n in out_ns)
    single = len(out_ns) == 1

    res = pl.pallas_call(
        kernel,
        out_shape=out_shape[0] if single else out_shape,
        grid=(Mp // TM,),
        in_specs=in_specs,
        out_specs=out_specs[0] if single else out_specs,
        compiler_params=pltpu.CompilerParams(dimension_semantics=("parallel",)),
    )(*rows, *full_inputs)

    outs = (res,) if single else tuple(res)
    if Mp != M:
        outs = tuple(o[:M] for o in outs)
    return outs[0] if single else outs


# ----------------------------------------------------------------------------
# ResNet block (whole block fused, B folded into the matmul M dimension)
# ----------------------------------------------------------------------------

def _resnet_block_kernel(x_ref, w0_ref, w1_ref, w2_ref,
                         s0_ref, b0_ref, s1_ref, b1_ref, s2_ref, b2_ref,
                         o_ref, *, T):
    # x_ref: (B_tile*T, Cin) channels-last rows ordered (b, t).
    x = x_ref[...]
    MT = x.shape[0]
    t_idx = lax.broadcasted_iota(jnp.int32, (MT, 1), 0) % T
    first = t_idx == 0          # rows with t == 0   (no left neighbour)
    last = t_idx == T - 1       # rows with t == T-1 (no right neighbour)

    def conv3(v, w_ref):
        # 1-D conv along T via XLU sublane rolls + batch-boundary masks
        # (only the middle width-column of each 3x3 kernel sees real data).
        v_prev = jnp.where(first, 0.0, pltpu.roll(v, shift=1, axis=0))
        v_next = jnp.where(last, 0.0, pltpu.roll(v, shift=MT - 1, axis=0))
        y = jnp.dot(v_prev, w_ref[0], preferred_element_type=jnp.float32)
        y = y + jnp.dot(v, w_ref[1], preferred_element_type=jnp.float32)
        y = y + jnp.dot(v_next, w_ref[2], preferred_element_type=jnp.float32)
        return y

    # out = bn0(conv0(x)) + bn2(conv2(relu(bn1(conv1(x)))))
    h = jnp.maximum(conv3(x, w1_ref) * s1_ref[...] + b1_ref[...], 0.0)
    y2 = conv3(h, w2_ref) * s2_ref[...] + b2_ref[...]
    y0 = jnp.dot(x, w0_ref[...],
                 preferred_element_type=jnp.float32) * s0_ref[...] + b0_ref[...]
    o_ref[...] = (y0 + y2).astype(o_ref.dtype)


def resnet_block(x_flat, p, T):
    """x_flat: (B*T, Cin) channels-last rows; returns (B*T, Cout)."""
    M, Cin = x_flat.shape
    B = M // T
    Cout = p['w1'].shape[2]

    # Fold as many batch elements as possible into one row tile (<= 1024 rows,
    # rows a multiple of 8 unless the tile is the full array).
    b_tile = B
    for cand in range(B, 0, -1):
        if B % cand == 0 and cand * T <= 1024 and (cand * T) % 8 == 0:
            b_tile = cand
            break
    MT = b_tile * T

    full2 = lambda i: (0, 0)
    full3 = lambda i: (0, 0, 0)
    return pl.pallas_call(
        functools.partial(_resnet_block_kernel, T=T),
        out_shape=jax.ShapeDtypeStruct((M, Cout), jnp.float32),
        grid=(B // b_tile,),
        in_specs=[pl.BlockSpec((MT, Cin), lambda i: (i, 0)),
                  pl.BlockSpec((Cin, Cout), full2),       # w0 (1x1 conv)
                  pl.BlockSpec((3, Cin, Cout), full3),    # w1
                  pl.BlockSpec((3, Cout, Cout), full3),   # w2
                  pl.BlockSpec((1, Cout), full2),         # s0
                  pl.BlockSpec((1, Cout), full2),         # b0
                  pl.BlockSpec((1, Cout), full2),         # s1
                  pl.BlockSpec((1, Cout), full2),         # b1
                  pl.BlockSpec((1, Cout), full2),         # s2
                  pl.BlockSpec((1, Cout), full2)],        # b2
        out_specs=pl.BlockSpec((MT, Cout), lambda i: (i, 0)),
        compiler_params=pltpu.CompilerParams(dimension_semantics=("parallel",)),
    )(x_flat, p['w0'], p['w1'], p['w2'],
      p['s0'], p['b0'], p['s1'], p['b1'], p['s2'], p['b2'])


# ----------------------------------------------------------------------------
# Bidirectional LSTM layer: both directions interleaved, T-chunked grid
# ----------------------------------------------------------------------------

def _bilstm_kernel(gxf_ref, gxr_ref, whhf_ref, whhr_ref, of_ref, or_ref,
                   hf, cf, hr, cr, *, TC, H2):
    # gxf_ref: (TC, B, 4*H2) fwd gate precompute, chunks walk t = 0, 1, ...
    # gxr_ref: (TC, B, 4*H2) rev gate precompute, chunks walk t = T-1, T-2, ...
    # Gate column layout is (i, f, o, g): one sigmoid over a contiguous 3*H2
    # slab, one tanh over the last H2.
    @pl.when(pl.program_id(0) == 0)
    def _():
        hf[...] = jnp.zeros_like(hf)
        cf[...] = jnp.zeros_like(cf)
        hr[...] = jnp.zeros_like(hr)
        cr[...] = jnp.zeros_like(cr)

    def step(t, carry):
        tr = TC - 1 - t
        gates_f = gxf_ref[t] + jnp.dot(hf[...], whhf_ref[...],
                                       preferred_element_type=jnp.float32)
        gates_r = gxr_ref[tr] + jnp.dot(hr[...], whhr_ref[...],
                                        preferred_element_type=jnp.float32)
        ifo_f = jax.nn.sigmoid(gates_f[:, :3 * H2])
        ifo_r = jax.nn.sigmoid(gates_r[:, :3 * H2])
        g_f = jnp.tanh(gates_f[:, 3 * H2:])
        g_r = jnp.tanh(gates_r[:, 3 * H2:])
        c_f = ifo_f[:, H2:2 * H2] * cf[...] + ifo_f[:, :H2] * g_f
        c_r = ifo_r[:, H2:2 * H2] * cr[...] + ifo_r[:, :H2] * g_r
        h_f = ifo_f[:, 2 * H2:] * jnp.tanh(c_f)
        h_r = ifo_r[:, 2 * H2:] * jnp.tanh(c_r)
        cf[...] = c_f
        cr[...] = c_r
        hf[...] = h_f
        hr[...] = h_r
        of_ref[t] = h_f
        or_ref[tr] = h_r
        return carry

    lax.fori_loop(0, TC, step, 0, unroll=TC <= 16)


def bilstm_layer(gx_f, gx_r, whh_f, whh_r):
    """One bidirectional LSTM layer in a single T-chunked kernel.

    gx_f / gx_r: (T, B, 4*H2) time-major precomputed x @ W_ih + b per
    direction.  Returns (h_fwd, h_rev), each (T, B, H2) time-major.
    """
    T, B, G = gx_f.shape
    H2 = G // 4

    # Bound VMEM residency by chunking T over the (sequential) grid; h/c state
    # lives in scratch and is carried across grid steps.
    TC = T
    if T > 128:
        for cand in range(128, 0, -1):
            if T % cand == 0:
                TC = cand
                break
    NC = T // TC

    flops = 2 * T * (2 * B * H2 * 4 * H2) + 2 * T * B * 12 * H2
    transcend = 2 * T * B * 5 * H2
    bytes_acc = 4 * (2 * T * B * 4 * H2 + 2 * T * B * H2 + 2 * H2 * 4 * H2)

    return pl.pallas_call(
        functools.partial(_bilstm_kernel, TC=TC, H2=H2),
        out_shape=(jax.ShapeDtypeStruct((T, B, H2), jnp.float32),
                   jax.ShapeDtypeStruct((T, B, H2), jnp.float32)),
        grid=(NC,),
        in_specs=[pl.BlockSpec((TC, B, G), lambda c: (c, 0, 0)),
                  pl.BlockSpec((TC, B, G), lambda c: (NC - 1 - c, 0, 0)),
                  pl.BlockSpec((H2, G), lambda c: (0, 0)),
                  pl.BlockSpec((H2, G), lambda c: (0, 0))],
        out_specs=(pl.BlockSpec((TC, B, H2), lambda c: (c, 0, 0)),
                   pl.BlockSpec((TC, B, H2), lambda c: (NC - 1 - c, 0, 0))),
        scratch_shapes=[pltpu.VMEM((B, H2), jnp.float32)] * 4,
        compiler_params=pltpu.CompilerParams(
            dimension_semantics=("arbitrary",)),
        cost_estimate=pl.CostEstimate(flops=flops, transcendentals=transcend,
                                      bytes_accessed=bytes_acc),
    )(gx_f, gx_r, whh_f, whh_r)


# ----------------------------------------------------------------------------
# Parameter init (deterministic, synthetic)
# ----------------------------------------------------------------------------

def _bn_fold(key, cout, conv_bias):
    k1, k2, k3, k4 = jax.random.split(key, 4)
    gamma = 1.0 + 0.1 * jax.random.normal(k1, (cout,), jnp.float32)
    beta = 0.1 * jax.random.normal(k2, (cout,), jnp.float32)
    mean = 0.1 * jax.random.normal(k3, (cout,), jnp.float32)
    var = 1.0 + 0.1 * jax.random.uniform(k4, (cout,), jnp.float32)
    scale = gamma / jnp.sqrt(var + 1e-5)
    bias = (conv_bias - mean) * scale + beta
    return scale.reshape(1, cout), bias.reshape(1, cout)


def init_params(key, args):
    H, H2 = args['hidden_size'], args['hidden_size_2']
    keys = iter(jax.random.split(key, 256))
    nrm = lambda shape: 0.1 * jax.random.normal(next(keys), shape, jnp.float32)

    params = {
        'fc1_w': nrm((args['input_size'], H)), 'fc1_b': nrm((1, H)),
        'fc2_w': nrm((H, H)), 'fc2_b': nrm((1, H)),
    }

    block_list = [H] + [int(b) for b in args['block_list'].split(',')]
    resnet = []
    for i in range(1, len(block_list)):
        for (cin, cout) in ((block_list[i - 1], block_list[i]),
                            (block_list[i], block_list[i])):
            s0, b0 = _bn_fold(next(keys), cout, nrm((cout,)))
            s1, b1 = _bn_fold(next(keys), cout, nrm((cout,)))
            s2, b2 = _bn_fold(next(keys), cout, nrm((cout,)))
            resnet.append({
                'w0': nrm((cin, cout)),          # 1x1 conv
                'w1': nrm((3, cin, cout)),       # middle column of 3x3 conv
                'w2': nrm((3, cout, cout)),
                's0': s0, 'b0': b0, 's1': s1, 'b1': b1, 's2': s2, 'b2': b2,
            })
    params['resnet'] = resnet

    c_last = block_list[-1]
    params['fc_after_w'] = nrm((c_last, H))
    params['fc_after_b'] = nrm((1, H))

    # Synthetic LSTM params generated directly in the kernel gate layout
    # (i, f, o, g) (PyTorch stores (i, f, g, o); a fixed column permutation).
    lstm = []
    l1 = []
    for _ in range(2):                       # forward, reverse
        l1.append({'w_ih': nrm((H, 4 * H2)),
                   'w_hh': nrm((H2, 4 * H2)),
                   'b': nrm((1, 4 * H2)) + nrm((1, 4 * H2))})   # b_ih + b_hh
    lstm.append(l1)
    l2 = []
    for _ in range(2):
        # layer-2 input is [h_fwd ; h_rev]; keep w_ih split by halves so the
        # concat never needs to be materialized.
        l2.append({'w_ih_f': nrm((H2, 4 * H2)),
                   'w_ih_r': nrm((H2, 4 * H2)),
                   'w_hh': nrm((H2, 4 * H2)),
                   'b': nrm((1, 4 * H2)) + nrm((1, 4 * H2))})
    lstm.append(l2)
    params['lstm'] = lstm

    params['fc3_w_f'] = nrm((H2, args['num_classes']))
    params['fc3_w_r'] = nrm((H2, args['num_classes']))
    params['fc3_b'] = nrm((1, args['num_classes']))
    return params


# ----------------------------------------------------------------------------
# Forward pass
# ----------------------------------------------------------------------------

def dblstm2_forward(x, params, args):
    B, T, Din = x.shape
    H, H2 = args['hidden_size'], args['hidden_size_2']

    # fc1 -> relu -> fc2 -> relu : single fused, row-tiled kernel.
    out = _rows_call(_fc12_kernel, [x.reshape(B * T, Din)],
                     [params['fc1_w'], params['fc1_b'],
                      params['fc2_w'], params['fc2_b']], [H])
    residual = out                                            # (B*T, H)

    # PyTorch: out.view(B, H, T, 1) -> NCHW (raw row-major reinterpretation).
    # ResNet kernels run channels-last on flattened (B*T, C) rows.
    y = jnp.transpose(out.reshape(B, H, T), (0, 2, 1)).reshape(B * T, H)
    for blk in params['resnet']:
        y = resnet_block(y, blk, T)
    c_last = y.shape[1]
    # PyTorch: out.view(B, T, C_last) of the NCHW result (raw reshape again).
    flat = jnp.transpose(y.reshape(B, T, c_last), (0, 2, 1)).reshape(B * T, c_last)

    # fc_after -> relu -> + residual : fused kernel.
    out = _rows_call(_fc_after_kernel, [flat, residual],
                     [params['fc_after_w'], params['fc_after_b']], [H])

    # ---- 2-layer bidirectional LSTM (batch_first, h0 = c0 = 0) ----
    # Layer 1: both directions' gate precompute fused in one kernel, then a
    # single batch->time-major transpose per direction.
    l1 = params['lstm'][0]
    gx_f, gx_r = _rows_call(_gates1_kernel, [out],
                            [l1[0]['w_ih'], l1[0]['b'],
                             l1[1]['w_ih'], l1[1]['b']], [4 * H2, 4 * H2])
    gx_f = jnp.transpose(gx_f.reshape(B, T, 4 * H2), (1, 0, 2))
    gx_r = jnp.transpose(gx_r.reshape(B, T, 4 * H2), (1, 0, 2))
    hf, hr = bilstm_layer(gx_f, gx_r, l1[0]['w_hh'], l1[1]['w_hh'])

    # Layer 2: everything already time-major -> no HBM transposes; fwd/rev
    # streams consumed separately (no lane-concat pass over HBM).
    l2 = params['lstm'][1]
    gx_f, gx_r = _rows_call(_gates2_kernel,
                            [hf.reshape(T * B, H2), hr.reshape(T * B, H2)],
                            [l2[0]['w_ih_f'], l2[0]['w_ih_r'], l2[0]['b'],
                             l2[1]['w_ih_f'], l2[1]['w_ih_r'], l2[1]['b']],
                            [4 * H2, 4 * H2])
    hf, hr = bilstm_layer(gx_f.reshape(T, B, 4 * H2),
                          gx_r.reshape(T, B, 4 * H2),
                          l2[0]['w_hh'], l2[1]['w_hh'])

    # fc3 on [h_fwd ; h_rev] without materializing the concat.
    logits = _rows_call(_fc3_kernel,
                        [hf.reshape(T * B, H2), hr.reshape(T * B, H2)],
                        [params['fc3_w_f'], params['fc3_w_r'],
                         params['fc3_b']], [args['num_classes']])
    return jnp.transpose(logits.reshape(T, B, args['num_classes']), (1, 0, 2))


# ----------------------------------------------------------------------------

if __name__ == "__main__":
    args = dict(input_size=16, hidden_size=32, hidden_size_2=16,
                num_classes=8, block_list="32")
    B, T = 2, 8

    key = jax.random.PRNGKey(0)
    kx, kp = jax.random.split(key)
    x = jax.random.normal(kx, (B, T, args['input_size']), dtype=jnp.float32)
    params = init_params(kp, args)

    fwd = jax.jit(lambda xx, pp: dblstm2_forward(xx, pp, args))
    out = jax.block_until_ready(fwd(x, params))
    assert out.shape == (B, T, args['num_classes']), out.shape
    assert jnp.all(jnp.isfinite(out))
    print("KERNEL_OK")
</pallas_src>

<mosaic_0001>
module attributes {stable_mosaic.version = 11 : i64} {
  func.func @_fc12_kernel(%arg0: i32, %arg1: memref<16x16xf32, #tpu.memory_space<vmem>>, %arg2: memref<16x32xf32, #tpu.memory_space<vmem>>, %arg3: memref<1x32xf32, #tpu.memory_space<vmem>>, %arg4: memref<32x32xf32, #tpu.memory_space<vmem>>, %arg5: memref<1x32xf32, #tpu.memory_space<vmem>>, %arg6: memref<16x32xf32, #tpu.memory_space<vmem>>) attributes {dimension_semantics = [#tpu.dimension_semantics<parallel>], iteration_bounds = array<i64: 1>, scalar_prefetch = 0 : i64, scratch_operands = 0 : i64, tpu.core_type = #tpu.core_type<tc>, window_params = [{transform_indices = @transform_0, window_bounds = array<i64: 16, 16>}, {pipeline_mode = #tpu.pipeline_mode<synchronous>, transform_indices = @transform_1, window_bounds = array<i64: 16, 32>}, {pipeline_mode = #tpu.pipeline_mode<synchronous>, transform_indices = @transform_2, window_bounds = array<i64: 1, 32>}, {pipeline_mode = #tpu.pipeline_mode<synchronous>, transform_indices = @transform_3, window_bounds = array<i64: 32, 32>}, {pipeline_mode = #tpu.pipeline_mode<synchronous>, transform_indices = @transform_4, window_bounds = array<i64: 1, 32>}, {transform_indices = @transform_5, window_bounds = array<i64: 16, 32>}]} {
    %c0 = arith.constant 0 : index
    %c0_0 = arith.constant 0 : index
    %0 = vector.load %arg1[%c0, %c0_0] : memref<16x16xf32, #tpu.memory_space<vmem>>, vector<16x16xf32>
    %c0_1 = arith.constant 0 : index
    %c0_2 = arith.constant 0 : index
    %1 = vector.load %arg2[%c0_1, %c0_2] : memref<16x32xf32, #tpu.memory_space<vmem>>, vector<16x32xf32>
    %cst = arith.constant dense<0.000000e+00> : vector<16x32xf32>
    %2 = tpu.matmul %0, %1, %cst {dimension_numbers = #tpu.dot_dimension_numbers<[1], [0], [0], [1], [0, 0, 1, 1], [], []>} : vector<16x16xf32>, vector<16x32xf32>, vector<16x32xf32> -> vector<16x32xf32>
    %c0_3 = arith.constant 0 : index
    %c0_4 = arith.constant 0 : index
    %3 = vector.load %arg3[%c0_3, %c0_4] : memref<1x32xf32, #tpu.memory_space<vmem>>, vector<1x32xf32>
    %4 = vector.broadcast %3 : vector<1x32xf32> to vector<16x32xf32>
    %5 = arith.addf %2, %4 : vector<16x32xf32>
    %cst_5 = arith.constant 0.000000e+00 : f32
    %6 = vector.broadcast %cst_5 : f32 to vector<16x32xf32>
    %7 = arith.maximumf %5, %6 : vector<16x32xf32>
    %c0_6 = arith.constant 0 : index
    %c0_7 = arith.constant 0 : index
    %8 = vector.load %arg4[%c0_6, %c0_7] : memref<32x32xf32, #tpu.memory_space<vmem>>, vector<32x32xf32>
    %cst_8 = arith.constant dense<0.000000e+00> : vector<16x32xf32>
    %9 = tpu.matmul %7, %8, %cst_8 {dimension_numbers = #tpu.dot_dimension_numbers<[1], [0], [0], [1], [0, 0, 1, 1], [], []>} : vector<16x32xf32>, vector<32x32xf32>, vector<16x32xf32> -> vector<16x32xf32>
    %c0_9 = arith.constant 0 : index
    %c0_10 = arith.constant 0 : index
    %10 = vector.load %arg5[%c0_9, %c0_10] : memref<1x32xf32, #tpu.memory_space<vmem>>, vector<1x32xf32>
    %11 = vector.broadcast %10 : vector<1x32xf32> to vector<16x32xf32>
    %12 = arith.addf %9, %11 : vector<16x32xf32>
    %cst_11 = arith.constant 0.000000e+00 : f32
    %13 = vector.broadcast %cst_11 : f32 to vector<16x32xf32>
    %14 = arith.maximumf %12, %13 : vector<16x32xf32>
    %c0_12 = arith.constant 0 : index
    %c0_13 = arith.constant 0 : index
    %15 = vector.load %arg6[%c0_12, %c0_13] : memref<16x32xf32, #tpu.memory_space<vmem>>, vector<16x32xf32>
    tpu.vector_store %arg6[%c0_12, %c0_13], %14 {strides = array<i32>} : memref<16x32xf32, #tpu.memory_space<vmem>>, vector<16x32xf32>,
    return
  }
  func.func @transform_0(%arg0: i32) -> (i32, i32) {
    %c0_i32 = arith.constant 0 : i32
    %c0_i32_0 = arith.constant 0 : i32
    return %arg0, %c0_i32 : i32, i32
  }
  func.func @transform_1(%arg0: i32) -> (i32, i32) {
    %c0_i32 = arith.constant 0 : i32
    %c0_i32_0 = arith.constant 0 : i32
    %c0_i32_1 = arith.constant 0 : i32
    return %c0_i32, %c0_i32_0 : i32, i32
  }
  func.func @transform_2(%arg0: i32) -> (i32, i32) {
    %c0_i32 = arith.constant 0 : i32
    %c0_i32_0 = arith.constant 0 : i32
    %c0_i32_1 = arith.constant 0 : i32
    return %c0_i32, %c0_i32_0 : i32, i32
  }
  func.func @transform_3(%arg0: i32) -> (i32, i32) {
    %c0_i32 = arith.constant 0 : i32
    %c0_i32_0 = arith.constant 0 : i32
    %c0_i32_1 = arith.constant 0 : i32
    return %c0_i32, %c0_i32_0 : i32, i32
  }
  func.func @transform_4(%arg0: i32) -> (i32, i32) {
    %c0_i32 = arith.constant 0 : i32
    %c0_i32_0 = arith.constant 0 : i32
    %c0_i32_1 = arith.constant 0 : i32
    return %c0_i32, %c0_i32_0 : i32, i32
  }
  func.func @transform_5(%arg0: i32) -> (i32, i32) {
    %c0_i32 = arith.constant 0 : i32
    %c0_i32_0 = arith.constant 0 : i32
    return %arg0, %c0_i32 : i32, i32
  }
}

module attributes {stable_mosaic.version = 11 : i64} {
  func.func @_resnet_block_kernel(%arg0: i32, %arg1: memref<16x32xf32, #tpu.memory_space<vmem>>, %arg2: memref<32x32xf32, #tpu.memory_space<vmem>>, %arg3: memref<3x32x32xf32, #tpu.memory_space<vmem>>, %arg4: memref<3x32x32xf32, #tpu.memory_space<vmem>>, %arg5: memref<1x32xf32, #tpu.memory_space<vmem>>, %arg6: memref<1x32xf32, #tpu.memory_space<vmem>>, %arg7: memref<1x32xf32, #tpu.memory_space<vmem>>, %arg8: memref<1x32xf32, #tpu.memory_space<vmem>>, %arg9: memref<1x32xf32, #tpu.memory_space<vmem>>, %arg10: memref<1x32xf32, #tpu.memory_space<vmem>>, %arg11: memref<16x32xf32, #tpu.memory_space<vmem>>) attributes {dimension_semantics = [#tpu.dimension_semantics<parallel>], iteration_bounds = array<i64: 1>, scalar_prefetch = 0 : i64, scratch_operands = 0 : i64, tpu.core_type = #tpu.core_type<tc>, window_params = [{transform_indices = @transform_0, window_bounds = array<i64: 16, 32>}, {pipeline_mode = #tpu.pipeline_mode<synchronous>, transform_indices = @transform_1, window_bounds = array<i64: 32, 32>}, {pipeline_mode = #tpu.pipeline_mode<synchronous>, transform_indices = @transform_2, window_bounds = array<i64: 3, 32, 32>}, {pipeline_mode = #tpu.pipeline_mode<synchronous>, transform_indices = @transform_3, window_bounds = array<i64: 3, 32, 32>}, {pipeline_mode = #tpu.pipeline_mode<synchronous>, transform_indices = @transform_4, window_bounds = array<i64: 1, 32>}, {pipeline_mode = #tpu.pipeline_mode<synchronous>, transform_indices = @transform_5, window_bounds = array<i64: 1, 32>}, {pipeline_mode = #tpu.pipeline_mode<synchronous>, transform_indices = @transform_6, window_bounds = array<i64: 1, 32>}, {pipeline_mode = #tpu.pipeline_mode<synchronous>, transform_indices = @transform_7, window_bounds = array<i64: 1, 32>}, {pipeline_mode = #tpu.pipeline_mode<synchronous>, transform_indices = @transform_8, window_bounds = array<i64: 1, 32>}, {pipeline_mode = #tpu.pipeline_mode<synchronous>, transform_indices = @transform_9, window_bounds = array<i64: 1, 32>}, {transform_indices = @transform_10, window_bounds = array<i64: 16, 32>}]} {
    %c0 = arith.constant 0 : index
    %c0_0 = arith.constant 0 : index
    %0 = vector.load %arg1[%c0, %c0_0] : memref<16x32xf32, #tpu.memory_space<vmem>>, vector<16x32xf32>
    %1 = tpu.iota {dimensions = array<i32: 0>} : vector<16x1xi32>
    %c8_i32 = arith.constant 8 : i32
    %c0_i32 = arith.constant 0 : i32
    %2 = arith.cmpi eq, %c8_i32, %c0_i32 : i32
    %c1_i32 = arith.constant 1 : i32
    %3 = arith.select %2, %c1_i32, %c8_i32 : i32
    %4 = vector.broadcast %3 : i32 to vector<16x1xi32>
    %5 = arith.remsi %1, %4 : vector<16x1xi32>
    %c0_i32_1 = arith.constant 0 : i32
    %6 = vector.broadcast %c0_i32_1 : i32 to vector<16x1xi32>
    %7 = arith.cmpi ne, %5, %6 : vector<16x1xi32>
    %c0_i32_2 = arith.constant 0 : i32
    %8 = vector.broadcast %c0_i32_2 : i32 to vector<16x1xi32>
    %9 = arith.cmpi slt, %5, %8 : vector<16x1xi32>
    %c0_i32_3 = arith.constant 0 : i32
    %10 = arith.cmpi slt, %3, %c0_i32_3 : i32
    %11 = vector.broadcast %10 : i1 to vector<16x1xi1>
    %12 = vector.broadcast %11 : vector<16x1xi1> to vector<16x1xi1>
    %13 = arith.xori %9, %12 : vector<16x1xi1>
    %14 = arith.andi %13, %7 : vector<16x1xi1>
    %15 = vector.broadcast %3 : i32 to vector<16x1xi32>
    %16 = arith.addi %5, %15 : vector<16x1xi32>
    %17 = arith.select %14, %16, %5 : vector<16x1xi1>, vector<16x1xi32>
    %c0_i32_4 = arith.constant 0 : i32
    %18 = vector.broadcast %c0_i32_4 : i32 to vector<16x1xi32>
    %19 = arith.cmpi eq, %17, %18 : vector<16x1xi32>
    %c7_i32 = arith.constant 7 : i32
    %20 = vector.broadcast %c7_i32 : i32 to vector<16x1xi32>
    %21 = arith.cmpi eq, %17, %20 : vector<16x1xi32>
    %c1_i32_5 = arith.constant 1 : i32
    %22 = tpu.dynamic_rotate %0 by %c1_i32_5 dim 0 : vector<16x32xf32>, i32 -> vector<16x32xf32>
    %cst = arith.constant 0.000000e+00 : f32
    %23 = vector.shape_cast %19 : vector<16x1xi1> to vector<16x1xi1>
    %24 = vector.broadcast %23 : vector<16x1xi1> to vector<16x32xi1>
    %25 = vector.broadcast %cst : f32 to vector<16x32xf32>
    %26 = arith.select %24, %25, %22 : vector<16x32xi1>, vector<16x32xf32>
    %c15_i32 = arith.constant 15 : i32
    %27 = tpu.dynamic_rotate %0 by %c15_i32 dim 0 : vector<16x32xf32>, i32 -> vector<16x32xf32>
    %cst_6 = arith.constant 0.000000e+00 : f32
    %28 = vector.shape_cast %21 : vector<16x1xi1> to vector<16x1xi1>
    %29 = vector.broadcast %28 : vector<16x1xi1> to vector<16x32xi1>
    %30 = vector.broadcast %cst_6 : f32 to vector<16x32xf32>
    %31 = arith.select %29, %30, %27 : vector<16x32xi1>, vector<16x32xf32>
    %c0_7 = arith.constant 0 : index
    %c0_8 = arith.constant 0 : index
    %c0_9 = arith.constant 0 : index
    %32 = vector.load %arg3[%c0_7, %c0_8, %c0_9] : memref<3x32x32xf32, #tpu.memory_space<vmem>>, vector<1x32x32xf32>
    %33 = vector.shape_cast %32 : vector<1x32x32xf32> to vector<32x32xf32>
    %cst_10 = arith.constant dense<0.000000e+00> : vector<16x32xf32>
    %34 = tpu.matmul %26, %33, %cst_10 {dimension_numbers = #tpu.dot_dimension_numbers<[1], [0], [0], [1], [0, 0, 1, 1], [], []>} : vector<16x32xf32>, vector<32x32xf32>, vector<16x32xf32> -> vector<16x32xf32>
    %c1 = arith.constant 1 : index
    %c0_11 = arith.constant 0 : index
    %c0_12 = arith.constant 0 : index
    %35 = vector.load %arg3[%c1, %c0_11, %c0_12] : memref<3x32x32xf32, #tpu.memory_space<vmem>>, vector<1x32x32xf32>
    %36 = vector.shape_cast %35 : vector<1x32x32xf32> to vector<32x32xf32>
    %cst_13 = arith.constant dense<0.000000e+00> : vector<16x32xf32>
    %37 = tpu.matmul %0, %36, %cst_13 {dimension_numbers = #tpu.dot_dimension_numbers<[1], [0], [0], [1], [0, 0, 1, 1], [], []>} : vector<16x32xf32>, vector<32x32xf32>, vector<16x32xf32> -> vector<16x32xf32>
    %38 = arith.addf %34, %37 : vector<16x32xf32>
    %c2 = arith.constant 2 : index
    %c0_14 = arith.constant 0 : index
    %c0_15 = arith.constant 0 : index
    %39 = vector.load %arg3[%c2, %c0_14, %c0_15] : memref<3x32x32xf32, #tpu.memory_space<vmem>>, vector<1x32x32xf32>
    %40 = vector.shape_cast %39 : vector<1x32x32xf32> to vector<32x32xf32>
    %cst_16 = arith.constant dense<0.000000e+00> : vector<16x32xf32>
    %41 = tpu.matmul %31, %40, %cst_16 {dimension_numbers = #tpu.dot_dimension_numbers<[1], [0], [0], [1], [0, 0, 1, 1], [], []>} : vector<16x32xf32>, vector<32x32xf32>, vector<16x32xf32> -> vector<16x32xf32>
    %42 = arith.addf %38, %41 : vector<16x32xf32>
    %c0_17 = arith.constant 0 : index
    %c0_18 = arith.constant 0 : index
    %43 = vector.load %arg7[%c0_17, %c0_18] : memref<1x32xf32, #tpu.memory_space<vmem>>, vector<1x32xf32>
    %44 = vector.broadcast %43 : vector<1x32xf32> to vector<16x32xf32>
    %45 = arith.mulf %42, %44 : vector<16x32xf32>
    %c0_19 = arith.constant 0 : index
    %c0_20 = arith.constant 0 : index
    %46 = vector.load %arg8[%c0_19, %c0_20] : memref<1x32xf32, #tpu.memory_space<vmem>>, vector<1x32xf32>
    %47 = vector.broadcast %46 : vector<1x32xf32> to vector<16x32xf32>
    %48 = arith.addf %45, %47 : vector<16x32xf32>
    %cst_21 = arith.constant 0.000000e+00 : f32
    %49 = vector.broadcast %cst_21 : f32 to vector<16x32xf32>
    %50 = arith.maximumf %48, %49 : vector<16x32xf32>
    %c1_i32_22 = arith.constant 1 : i32
    %51 = tpu.dynamic_rotate %50 by %c1_i32_22 dim 0 : vector<16x32xf32>, i32 -> vector<16x32xf32>
    %cst_23 = arith.constant 0.000000e+00 : f32
    %52 = vector.shape_cast %19 : vector<16x1xi1> to vector<16x1xi1>
    %53 = vector.broadcast %52 : vector<16x1xi1> to vector<16x32xi1>
    %54 = vector.broadcast %cst_23 : f32 to vector<16x32xf32>
    %55 = arith.select %53, %54, %51 : vector<16x32xi1>, vector<16x32xf32>
    %c15_i32_24 = arith.constant 15 : i32
    %56 = tpu.dynamic_rotate %50 by %c15_i32_24 dim 0 : vector<16x32xf32>, i32 -> vector<16x32xf32>
    %cst_25 = arith.constant 0.000000e+00 : f32
    %57 = vector.shape_cast %21 : vector<16x1xi1> to vector<16x1xi1>
    %58 = vector.broadcast %57 : vector<16x1xi1> to vector<16x32xi1>
    %59 = vector.broadcast %cst_25 : f32 to vector<16x32xf32>
    %60 = arith.select %58, %59, %56 : vector<16x32xi1>, vector<16x32xf32>
    %c0_26 = arith.constant 0 : index
    %c0_27 = arith.constant 0 : index
    %c0_28 = arith.constant 0 : index
    %61 = vector.load %arg4[%c0_26, %c0_27, %c0_28] : memref<3x32x32xf32, #tpu.memory_space<vmem>>, vector<1x32x32xf32>
    %62 = vector.shape_cast %61 : vector<1x32x32xf32> to vector<32x32xf32>
    %cst_29 = arith.constant dense<0.000000e+00> : vector<16x32xf32>
    %63 = tpu.matmul %55, %62, %cst_29 {dimension_numbers = #tpu.dot_dimension_numbers<[1], [0], [0], [1], [0, 0, 1, 1], [], []>} : vector<16x32xf32>, vector<32x32xf32>, vector<16x32xf32> -> vector<16x32xf32>
    %c1_30 = arith.constant 1 : index
    %c0_31 = arith.constant 0 : index
    %c0_32 = arith.constant 0 : index
    %64 = vector.load %arg4[%c1_30, %c0_31, %c0_32] : memref<3x32x32xf32, #tpu.memory_space<vmem>>, vector<1x32x32xf32>
    %65 = vector.shape_cast %64 : vector<1x32x32xf32> to vector<32x32xf32>
    %cst_33 = arith.constant dense<0.000000e+00> : vector<16x32xf32>
    %66 = tpu.matmul %50, %65, %cst_33 {dimension_numbers = #tpu.dot_dimension_numbers<[1], [0], [0], [1], [0, 0, 1, 1], [], []>} : vector<16x32xf32>, vector<32x32xf32>, vector<16x32xf32> -> vector<16x32xf32>
    %67 = arith.addf %63, %66 : vector<16x32xf32>
    %c2_34 = arith.constant 2 : index
    %c0_35 = arith.constant 0 : index
    %c0_36 = arith.constant 0 : index
    %68 = vector.load %arg4[%c2_34, %c0_35, %c0_36] : memref<3x32x32xf32, #tpu.memory_space<vmem>>, vector<1x32x32xf32>
    %69 = vector.shape_cast %68 : vector<1x32x32xf32> to vector<32x32xf32>
    %cst_37 = arith.constant dense<0.000000e+00> : vector<16x32xf32>
    %70 = tpu.matmul %60, %69, %cst_37 {dimension_numbers = #tpu.dot_dimension_numbers<[1], [0], [0], [1], [0, 0, 1, 1], [], []>} : vector<16x32xf32>, vector<32x32xf32>, vector<16x32xf32> -> vector<16x32xf32>
    %71 = arith.addf %67, %70 : vector<16x32xf32>
    %c0_38 = arith.constant 0 : index
    %c0_39 = arith.constant 0 : index
    %72 = vector.load %arg9[%c0_38, %c0_39] : memref<1x32xf32, #tpu.memory_space<vmem>>, vector<1x32xf32>
    %73 = vector.broadcast %72 : vector<1x32xf32> to vector<16x32xf32>
    %74 = arith.mulf %71, %73 : vector<16x32xf32>
    %c0_40 = arith.constant 0 : index
    %c0_41 = arith.constant 0 : index
    %75 = vector.load %arg10[%c0_40, %c0_41] : memref<1x32xf32, #tpu.memory_space<vmem>>, vector<1x32xf32>
    %76 = vector.broadcast %75 : vector<1x32xf32> to vector<16x32xf32>
    %77 = arith.addf %74, %76 : vector<16x32xf32>
    %c0_42 = arith.constant 0 : index
    %c0_43 = arith.constant 0 : index
    %78 = vector.load %arg2[%c0_42, %c0_43] : memref<32x32xf32, #tpu.memory_space<vmem>>, vector<32x32xf32>
    %cst_44 = arith.constant dense<0.000000e+00> : vector<16x32xf32>
    %79 = tpu.matmul %0, %78, %cst_44 {dimension_numbers = #tpu.dot_dimension_numbers<[1], [0], [0], [1], [0, 0, 1, 1], [], []>} : vector<16x32xf32>, vector<32x32xf32>, vector<16x32xf32> -> vector<16x32xf32>
    %c0_45 = arith.constant 0 : index
    %c0_46 = arith.constant 0 : index
    %80 = vector.load %arg5[%c0_45, %c0_46] : memref<1x32xf32, #tpu.memory_space<vmem>>, vector<1x32xf32>
    %81 = vector.broadcast %80 : vector<1x32xf32> to vector<16x32xf32>
    %82 = arith.mulf %79, %81 : vector<16x32xf32>
    %c0_47 = arith.constant 0 : index
    %c0_48 = arith.constant 0 : index
    %83 = vector.load %arg6[%c0_47, %c0_48] : memref<1x32xf32, #tpu.memory_space<vmem>>, vector<1x32xf32>
    %84 = vector.broadcast %83 : vector<1x32xf32> to vector<16x32xf32>
    %85 = arith.addf %82, %84 : vector<16x32xf32>
    %86 = arith.addf %85, %77 : vector<16x32xf32>
    %c0_49 = arith.constant 0 : index
    %c0_50 = arith.constant 0 : index
    %87 = vector.load %arg11[%c0_49, %c0_50] : memref<16x32xf32, #tpu.memory_space<vmem>>, vector<16x32xf32>
    tpu.vector_store %arg11[%c0_49, %c0_50], %86 {strides = array<i32>} : memref<16x32xf32, #tpu.memory_space<vmem>>, vector<16x32xf32>,
    return
  }
  func.func @transform_0(%arg0: i32) -> (i32, i32) {
    %c0_i32 = arith.constant 0 : i32
    %c0_i32_0 = arith.constant 0 : i32
    return %arg0, %c0_i32 : i32, i32
  }
  func.func @transform_1(%arg0: i32) -> (i32, i32) {
    %c0_i32 = arith.constant 0 : i32
    %c0_i32_0 = arith.constant 0 : i32
    %c0_i32_1 = arith.constant 0 : i32
    return %c0_i32, %c0_i32_0 : i32, i32
  }
  func.func @transform_2(%arg0: i32) -> (i32, i32, i32) {
    %c0_i32 = arith.constant 0 : i32
    %c0_i32_0 = arith.constant 0 : i32
    %c0_i32_1 = arith.constant 0 : i32
    %c0_i32_2 = arith.constant 0 : i32
    return %c0_i32, %c0_i32_0, %c0_i32_1 : i32, i32, i32
  }
  func.func @transform_3(%arg0: i32) -> (i32, i32, i32) {
    %c0_i32 = arith.constant 0 : i32
    %c0_i32_0 = arith.constant 0 : i32
    %c0_i32_1 = arith.constant 0 : i32
    %c0_i32_2 = arith.constant 0 : i32
    return %c0_i32, %c0_i32_0, %c0_i32_1 : i32, i32, i32
  }
  func.func @transform_4(%arg0: i32) -> (i32, i32) {
    %c0_i32 = arith.constant 0 : i32
    %c0_i32_0 = arith.constant 0 : i32
    %c0_i32_1 = arith.constant 0 : i32
    return %c0_i32, %c0_i32_0 : i32, i32
  }
  func.func @transform_5(%arg0: i32) -> (i32, i32) {
    %c0_i32 = arith.constant 0 : i32
    %c0_i32_0 = arith.constant 0 : i32
    %c0_i32_1 = arith.constant 0 : i32
    return %c0_i32, %c0_i32_0 : i32, i32
  }
  func.func @transform_6(%arg0: i32) -> (i32, i32) {
    %c0_i32 = arith.constant 0 : i32
    %c0_i32_0 = arith.constant 0 : i32
    %c0_i32_1 = arith.constant 0 : i32
    return %c0_i32, %c0_i32_0 : i32, i32
  }
  func.func @transform_7(%arg0: i32) -> (i32, i32) {
    %c0_i32 = arith.constant 0 : i32
    %c0_i32_0 = arith.constant 0 : i32
    %c0_i32_1 = arith.constant 0 : i32
    return %c0_i32, %c0_i32_0 : i32, i32
  }
  func.func @transform_8(%arg0: i32) -> (i32, i32) {
    %c0_i32 = arith.constant 0 : i32
    %c0_i32_0 = arith.constant 0 : i32
    %c0_i32_1 = arith.constant 0 : i32
    return %c0_i32, %c0_i32_0 : i32, i32
  }
  func.func @transform_9(%arg0: i32) -> (i32, i32) {
    %c0_i32 = arith.constant 0 : i32
    %c0_i32_0 = arith.constant 0 : i32
    %c0_i32_1 = arith.constant 0 : i32
    return %c0_i32, %c0_i32_0 : i32, i32
  }
  func.func @transform_10(%arg0: i32) -> (i32, i32) {
    %c0_i32 = arith.constant 0 : i32
    %c0_i32_0 = arith.constant 0 : i32
    return %arg0, %c0_i32 : i32, i32
  }
}

module attributes {stable_mosaic.version = 11 : i64} {
  func.func @_fc_after_kernel(%arg0: i32, %arg1: memref<16x32xf32, #tpu.memory_space<vmem>>, %arg2: memref<16x32xf32, #tpu.memory_space<vmem>>, %arg3: memref<32x32xf32, #tpu.memory_space<vmem>>, %arg4: memref<1x32xf32, #tpu.memory_space<vmem>>, %arg5: memref<16x32xf32, #tpu.memory_space<vmem>>) attributes {dimension_semantics = [#tpu.dimension_semantics<parallel>], iteration_bounds = array<i64: 1>, scalar_prefetch = 0 : i64, scratch_operands = 0 : i64, tpu.core_type = #tpu.core_type<tc>, window_params = [{transform_indices = @transform_0, window_bounds = array<i64: 16, 32>}, {transform_indices = @transform_1, window_bounds = array<i64: 16, 32>}, {pipeline_mode = #tpu.pipeline_mode<synchronous>, transform_indices = @transform_2, window_bounds = array<i64: 32, 32>}, {pipeline_mode = #tpu.pipeline_mode<synchronous>, transform_indices = @transform_3, window_bounds = array<i64: 1, 32>}, {transform_indices = @transform_4, window_bounds = array<i64: 16, 32>}]} {
    %c0 = arith.constant 0 : index
    %c0_0 = arith.constant 0 : index
    %0 = vector.load %arg1[%c0, %c0_0] : memref<16x32xf32, #tpu.memory_space<vmem>>, vector<16x32xf32>
    %c0_1 = arith.constant 0 : index
    %c0_2 = arith.constant 0 : index
    %1 = vector.load %arg3[%c0_1, %c0_2] : memref<32x32xf32, #tpu.memory_space<vmem>>, vector<32x32xf32>
    %cst = arith.constant dense<0.000000e+00> : vector<16x32xf32>
    %2 = tpu.matmul %0, %1, %cst {dimension_numbers = #tpu.dot_dimension_numbers<[1], [0], [0], [1], [0, 0, 1, 1], [], []>} : vector<16x32xf32>, vector<32x32xf32>, vector<16x32xf32> -> vector<16x32xf32>
    %c0_3 = arith.constant 0 : index
    %c0_4 = arith.constant 0 : index
    %3 = vector.load %arg4[%c0_3, %c0_4] : memref<1x32xf32, #tpu.memory_space<vmem>>, vector<1x32xf32>
    %4 = vector.broadcast %3 : vector<1x32xf32> to vector<16x32xf32>
    %5 = arith.addf %2, %4 : vector<16x32xf32>
    %cst_5 = arith.constant 0.000000e+00 : f32
    %6 = vector.broadcast %cst_5 : f32 to vector<16x32xf32>
    %7 = arith.maximumf %5, %6 : vector<16x32xf32>
    %c0_6 = arith.constant 0 : index
    %c0_7 = arith.constant 0 : index
    %8 = vector.load %arg2[%c0_6, %c0_7] : memref<16x32xf32, #tpu.memory_space<vmem>>, vector<16x32xf32>
    %9 = arith.addf %7, %8 : vector<16x32xf32>
    %c0_8 = arith.constant 0 : index
    %c0_9 = arith.constant 0 : index
    %10 = vector.load %arg5[%c0_8, %c0_9] : memref<16x32xf32, #tpu.memory_space<vmem>>, vector<16x32xf32>
    tpu.vector_store %arg5[%c0_8, %c0_9], %9 {strides = array<i32>} : memref<16x32xf32, #tpu.memory_space<vmem>>, vector<16x32xf32>,
    return
  }
  func.func @transform_0(%arg0: i32) -> (i32, i32) {
    %c0_i32 = arith.constant 0 : i32
    %c0_i32_0 = arith.constant 0 : i32
    return %arg0, %c0_i32 : i32, i32
  }
  func.func @transform_1(%arg0: i32) -> (i32, i32) {
    %c0_i32 = arith.constant 0 : i32
    %c0_i32_0 = arith.constant 0 : i32
    return %arg0, %c0_i32 : i32, i32
  }
  func.func @transform_2(%arg0: i32) -> (i32, i32) {
    %c0_i32 = arith.constant 0 : i32
    %c0_i32_0 = arith.constant 0 : i32
    %c0_i32_1 = arith.constant 0 : i32
    return %c0_i32, %c0_i32_0 : i32, i32
  }
  func.func @transform_3(%arg0: i32) -> (i32, i32) {
    %c0_i32 = arith.constant 0 : i32
    %c0_i32_0 = arith.constant 0 : i32
    %c0_i32_1 = arith.constant 0 : i32
    return %c0_i32, %c0_i32_0 : i32, i32
  }
  func.func @transform_4(%arg0: i32) -> (i32, i32) {
    %c0_i32 = arith.constant 0 : i32
    %c0_i32_0 = arith.constant 0 : i32
    return %arg0, %c0_i32 : i32, i32
  }
}

module attributes {stable_mosaic.version = 11 : i64} {
  func.func @_gates1_kernel(%arg0: i32, %arg1: memref<16x32xf32, #tpu.memory_space<vmem>>, %arg2: memref<32x64xf32, #tpu.memory_space<vmem>>, %arg3: memref<1x64xf32, #tpu.memory_space<vmem>>, %arg4: memref<32x64xf32, #tpu.memory_space<vmem>>, %arg5: memref<1x64xf32, #tpu.memory_space<vmem>>, %arg6: memref<16x64xf32, #tpu.memory_space<vmem>>, %arg7: memref<16x64xf32, #tpu.memory_space<vmem>>) attributes {dimension_semantics = [#tpu.dimension_semantics<parallel>], iteration_bounds = array<i64: 1>, scalar_prefetch = 0 : i64, scratch_operands = 0 : i64, tpu.core_type = #tpu.core_type<tc>, window_params = [{transform_indices = @transform_0, window_bounds = array<i64: 16, 32>}, {pipeline_mode = #tpu.pipeline_mode<synchronous>, transform_indices = @transform_1, window_bounds = array<i64: 32, 64>}, {pipeline_mode = #tpu.pipeline_mode<synchronous>, transform_indices = @transform_2, window_bounds = array<i64: 1, 64>}, {pipeline_mode = #tpu.pipeline_mode<synchronous>, transform_indices = @transform_3, window_bounds = array<i64: 32, 64>}, {pipeline_mode = #tpu.pipeline_mode<synchronous>, transform_indices = @transform_4, window_bounds = array<i64: 1, 64>}, {transform_indices = @transform_5, window_bounds = array<i64: 16, 64>}, {transform_indices = @transform_6, window_bounds = array<i64: 16, 64>}]} {
    %c0 = arith.constant 0 : index
    %c0_0 = arith.constant 0 : index
    %0 = vector.load %arg1[%c0, %c0_0] : memref<16x32xf32, #tpu.memory_space<vmem>>, vector<16x32xf32>
    %c0_1 = arith.constant 0 : index
    %c0_2 = arith.constant 0 : index
    %1 = vector.load %arg2[%c0_1, %c0_2] : memref<32x64xf32, #tpu.memory_space<vmem>>, vector<32x64xf32>
    %cst = arith.constant dense<0.000000e+00> : vector<16x64xf32>
    %2 = tpu.matmul %0, %1, %cst {dimension_numbers = #tpu.dot_dimension_numbers<[1], [0], [0], [1], [0, 0, 1, 1], [], []>} : vector<16x32xf32>, vector<32x64xf32>, vector<16x64xf32> -> vector<16x64xf32>
    %c0_3 = arith.constant 0 : index
    %c0_4 = arith.constant 0 : index
    %3 = vector.load %arg3[%c0_3, %c0_4] : memref<1x64xf32, #tpu.memory_space<vmem>>, vector<1x64xf32>
    %4 = vector.broadcast %3 : vector<1x64xf32> to vector<16x64xf32>
    %5 = arith.addf %2, %4 : vector<16x64xf32>
    %c0_5 = arith.constant 0 : index
    %c0_6 = arith.constant 0 : index
    %6 = vector.load %arg6[%c0_5, %c0_6] : memref<16x64xf32, #tpu.memory_space<vmem>>, vector<16x64xf32>
    tpu.vector_store %arg6[%c0_5, %c0_6], %5 {strides = array<i32>} : memref<16x64xf32, #tpu.memory_space<vmem>>, vector<16x64xf32>,
    %c0_7 = arith.constant 0 : index
    %c0_8 = arith.constant 0 : index
    %7 = vector.load %arg4[%c0_7, %c0_8] : memref<32x64xf32, #tpu.memory_space<vmem>>, vector<32x64xf32>
    %cst_9 = arith.constant dense<0.000000e+00> : vector<16x64xf32>
    %8 = tpu.matmul %0, %7, %cst_9 {dimension_numbers = #tpu.dot_dimension_numbers<[1], [0], [0], [1], [0, 0, 1, 1], [], []>} : vector<16x32xf32>, vector<32x64xf32>, vector<16x64xf32> -> vector<16x64xf32>
    %c0_10 = arith.constant 0 : index
    %c0_11 = arith.constant 0 : index
    %9 = vector.load %arg5[%c0_10, %c0_11] : memref<1x64xf32, #tpu.memory_space<vmem>>, vector<1x64xf32>
    %10 = vector.broadcast %9 : vector<1x64xf32> to vector<16x64xf32>
    %11 = arith.addf %8, %10 : vector<16x64xf32>
    %c0_12 = arith.constant 0 : index
    %c0_13 = arith.constant 0 : index
    %12 = vector.load %arg7[%c0_12, %c0_13] : memref<16x64xf32, #tpu.memory_space<vmem>>, vector<16x64xf32>
    tpu.vector_store %arg7[%c0_12, %c0_13], %11 {strides = array<i32>} : memref<16x64xf32, #tpu.memory_space<vmem>>, vector<16x64xf32>,
    return
  }
  func.func @transform_0(%arg0: i32) -> (i32, i32) {
    %c0_i32 = arith.constant 0 : i32
    %c0_i32_0 = arith.constant 0 : i32
    return %arg0, %c0_i32 : i32, i32
  }
  func.func @transform_1(%arg0: i32) -> (i32, i32) {
    %c0_i32 = arith.constant 0 : i32
    %c0_i32_0 = arith.constant 0 : i32
    %c0_i32_1 = arith.constant 0 : i32
    return %c0_i32, %c0_i32_0 : i32, i32
  }
  func.func @transform_2(%arg0: i32) -> (i32, i32) {
    %c0_i32 = arith.constant 0 : i32
    %c0_i32_0 = arith.constant 0 : i32
    %c0_i32_1 = arith.constant 0 : i32
    return %c0_i32, %c0_i32_0 : i32, i32
  }
  func.func @transform_3(%arg0: i32) -> (i32, i32) {
    %c0_i32 = arith.constant 0 : i32
    %c0_i32_0 = arith.constant 0 : i32
    %c0_i32_1 = arith.constant 0 : i32
    return %c0_i32, %c0_i32_0 : i32, i32
  }
  func.func @transform_4(%arg0: i32) -> (i32, i32) {
    %c0_i32 = arith.constant 0 : i32
    %c0_i32_0 = arith.constant 0 : i32
    %c0_i32_1 = arith.constant 0 : i32
    return %c0_i32, %c0_i32_0 : i32, i32
  }
  func.func @transform_5(%arg0: i32) -> (i32, i32) {
    %c0_i32 = arith.constant 0 : i32
    %c0_i32_0 = arith.constant 0 : i32
    return %arg0, %c0_i32 : i32, i32
  }
  func.func @transform_6(%arg0: i32) -> (i32, i32) {
    %c0_i32 = arith.constant 0 : i32
    %c0_i32_0 = arith.constant 0 : i32
    return %arg0, %c0_i32 : i32, i32
  }
}

module attributes {stable_mosaic.version = 11 : i64} {
  func.func @_fc3_kernel(%arg0: i32, %arg1: memref<16x16xf32, #tpu.memory_space<vmem>>, %arg2: memref<16x16xf32, #tpu.memory_space<vmem>>, %arg3: memref<16x8xf32, #tpu.memory_space<vmem>>, %arg4: memref<16x8xf32, #tpu.memory_space<vmem>>, %arg5: memref<1x8xf32, #tpu.memory_space<vmem>>, %arg6: memref<16x8xf32, #tpu.memory_space<vmem>>) attributes {dimension_semantics = [#tpu.dimension_semantics<parallel>], iteration_bounds = array<i64: 1>, scalar_prefetch = 0 : i64, scratch_operands = 0 : i64, tpu.core_type = #tpu.core_type<tc>, window_params = [{transform_indices = @transform_0, window_bounds = array<i64: 16, 16>}, {transform_indices = @transform_1, window_bounds = array<i64: 16, 16>}, {pipeline_mode = #tpu.pipeline_mode<synchronous>, transform_indices = @transform_2, window_bounds = array<i64: 16, 8>}, {pipeline_mode = #tpu.pipeline_mode<synchronous>, transform_indices = @transform_3, window_bounds = array<i64: 16, 8>}, {pipeline_mode = #tpu.pipeline_mode<synchronous>, transform_indices = @transform_4, window_bounds = array<i64: 1, 8>}, {transform_indices = @transform_5, window_bounds = array<i64: 16, 8>}]} {
    %c0 = arith.constant 0 : index
    %c0_0 = arith.constant 0 : index
    %0 = vector.load %arg1[%c0, %c0_0] : memref<16x16xf32, #tpu.memory_space<vmem>>, vector<16x16xf32>
    %c0_1 = arith.constant 0 : index
    %c0_2 = arith.constant 0 : index
    %1 = vector.load %arg3[%c0_1, %c0_2] : memref<16x8xf32, #tpu.memory_space<vmem>>, vector<16x8xf32>
    %cst = arith.constant dense<0.000000e+00> : vector<16x8xf32>
    %2 = tpu.matmul %0, %1, %cst {dimension_numbers = #tpu.dot_dimension_numbers<[1], [0], [0], [1], [0, 0, 1, 1], [], []>} : vector<16x16xf32>, vector<16x8xf32>, vector<16x8xf32> -> vector<16x8xf32>
    %c0_3 = arith.constant 0 : index
    %c0_4 = arith.constant 0 : index
    %3 = vector.load %arg2[%c0_3, %c0_4] : memref<16x16xf32, #tpu.memory_space<vmem>>, vector<16x16xf32>
    %c0_5 = arith.constant 0 : index
    %c0_6 = arith.constant 0 : index
    %4 = vector.load %arg4[%c0_5, %c0_6] : memref<16x8xf32, #tpu.memory_space<vmem>>, vector<16x8xf32>
    %cst_7 = arith.constant dense<0.000000e+00> : vector<16x8xf32>
    %5 = tpu.matmul %3, %4, %cst_7 {dimension_numbers = #tpu.dot_dimension_numbers<[1], [0], [0], [1], [0, 0, 1, 1], [], []>} : vector<16x16xf32>, vector<16x8xf32>, vector<16x8xf32> -> vector<16x8xf32>
    %6 = arith.addf %2, %5 : vector<16x8xf32>
    %c0_8 = arith.constant 0 : index
    %c0_9 = arith.constant 0 : index
    %7 = vector.load %arg5[%c0_8, %c0_9] : memref<1x8xf32, #tpu.memory_space<vmem>>, vector<1x8xf32>
    %8 = vector.broadcast %7 : vector<1x8xf32> to vector<16x8xf32>
    %9 = arith.addf %6, %8 : vector<16x8xf32>
    %c0_10 = arith.constant 0 : index
    %c0_11 = arith.constant 0 : index
    %10 = vector.load %arg6[%c0_10, %c0_11] : memref<16x8xf32, #tpu.memory_space<vmem>>, vector<16x8xf32>
    tpu.vector_store %arg6[%c0_10, %c0_11], %9 {strides = array<i32>} : memref<16x8xf32, #tpu.memory_space<vmem>>, vector<16x8xf32>,
    return
  }
  func.func @transform_0(%arg0: i32) -> (i32, i32) {
    %c0_i32 = arith.constant 0 : i32
    %c0_i32_0 = arith.constant 0 : i32
    return %arg0, %c0_i32 : i32, i32
  }
  func.func @transform_1(%arg0: i32) -> (i32, i32) {
    %c0_i32 = arith.constant 0 : i32
    %c0_i32_0 = arith.constant 0 : i32
    return %arg0, %c0_i32 : i32, i32
  }
  func.func @transform_2(%arg0: i32) -> (i32, i32) {
    %c0_i32 = arith.constant 0 : i32
    %c0_i32_0 = arith.constant 0 : i32
    %c0_i32_1 = arith.constant 0 : i32
    return %c0_i32, %c0_i32_0 : i32, i32
  }
  func.func @transform_3(%arg0: i32) -> (i32, i32) {
    %c0_i32 = arith.constant 0 : i32
    %c0_i32_0 = arith.constant 0 : i32
    %c0_i32_1 = arith.constant 0 : i32
    return %c0_i32, %c0_i32_0 : i32, i32
  }
  func.func @transform_4(%arg0: i32) -> (i32, i32) {
    %c0_i32 = arith.constant 0 : i32
    %c0_i32_0 = arith.constant 0 : i32
    %c0_i32_1 = arith.constant 0 : i32
    return %c0_i32, %c0_i32_0 : i32, i32
  }
  func.func @transform_5(%arg0: i32) -> (i32, i32) {
    %c0_i32 = arith.constant 0 : i32
    %c0_i32_0 = arith.constant 0 : i32
    return %arg0, %c0_i32 : i32, i32
  }
}

module attributes {stable_mosaic.version = 11 : i64} {
  func.func @_gates2_kernel(%arg0: i32, %arg1: memref<16x16xf32, #tpu.memory_space<vmem>>, %arg2: memref<16x16xf32, #tpu.memory_space<vmem>>, %arg3: memref<16x64xf32, #tpu.memory_space<vmem>>, %arg4: memref<16x64xf32, #tpu.memory_space<vmem>>, %arg5: memref<1x64xf32, #tpu.memory_space<vmem>>, %arg6: memref<16x64xf32, #tpu.memory_space<vmem>>, %arg7: memref<16x64xf32, #tpu.memory_space<vmem>>, %arg8: memref<1x64xf32, #tpu.memory_space<vmem>>, %arg9: memref<16x64xf32, #tpu.memory_space<vmem>>, %arg10: memref<16x64xf32, #tpu.memory_space<vmem>>) attributes {dimension_semantics = [#tpu.dimension_semantics<parallel>], iteration_bounds = array<i64: 1>, scalar_prefetch = 0 : i64, scratch_operands = 0 : i64, tpu.core_type = #tpu.core_type<tc>, window_params = [{transform_indices = @transform_0, window_bounds = array<i64: 16, 16>}, {transform_indices = @transform_1, window_bounds = array<i64: 16, 16>}, {pipeline_mode = #tpu.pipeline_mode<synchronous>, transform_indices = @transform_2, window_bounds = array<i64: 16, 64>}, {pipeline_mode = #tpu.pipeline_mode<synchronous>, transform_indices = @transform_3, window_bounds = array<i64: 16, 64>}, {pipeline_mode = #tpu.pipeline_mode<synchronous>, transform_indices = @transform_4, window_bounds = array<i64: 1, 64>}, {pipeline_mode = #tpu.pipeline_mode<synchronous>, transform_indices = @transform_5, window_bounds = array<i64: 16, 64>}, {pipeline_mode = #tpu.pipeline_mode<synchronous>, transform_indices = @transform_6, window_bounds = array<i64: 16, 64>}, {pipeline_mode = #tpu.pipeline_mode<synchronous>, transform_indices = @transform_7, window_bounds = array<i64: 1, 64>}, {transform_indices = @transform_8, window_bounds = array<i64: 16, 64>}, {transform_indices = @transform_9, window_bounds = array<i64: 16, 64>}]} {
    %c0 = arith.constant 0 : index
    %c0_0 = arith.constant 0 : index
    %0 = vector.load %arg1[%c0, %c0_0] : memref<16x16xf32, #tpu.memory_space<vmem>>, vector<16x16xf32>
    %c0_1 = arith.constant 0 : index
    %c0_2 = arith.constant 0 : index
    %1 = vector.load %arg2[%c0_1, %c0_2] : memref<16x16xf32, #tpu.memory_space<vmem>>, vector<16x16xf32>
    %c0_3 = arith.constant 0 : index
    %c0_4 = arith.constant 0 : index
    %2 = vector.load %arg3[%c0_3, %c0_4] : memref<16x64xf32, #tpu.memory_space<vmem>>, vector<16x64xf32>
    %cst = arith.constant dense<0.000000e+00> : vector<16x64xf32>
    %3 = tpu.matmul %0, %2, %cst {dimension_numbers = #tpu.dot_dimension_numbers<[1], [0], [0], [1], [0, 0, 1, 1], [], []>} : vector<16x16xf32>, vector<16x64xf32>, vector<16x64xf32> -> vector<16x64xf32>
    %c0_5 = arith.constant 0 : index
    %c0_6 = arith.constant 0 : index
    %4 = vector.load %arg4[%c0_5, %c0_6] : memref<16x64xf32, #tpu.memory_space<vmem>>, vector<16x64xf32>
    %cst_7 = arith.constant dense<0.000000e+00> : vector<16x64xf32>
    %5 = tpu.matmul %1, %4, %cst_7 {dimension_numbers = #tpu.dot_dimension_numbers<[1], [0], [0], [1], [0, 0, 1, 1], [], []>} : vector<16x16xf32>, vector<16x64xf32>, vector<16x64xf32> -> vector<16x64xf32>
    %6 = arith.addf %3, %5 : vector<16x64xf32>
    %c0_8 = arith.constant 0 : index
    %c0_9 = arith.constant 0 : index
    %7 = vector.load %arg5[%c0_8, %c0_9] : memref<1x64xf32, #tpu.memory_space<vmem>>, vector<1x64xf32>
    %8 = vector.broadcast %7 : vector<1x64xf32> to vector<16x64xf32>
    %9 = arith.addf %6, %8 : vector<16x64xf32>
    %c0_10 = arith.constant 0 : index
    %c0_11 = arith.constant 0 : index
    %10 = vector.load %arg9[%c0_10, %c0_11] : memref<16x64xf32, #tpu.memory_space<vmem>>, vector<16x64xf32>
    tpu.vector_store %arg9[%c0_10, %c0_11], %9 {strides = array<i32>} : memref<16x64xf32, #tpu.memory_space<vmem>>, vector<16x64xf32>,
    %c0_12 = arith.constant 0 : index
    %c0_13 = arith.constant 0 : index
    %11 = vector.load %arg6[%c0_12, %c0_13] : memref<16x64xf32, #tpu.memory_space<vmem>>, vector<16x64xf32>
    %cst_14 = arith.constant dense<0.000000e+00> : vector<16x64xf32>
    %12 = tpu.matmul %0, %11, %cst_14 {dimension_numbers = #tpu.dot_dimension_numbers<[1], [0], [0], [1], [0, 0, 1, 1], [], []>} : vector<16x16xf32>, vector<16x64xf32>, vector<16x64xf32> -> vector<16x64xf32>
    %c0_15 = arith.constant 0 : index
    %c0_16 = arith.constant 0 : index
    %13 = vector.load %arg7[%c0_15, %c0_16] : memref<16x64xf32, #tpu.memory_space<vmem>>, vector<16x64xf32>
    %cst_17 = arith.constant dense<0.000000e+00> : vector<16x64xf32>
    %14 = tpu.matmul %1, %13, %cst_17 {dimension_numbers = #tpu.dot_dimension_numbers<[1], [0], [0], [1], [0, 0, 1, 1], [], []>} : vector<16x16xf32>, vector<16x64xf32>, vector<16x64xf32> -> vector<16x64xf32>
    %15 = arith.addf %12, %14 : vector<16x64xf32>
    %c0_18 = arith.constant 0 : index
    %c0_19 = arith.constant 0 : index
    %16 = vector.load %arg8[%c0_18, %c0_19] : memref<1x64xf32, #tpu.memory_space<vmem>>, vector<1x64xf32>
    %17 = vector.broadcast %16 : vector<1x64xf32> to vector<16x64xf32>
    %18 = arith.addf %15, %17 : vector<16x64xf32>
    %c0_20 = arith.constant 0 : index
    %c0_21 = arith.constant 0 : index
    %19 = vector.load %arg10[%c0_20, %c0_21] : memref<16x64xf32, #tpu.memory_space<vmem>>, vector<16x64xf32>
    tpu.vector_store %arg10[%c0_20, %c0_21], %18 {strides = array<i32>} : memref<16x64xf32, #tpu.memory_space<vmem>>, vector<16x64xf32>,
    return
  }
  func.func @transform_0(%arg0: i32) -> (i32, i32) {
    %c0_i32 = arith.constant 0 : i32
    %c0_i32_0 = arith.constant 0 : i32
    return %arg0, %c0_i32 : i32, i32
  }
  func.func @transform_1(%arg0: i32) -> (i32, i32) {
    %c0_i32 = arith.constant 0 : i32
    %c0_i32_0 = arith.constant 0 : i32
    return %arg0, %c0_i32 : i32, i32
  }
  func.func @transform_2(%arg0: i32) -> (i32, i32) {
    %c0_i32 = arith.constant 0 : i32
    %c0_i32_0 = arith.constant 0 : i32
    %c0_i32_1 = arith.constant 0 : i32
    return %c0_i32, %c0_i32_0 : i32, i32
  }
  func.func @transform_3(%arg0: i32) -> (i32, i32) {
    %c0_i32 = arith.constant 0 : i32
    %c0_i32_0 = arith.constant 0 : i32
    %c0_i32_1 = arith.constant 0 : i32
    return %c0_i32, %c0_i32_0 : i32, i32
  }
  func.func @transform_4(%arg0: i32) -> (i32, i32) {
    %c0_i32 = arith.constant 0 : i32
    %c0_i32_0 = arith.constant 0 : i32
    %c0_i32_1 = arith.constant 0 : i32
    return %c0_i32, %c0_i32_0 : i32, i32
  }
  func.func @transform_5(%arg0: i32) -> (i32, i32) {
    %c0_i32 = arith.constant 0 : i32
    %c0_i32_0 = arith.constant 0 : i32
    %c0_i32_1 = arith.constant 0 : i32
    return %c0_i32, %c0_i32_0 : i32, i32
  }
  func.func @transform_6(%arg0: i32) -> (i32, i32) {
    %c0_i32 = arith.constant 0 : i32
    %c0_i32_0 = arith.constant 0 : i32
    %c0_i32_1 = arith.constant 0 : i32
    return %c0_i32, %c0_i32_0 : i32, i32
  }
  func.func @transform_7(%arg0: i32) -> (i32, i32) {
    %c0_i32 = arith.constant 0 : i32
    %c0_i32_0 = arith.constant 0 : i32
    %c0_i32_1 = arith.constant 0 : i32
    return %c0_i32, %c0_i32_0 : i32, i32
  }
  func.func @transform_8(%arg0: i32) -> (i32, i32) {
    %c0_i32 = arith.constant 0 : i32
    %c0_i32_0 = arith.constant 0 : i32
    return %arg0, %c0_i32 : i32, i32
  }
  func.func @transform_9(%arg0: i32) -> (i32, i32) {
    %c0_i32 = arith.constant 0 : i32
    %c0_i32_0 = arith.constant 0 : i32
    return %arg0, %c0_i32 : i32, i32
  }
}

module attributes {stable_mosaic.version = 11 : i64} {
  func.func @_bilstm_kernel(%arg0: i32, %arg1: memref<8x2x64xf32, #tpu.memory_space<vmem>>, %arg2: memref<8x2x64xf32, #tpu.memory_space<vmem>>, %arg3: memref<16x64xf32, #tpu.memory_space<vmem>>, %arg4: memref<16x64xf32, #tpu.memory_space<vmem>>, %arg5: memref<8x2x16xf32, #tpu.memory_space<vmem>>, %arg6: memref<8x2x16xf32, #tpu.memory_space<vmem>>, %arg7: memref<2x16xf32, #tpu.memory_space<vmem>>, %arg8: memref<2x16xf32, #tpu.memory_space<vmem>>, %arg9: memref<2x16xf32, #tpu.memory_space<vmem>>, %arg10: memref<2x16xf32, #tpu.memory_space<vmem>>) attributes {dimension_semantics = [#tpu.dimension_semantics<arbitrary>], iteration_bounds = array<i64: 1>, scalar_prefetch = 0 : i64, scratch_operands = 4 : i64, tpu.core_type = #tpu.core_type<tc>, window_params = [{transform_indices = @transform_0, window_bounds = array<i64: 8, 2, 64>}, {transform_indices = @transform_1, window_bounds = array<i64: 8, 2, 64>}, {pipeline_mode = #tpu.pipeline_mode<synchronous>, transform_indices = @transform_2, window_bounds = array<i64: 16, 64>}, {pipeline_mode = #tpu.pipeline_mode<synchronous>, transform_indices = @transform_3, window_bounds = array<i64: 16, 64>}, {transform_indices = @transform_4, window_bounds = array<i64: 8, 2, 16>}, {transform_indices = @transform_5, window_bounds = array<i64: 8, 2, 16>}]} {
    %c0_i32 = arith.constant 0 : i32
    %0 = arith.cmpi eq, %arg0, %c0_i32 : i32
    %1 = arith.extui %0 : i1 to i32
    %c0_i32_0 = arith.constant 0 : i32
    %2 = arith.cmpi ne, %1, %c0_i32_0 : i32
    scf.if %2 {
      %cst_264 = arith.constant 0.000000e+00 : f32
      %491 = vector.broadcast %cst_264 : f32 to vector<2x16xf32>
      %c0_265 = arith.constant 0 : index
      %c0_266 = arith.constant 0 : index
      %492 = vector.load %arg7[%c0_265, %c0_266] : memref<2x16xf32, #tpu.memory_space<vmem>>, vector<2x16xf32>
      tpu.vector_store %arg7[%c0_265, %c0_266], %491 {strides = array<i32>} : memref<2x16xf32, #tpu.memory_space<vmem>>, vector<2x16xf32>,
      %cst_267 = arith.constant 0.000000e+00 : f32
      %493 = vector.broadcast %cst_267 : f32 to vector<2x16xf32>
      %c0_268 = arith.constant 0 : index
      %c0_269 = arith.constant 0 : index
      %494 = vector.load %arg8[%c0_268, %c0_269] : memref<2x16xf32, #tpu.memory_space<vmem>>, vector<2x16xf32>
      tpu.vector_store %arg8[%c0_268, %c0_269], %493 {strides = array<i32>} : memref<2x16xf32, #tpu.memory_space<vmem>>, vector<2x16xf32>,
      %cst_270 = arith.constant 0.000000e+00 : f32
      %495 = vector.broadcast %cst_270 : f32 to vector<2x16xf32>
      %c0_271 = arith.constant 0 : index
      %c0_272 = arith.constant 0 : index
      %496 = vector.load %arg9[%c0_271, %c0_272] : memref<2x16xf32, #tpu.memory_space<vmem>>, vector<2x16xf32>
      tpu.vector_store %arg9[%c0_271, %c0_272], %495 {strides = array<i32>} : memref<2x16xf32, #tpu.memory_space<vmem>>, vector<2x16xf32>,
      %cst_273 = arith.constant 0.000000e+00 : f32
      %497 = vector.broadcast %cst_273 : f32 to vector<2x16xf32>
      %c0_274 = arith.constant 0 : index
      %c0_275 = arith.constant 0 : index
      %498 = vector.load %arg10[%c0_274, %c0_275] : memref<2x16xf32, #tpu.memory_space<vmem>>, vector<2x16xf32>
      tpu.vector_store %arg10[%c0_274, %c0_275], %497 {strides = array<i32>} : memref<2x16xf32, #tpu.memory_space<vmem>>, vector<2x16xf32>,
    } else {
    }
    %c0_i32_1 = arith.constant 0 : i32
    %c7_i32 = arith.constant 7 : i32
    %3 = arith.subi %c7_i32, %c0_i32_1 : i32
    %4 = arith.index_cast %c0_i32_1 : i32 to index
    %c0 = arith.constant 0 : index
    %c0_2 = arith.constant 0 : index
    %5 = vector.load %arg1[%4, %c0, %c0_2] : memref<8x2x64xf32, #tpu.memory_space<vmem>>, vector<1x2x64xf32>
    %6 = vector.shape_cast %5 : vector<1x2x64xf32> to vector<2x64xf32>
    %c0_3 = arith.constant 0 : index
    %c0_4 = arith.constant 0 : index
    %7 = vector.load %arg7[%c0_3, %c0_4] : memref<2x16xf32, #tpu.memory_space<vmem>>, vector<2x16xf32>
    %c0_5 = arith.constant 0 : index
    %c0_6 = arith.constant 0 : index
    %8 = vector.load %arg3[%c0_5, %c0_6] : memref<16x64xf32, #tpu.memory_space<vmem>>, vector<16x64xf32>
    %cst = arith.constant dense<0.000000e+00> : vector<2x64xf32>
    %9 = tpu.matmul %7, %8, %cst {dimension_numbers = #tpu.dot_dimension_numbers<[1], [0], [0], [1], [0, 0, 1, 1], [], []>} : vector<2x16xf32>, vector<16x64xf32>, vector<2x64xf32> -> vector<2x64xf32>
    %10 = arith.addf %6, %9 : vector<2x64xf32>
    %11 = arith.index_cast %3 : i32 to index
    %c0_7 = arith.constant 0 : index
    %c0_8 = arith.constant 0 : index
    %12 = vector.load %arg2[%11, %c0_7, %c0_8] : memref<8x2x64xf32, #tpu.memory_space<vmem>>, vector<1x2x64xf32>
    %13 = vector.shape_cast %12 : vector<1x2x64xf32> to vector<2x64xf32>
    %c0_9 = arith.constant 0 : index
    %c0_10 = arith.constant 0 : index
    %14 = vector.load %arg9[%c0_9, %c0_10] : memref<2x16xf32, #tpu.memory_space<vmem>>, vector<2x16xf32>
    %c0_11 = arith.constant 0 : index
    %c0_12 = arith.constant 0 : index
    %15 = vector.load %arg4[%c0_11, %c0_12] : memref<16x64xf32, #tpu.memory_space<vmem>>, vector<16x64xf32>
    %cst_13 = arith.constant dense<0.000000e+00> : vector<2x64xf32>
    %16 = tpu.matmul %14, %15, %cst_13 {dimension_numbers = #tpu.dot_dimension_numbers<[1], [0], [0], [1], [0, 0, 1, 1], [], []>} : vector<2x16xf32>, vector<16x64xf32>, vector<2x64xf32> -> vector<2x64xf32>
    %17 = arith.addf %13, %16 : vector<2x64xf32>
    %18 = vector.extract_strided_slice %10 {offsets = [0, 0], sizes = [2, 48], strides = [1, 1]} : vector<2x64xf32> to vector<2x48xf32>
    %19 = arith.negf %18 : vector<2x48xf32>
    %20 = math.exp %19 : vector<2x48xf32>
    %cst_14 = arith.constant 1.000000e+00 : f32
    %21 = vector.broadcast %cst_14 : f32 to vector<2x48xf32>
    %22 = arith.addf %21, %20 : vector<2x48xf32>
    %23 = arith.divf %21, %22 : vector<2x48xf32>
    %24 = vector.extract_strided_slice %17 {offsets = [0, 0], sizes = [2, 48], strides = [1, 1]} : vector<2x64xf32> to vector<2x48xf32>
    %25 = arith.negf %24 : vector<2x48xf32>
    %26 = math.exp %25 : vector<2x48xf32>
    %cst_15 = arith.constant 1.000000e+00 : f32
    %27 = vector.broadcast %cst_15 : f32 to vector<2x48xf32>
    %28 = arith.addf %27, %26 : vector<2x48xf32>
    %29 = arith.divf %27, %28 : vector<2x48xf32>
    %30 = vector.extract_strided_slice %10 {offsets = [0, 48], sizes = [2, 16], strides = [1, 1]} : vector<2x64xf32> to vector<2x16xf32>
    %31 = math.tanh %30 : vector<2x16xf32>
    %32 = vector.extract_strided_slice %17 {offsets = [0, 48], sizes = [2, 16], strides = [1, 1]} : vector<2x64xf32> to vector<2x16xf32>
    %33 = math.tanh %32 : vector<2x16xf32>
    %34 = vector.extract_strided_slice %23 {offsets = [0, 16], sizes = [2, 16], strides = [1, 1]} : vector<2x48xf32> to vector<2x16xf32>
    %c0_16 = arith.constant 0 : index
    %c0_17 = arith.constant 0 : index
    %35 = vector.load %arg8[%c0_16, %c0_17] : memref<2x16xf32, #tpu.memory_space<vmem>>, vector<2x16xf32>
    %36 = arith.mulf %34, %35 : vector<2x16xf32>
    %37 = vector.extract_strided_slice %23 {offsets = [0, 0], sizes = [2, 16], strides = [1, 1]} : vector<2x48xf32> to vector<2x16xf32>
    %38 = arith.mulf %37, %31 : vector<2x16xf32>
    %39 = arith.addf %36, %38 : vector<2x16xf32>
    %40 = vector.extract_strided_slice %29 {offsets = [0, 16], sizes = [2, 16], strides = [1, 1]} : vector<2x48xf32> to vector<2x16xf32>
    %c0_18 = arith.constant 0 : index
    %c0_19 = arith.constant 0 : index
    %41 = vector.load %arg10[%c0_18, %c0_19] : memref<2x16xf32, #tpu.memory_space<vmem>>, vector<2x16xf32>
    %42 = arith.mulf %40, %41 : vector<2x16xf32>
    %43 = vector.extract_strided_slice %29 {offsets = [0, 0], sizes = [2, 16], strides = [1, 1]} : vector<2x48xf32> to vector<2x16xf32>
    %44 = arith.mulf %43, %33 : vector<2x16xf32>
    %45 = arith.addf %42, %44 : vector<2x16xf32>
    %46 = vector.extract_strided_slice %23 {offsets = [0, 32], sizes = [2, 16], strides = [1, 1]} : vector<2x48xf32> to vector<2x16xf32>
    %47 = math.tanh %39 : vector<2x16xf32>
    %48 = arith.mulf %46, %47 : vector<2x16xf32>
    %49 = vector.extract_strided_slice %29 {offsets = [0, 32], sizes = [2, 16], strides = [1, 1]} : vector<2x48xf32> to vector<2x16xf32>
    %50 = math.tanh %45 : vector<2x16xf32>
    %51 = arith.mulf %49, %50 : vector<2x16xf32>
    %c0_20 = arith.constant 0 : index
    %c0_21 = arith.constant 0 : index
    %52 = vector.load %arg8[%c0_20, %c0_21] : memref<2x16xf32, #tpu.memory_space<vmem>>, vector<2x16xf32>
    tpu.vector_store %arg8[%c0_20, %c0_21], %39 {strides = array<i32>} : memref<2x16xf32, #tpu.memory_space<vmem>>, vector<2x16xf32>,
    %c0_22 = arith.constant 0 : index
    %c0_23 = arith.constant 0 : index
    %53 = vector.load %arg10[%c0_22, %c0_23] : memref<2x16xf32, #tpu.memory_space<vmem>>, vector<2x16xf32>
    tpu.vector_store %arg10[%c0_22, %c0_23], %45 {strides = array<i32>} : memref<2x16xf32, #tpu.memory_space<vmem>>, vector<2x16xf32>,
    %c0_24 = arith.constant 0 : index
    %c0_25 = arith.constant 0 : index
    %54 = vector.load %arg7[%c0_24, %c0_25] : memref<2x16xf32, #tpu.memory_space<vmem>>, vector<2x16xf32>
    tpu.vector_store %arg7[%c0_24, %c0_25], %48 {strides = array<i32>} : memref<2x16xf32, #tpu.memory_space<vmem>>, vector<2x16xf32>,
    %c0_26 = arith.constant 0 : index
    %c0_27 = arith.constant 0 : index
    %55 = vector.load %arg9[%c0_26, %c0_27] : memref<2x16xf32, #tpu.memory_space<vmem>>, vector<2x16xf32>
    tpu.vector_store %arg9[%c0_26, %c0_27], %51 {strides = array<i32>} : memref<2x16xf32, #tpu.memory_space<vmem>>, vector<2x16xf32>,
    %56 = arith.index_cast %c0_i32_1 : i32 to index
    %c0_28 = arith.constant 0 : index
    %c0_29 = arith.constant 0 : index
    %57 = vector.load %arg5[%56, %c0_28, %c0_29] : memref<8x2x16xf32, #tpu.memory_space<vmem>>, vector<1x2x16xf32>
    %58 = vector.shape_cast %57 : vector<1x2x16xf32> to vector<2x16xf32>
    %59 = vector.shape_cast %48 : vector<2x16xf32> to vector<1x2x16xf32>
    tpu.vector_store %arg5[%56, %c0_28, %c0_29], %59 {strides = array<i32>} : memref<8x2x16xf32, #tpu.memory_space<vmem>>, vector<1x2x16xf32>,
    %60 = arith.index_cast %3 : i32 to index
    %c0_30 = arith.constant 0 : index
    %c0_31 = arith.constant 0 : index
    %61 = vector.load %arg6[%60, %c0_30, %c0_31] : memref<8x2x16xf32, #tpu.memory_space<vmem>>, vector<1x2x16xf32>
    %62 = vector.shape_cast %61 : vector<1x2x16xf32> to vector<2x16xf32>
    %63 = vector.shape_cast %51 : vector<2x16xf32> to vector<1x2x16xf32>
    tpu.vector_store %arg6[%60, %c0_30, %c0_31], %63 {strides = array<i32>} : memref<8x2x16xf32, #tpu.memory_space<vmem>>, vector<1x2x16xf32>,
    %c1_i32 = arith.constant 1 : i32
    %c7_i32_32 = arith.constant 7 : i32
    %64 = arith.subi %c7_i32_32, %c1_i32 : i32
    %65 = arith.index_cast %c1_i32 : i32 to index
    %c0_33 = arith.constant 0 : index
    %c0_34 = arith.constant 0 : index
    %66 = vector.load %arg1[%65, %c0_33, %c0_34] : memref<8x2x64xf32, #tpu.memory_space<vmem>>, vector<1x2x64xf32>
    %67 = vector.shape_cast %66 : vector<1x2x64xf32> to vector<2x64xf32>
    %c0_35 = arith.constant 0 : index
    %c0_36 = arith.constant 0 : index
    %68 = vector.load %arg7[%c0_35, %c0_36] : memref<2x16xf32, #tpu.memory_space<vmem>>, vector<2x16xf32>
    %c0_37 = arith.constant 0 : index
    %c0_38 = arith.constant 0 : index
    %69 = vector.load %arg3[%c0_37, %c0_38] : memref<16x64xf32, #tpu.memory_space<vmem>>, vector<16x64xf32>
    %cst_39 = arith.constant dense<0.000000e+00> : vector<2x64xf32>
    %70 = tpu.matmul %68, %69, %cst_39 {dimension_numbers = #tpu.dot_dimension_numbers<[1], [0], [0], [1], [0, 0, 1, 1], [], []>} : vector<2x16xf32>, vector<16x64xf32>, vector<2x64xf32> -> vector<2x64xf32>
    %71 = arith.addf %67, %70 : vector<2x64xf32>
    %72 = arith.index_cast %64 : i32 to index
    %c0_40 = arith.constant 0 : index
    %c0_41 = arith.constant 0 : index
    %73 = vector.load %arg2[%72, %c0_40, %c0_41] : memref<8x2x64xf32, #tpu.memory_space<vmem>>, vector<1x2x64xf32>
    %74 = vector.shape_cast %73 : vector<1x2x64xf32> to vector<2x64xf32>
    %c0_42 = arith.constant 0 : index
    %c0_43 = arith.constant 0 : index
    %75 = vector.load %arg9[%c0_42, %c0_43] : memref<2x16xf32, #tpu.memory_space<vmem>>, vector<2x16xf32>
    %c0_44 = arith.constant 0 : index
    %c0_45 = arith.constant 0 : index
    %76 = vector.load %arg4[%c0_44, %c0_45] : memref<16x64xf32, #tpu.memory_space<vmem>>, vector<16x64xf32>
    %cst_46 = arith.constant dense<0.000000e+00> : vector<2x64xf32>
    %77 = tpu.matmul %75, %76, %cst_46 {dimension_numbers = #tpu.dot_dimension_numbers<[1], [0], [0], [1], [0, 0, 1, 1], [], []>} : vector<2x16xf32>, vector<16x64xf32>, vector<2x64xf32> -> vector<2x64xf32>
    %78 = arith.addf %74, %77 : vector<2x64xf32>
    %79 = vector.extract_strided_slice %71 {offsets = [0, 0], sizes = [2, 48], strides = [1, 1]} : vector<2x64xf32> to vector<2x48xf32>
    %80 = arith.negf %79 : vector<2x48xf32>
    %81 = math.exp %80 : vector<2x48xf32>
    %cst_47 = arith.constant 1.000000e+00 : f32
    %82 = vector.broadcast %cst_47 : f32 to vector<2x48xf32>
    %83 = arith.addf %82, %81 : vector<2x48xf32>
    %84 = arith.divf %82, %83 : vector<2x48xf32>
    %85 = vector.extract_strided_slice %78 {offsets = [0, 0], sizes = [2, 48], strides = [1, 1]} : vector<2x64xf32> to vector<2x48xf32>
    %86 = arith.negf %85 : vector<2x48xf32>
    %87 = math.exp %86 : vector<2x48xf32>
    %cst_48 = arith.constant 1.000000e+00 : f32
    %88 = vector.broadcast %cst_48 : f32 to vector<2x48xf32>
    %89 = arith.addf %88, %87 : vector<2x48xf32>
    %90 = arith.divf %88, %89 : vector<2x48xf32>
    %91 = vector.extract_strided_slice %71 {offsets = [0, 48], sizes = [2, 16], strides = [1, 1]} : vector<2x64xf32> to vector<2x16xf32>
    %92 = math.tanh %91 : vector<2x16xf32>
    %93 = vector.extract_strided_slice %78 {offsets = [0, 48], sizes = [2, 16], strides = [1, 1]} : vector<2x64xf32> to vector<2x16xf32>
    %94 = math.tanh %93 : vector<2x16xf32>
    %95 = vector.extract_strided_slice %84 {offsets = [0, 16], sizes = [2, 16], strides = [1, 1]} : vector<2x48xf32> to vector<2x16xf32>
    %c0_49 = arith.constant 0 : index
    %c0_50 = arith.constant 0 : index
    %96 = vector.load %arg8[%c0_49, %c0_50] : memref<2x16xf32, #tpu.memory_space<vmem>>, vector<2x16xf32>
    %97 = arith.mulf %95, %96 : vector<2x16xf32>
    %98 = vector.extract_strided_slice %84 {offsets = [0, 0], sizes = [2, 16], strides = [1, 1]} : vector<2x48xf32> to vector<2x16xf32>
    %99 = arith.mulf %98, %92 : vector<2x16xf32>
    %100 = arith.addf %97, %99 : vector<2x16xf32>
    %101 = vector.extract_strided_slice %90 {offsets = [0, 16], sizes = [2, 16], strides = [1, 1]} : vector<2x48xf32> to vector<2x16xf32>
    %c0_51 = arith.constant 0 : index
    %c0_52 = arith.constant 0 : index
    %102 = vector.load %arg10[%c0_51, %c0_52] : memref<2x16xf32, #tpu.memory_space<vmem>>, vector<2x16xf32>
    %103 = arith.mulf %101, %102 : vector<2x16xf32>
    %104 = vector.extract_strided_slice %90 {offsets = [0, 0], sizes = [2, 16], strides = [1, 1]} : vector<2x48xf32> to vector<2x16xf32>
    %105 = arith.mulf %104, %94 : vector<2x16xf32>
    %106 = arith.addf %103, %105 : vector<2x16xf32>
    %107 = vector.extract_strided_slice %84 {offsets = [0, 32], sizes = [2, 16], strides = [1, 1]} : vector<2x48xf32> to vector<2x16xf32>
    %108 = math.tanh %100 : vector<2x16xf32>
    %109 = arith.mulf %107, %108 : vector<2x16xf32>
    %110 = vector.extract_strided_slice %90 {offsets = [0, 32], sizes = [2, 16], strides = [1, 1]} : vector<2x48xf32> to vector<2x16xf32>
    %111 = math.tanh %106 : vector<2x16xf32>
    %112 = arith.mulf %110, %111 : vector<2x16xf32>
    %c0_53 = arith.constant 0 : index
    %c0_54 = arith.constant 0 : index
    %113 = vector.load %arg8[%c0_53, %c0_54] : memref<2x16xf32, #tpu.memory_space<vmem>>, vector<2x16xf32>
    tpu.vector_store %arg8[%c0_53, %c0_54], %100 {strides = array<i32>} : memref<2x16xf32, #tpu.memory_space<vmem>>, vector<2x16xf32>,
    %c0_55 = arith.constant 0 : index
    %c0_56 = arith.constant 0 : index
    %114 = vector.load %arg10[%c0_55, %c0_56] : memref<2x16xf32, #tpu.memory_space<vmem>>, vector<2x16xf32>
    tpu.vector_store %arg10[%c0_55, %c0_56], %106 {strides = array<i32>} : memref<2x16xf32, #tpu.memory_space<vmem>>, vector<2x16xf32>,
    %c0_57 = arith.constant 0 : index
    %c0_58 = arith.constant 0 : index
    %115 = vector.load %arg7[%c0_57, %c0_58] : memref<2x16xf32, #tpu.memory_space<vmem>>, vector<2x16xf32>
    tpu.vector_store %arg7[%c0_57, %c0_58], %109 {strides = array<i32>} : memref<2x16xf32, #tpu.memory_space<vmem>>, vector<2x16xf32>,
    %c0_59 = arith.constant 0 : index
    %c0_60 = arith.constant 0 : index
    %116 = vector.load %arg9[%c0_59, %c0_60] : memref<2x16xf32, #tpu.memory_space<vmem>>, vector<2x16xf32>
    tpu.vector_store %arg9[%c0_59, %c0_60], %112 {strides = array<i32>} : memref<2x16xf32, #tpu.memory_space<vmem>>, vector<2x16xf32>,
    %117 = arith.index_cast %c1_i32 : i32 to index
    %c0_61 = arith.constant 0 : index
    %c0_62 = arith.constant 0 : index
    %118 = vector.load %arg5[%117, %c0_61, %c0_62] : memref<8x2x16xf32, #tpu.memory_space<vmem>>, vector<1x2x16xf32>
    %119 = vector.shape_cast %118 : vector<1x2x16xf32> to vector<2x16xf32>
    %120 = vector.shape_cast %109 : vector<2x16xf32> to vector<1x2x16xf32>
    tpu.vector_store %arg5[%117, %c0_61, %c0_62], %120 {strides = array<i32>} : memref<8x2x16xf32, #tpu.memory_space<vmem>>, vector<1x2x16xf32>,
    %121 = arith.index_cast %64 : i32 to index
    %c0_63 = arith.constant 0 : index
    %c0_64 = arith.constant 0 : index
    %122 = vector.load %arg6[%121, %c0_63, %c0_64] : memref<8x2x16xf32, #tpu.memory_space<vmem>>, vector<1x2x16xf32>
    %123 = vector.shape_cast %122 : vector<1x2x16xf32> to vector<2x16xf32>
    %124 = vector.shape_cast %112 : vector<2x16xf32> to vector<1x2x16xf32>
    tpu.vector_store %arg6[%121, %c0_63, %c0_64], %124 {strides = array<i32>} : memref<8x2x16xf32, #tpu.memory_space<vmem>>, vector<1x2x16xf32>,
    %c2_i32 = arith.constant 2 : i32
    %c7_i32_65 = arith.constant 7 : i32
    %125 = arith.subi %c7_i32_65, %c2_i32 : i32
    %126 = arith.index_cast %c2_i32 : i32 to index
    %c0_66 = arith.constant 0 : index
    %c0_67 = arith.constant 0 : index
    %127 = vector.load %arg1[%126, %c0_66, %c0_67] : memref<8x2x64xf32, #tpu.memory_space<vmem>>, vector<1x2x64xf32>
    %128 = vector.shape_cast %127 : vector<1x2x64xf32> to vector<2x64xf32>
    %c0_68 = arith.constant 0 : index
    %c0_69 = arith.constant 0 : index
    %129 = vector.load %arg7[%c0_68, %c0_69] : memref<2x16xf32, #tpu.memory_space<vmem>>, vector<2x16xf32>
    %c0_70 = arith.constant 0 : index
    %c0_71 = arith.constant 0 : index
    %130 = vector.load %arg3[%c0_70, %c0_71] : memref<16x64xf32, #tpu.memory_space<vmem>>, vector<16x64xf32>
    %cst_72 = arith.constant dense<0.000000e+00> : vector<2x64xf32>
    %131 = tpu.matmul %129, %130, %cst_72 {dimension_numbers = #tpu.dot_dimension_numbers<[1], [0], [0], [1], [0, 0, 1, 1], [], []>} : vector<2x16xf32>, vector<16x64xf32>, vector<2x64xf32> -> vector<2x64xf32>
    %132 = arith.addf %128, %131 : vector<2x64xf32>
    %133 = arith.index_cast %125 : i32 to index
    %c0_73 = arith.constant 0 : index
    %c0_74 = arith.constant 0 : index
    %134 = vector.load %arg2[%133, %c0_73, %c0_74] : memref<8x2x64xf32, #tpu.memory_space<vmem>>, vector<1x2x64xf32>
    %135 = vector.shape_cast %134 : vector<1x2x64xf32> to vector<2x64xf32>
    %c0_75 = arith.constant 0 : index
    %c0_76 = arith.constant 0 : index
    %136 = vector.load %arg9[%c0_75, %c0_76] : memref<2x16xf32, #tpu.memory_space<vmem>>, vector<2x16xf32>
    %c0_77 = arith.constant 0 : index
    %c0_78 = arith.constant 0 : index
    %137 = vector.load %arg4[%c0_77, %c0_78] : memref<16x64xf32, #tpu.memory_space<vmem>>, vector<16x64xf32>
    %cst_79 = arith.constant dense<0.000000e+00> : vector<2x64xf32>
    %138 = tpu.matmul %136, %137, %cst_79 {dimension_numbers = #tpu.dot_dimension_numbers<[1], [0], [0], [1], [0, 0, 1, 1], [], []>} : vector<2x16xf32>, vector<16x64xf32>, vector<2x64xf32> -> vector<2x64xf32>
    %139 = arith.addf %135, %138 : vector<2x64xf32>
    %140 = vector.extract_strided_slice %132 {offsets = [0, 0], sizes = [2, 48], strides = [1, 1]} : vector<2x64xf32> to vector<2x48xf32>
    %141 = arith.negf %140 : vector<2x48xf32>
    %142 = math.exp %141 : vector<2x48xf32>
    %cst_80 = arith.constant 1.000000e+00 : f32
    %143 = vector.broadcast %cst_80 : f32 to vector<2x48xf32>
    %144 = arith.addf %143, %142 : vector<2x48xf32>
    %145 = arith.divf %143, %144 : vector<2x48xf32>
    %146 = vector.extract_strided_slice %139 {offsets = [0, 0], sizes = [2, 48], strides = [1, 1]} : vector<2x64xf32> to vector<2x48xf32>
    %147 = arith.negf %146 : vector<2x48xf32>
    %148 = math.exp %147 : vector<2x48xf32>
    %cst_81 = arith.constant 1.000000e+00 : f32
    %149 = vector.broadcast %cst_81 : f32 to vector<2x48xf32>
    %150 = arith.addf %149, %148 : vector<2x48xf32>
    %151 = arith.divf %149, %150 : vector<2x48xf32>
    %152 = vector.extract_strided_slice %132 {offsets = [0, 48], sizes = [2, 16], strides = [1, 1]} : vector<2x64xf32> to vector<2x16xf32>
    %153 = math.tanh %152 : vector<2x16xf32>
    %154 = vector.extract_strided_slice %139 {offsets = [0, 48], sizes = [2, 16], strides = [1, 1]} : vector<2x64xf32> to vector<2x16xf32>
    %155 = math.tanh %154 : vector<2x16xf32>
    %156 = vector.extract_strided_slice %145 {offsets = [0, 16], sizes = [2, 16], strides = [1, 1]} : vector<2x48xf32> to vector<2x16xf32>
    %c0_82 = arith.constant 0 : index
    %c0_83 = arith.constant 0 : index
    %157 = vector.load %arg8[%c0_82, %c0_83] : memref<2x16xf32, #tpu.memory_space<vmem>>, vector<2x16xf32>
    %158 = arith.mulf %156, %157 : vector<2x16xf32>
    %159 = vector.extract_strided_slice %145 {offsets = [0, 0], sizes = [2, 16], strides = [1, 1]} : vector<2x48xf32> to vector<2x16xf32>
    %160 = arith.mulf %159, %153 : vector<2x16xf32>
    %161 = arith.addf %158, %160 : vector<2x16xf32>
    %162 = vector.extract_strided_slice %151 {offsets = [0, 16], sizes = [2, 16], strides = [1, 1]} : vector<2x48xf32> to vector<2x16xf32>
    %c0_84 = arith.constant 0 : index
    %c0_85 = arith.constant 0 : index
    %163 = vector.load %arg10[%c0_84, %c0_85] : memref<2x16xf32, #tpu.memory_space<vmem>>, vector<2x16xf32>
    %164 = arith.mulf %162, %163 : vector<2x16xf32>
    %165 = vector.extract_strided_slice %151 {offsets = [0, 0], sizes = [2, 16], strides = [1, 1]} : vector<2x48xf32> to vector<2x16xf32>
    %166 = arith.mulf %165, %155 : vector<2x16xf32>
    %167 = arith.addf %164, %166 : vector<2x16xf32>
    %168 = vector.extract_strided_slice %145 {offsets = [0, 32], sizes = [2, 16], strides = [1, 1]} : vector<2x48xf32> to vector<2x16xf32>
    %169 = math.tanh %161 : vector<2x16xf32>
    %170 = arith.mulf %168, %169 : vector<2x16xf32>
    %171 = vector.extract_strided_slice %151 {offsets = [0, 32], sizes = [2, 16], strides = [1, 1]} : vector<2x48xf32> to vector<2x16xf32>
    %172 = math.tanh %167 : vector<2x16xf32>
    %173 = arith.mulf %171, %172 : vector<2x16xf32>
    %c0_86 = arith.constant 0 : index
    %c0_87 = arith.constant 0 : index
    %174 = vector.load %arg8[%c0_86, %c0_87] : memref<2x16xf32, #tpu.memory_space<vmem>>, vector<2x16xf32>
    tpu.vector_store %arg8[%c0_86, %c0_87], %161 {strides = array<i32>} : memref<2x16xf32, #tpu.memory_space<vmem>>, vector<2x16xf32>,
    %c0_88 = arith.constant 0 : index
    %c0_89 = arith.constant 0 : index
    %175 = vector.load %arg10[%c0_88, %c0_89] : memref<2x16xf32, #tpu.memory_space<vmem>>, vector<2x16xf32>
    tpu.vector_store %arg10[%c0_88, %c0_89], %167 {strides = array<i32>} : memref<2x16xf32, #tpu.memory_space<vmem>>, vector<2x16xf32>,
    %c0_90 = arith.constant 0 : index
    %c0_91 = arith.constant 0 : index
    %176 = vector.load %arg7[%c0_90, %c0_91] : memref<2x16xf32, #tpu.memory_space<vmem>>, vector<2x16xf32>
    tpu.vector_store %arg7[%c0_90, %c0_91], %170 {strides = array<i32>} : memref<2x16xf32, #tpu.memory_space<vmem>>, vector<2x16xf32>,
    %c0_92 = arith.constant 0 : index
    %c0_93 = arith.constant 0 : index
    %177 = vector.load %arg9[%c0_92, %c0_93] : memref<2x16xf32, #tpu.memory_space<vmem>>, vector<2x16xf32>
    tpu.vector_store %arg9[%c0_92, %c0_93], %173 {strides = array<i32>} : memref<2x16xf32, #tpu.memory_space<vmem>>, vector<2x16xf32>,
    %178 = arith.index_cast %c2_i32 : i32 to index
    %c0_94 = arith.constant 0 : index
    %c0_95 = arith.constant 0 : index
    %179 = vector.load %arg5[%178, %c0_94, %c0_95] : memref<8x2x16xf32, #tpu.memory_space<vmem>>, vector<1x2x16xf32>
    %180 = vector.shape_cast %179 : vector<1x2x16xf32> to vector<2x16xf32>
    %181 = vector.shape_cast %170 : vector<2x16xf32> to vector<1x2x16xf32>
    tpu.vector_store %arg5[%178, %c0_94, %c0_95], %181 {strides = array<i32>} : memref<8x2x16xf32, #tpu.memory_space<vmem>>, vector<1x2x16xf32>,
    %182 = arith.index_cast %125 : i32 to index
    %c0_96 = arith.constant 0 : index
    %c0_97 = arith.constant 0 : index
    %183 = vector.load %arg6[%182, %c0_96, %c0_97] : memref<8x2x16xf32, #tpu.memory_space<vmem>>, vector<1x2x16xf32>
    %184 = vector.shape_cast %183 : vector<1x2x16xf32> to vector<2x16xf32>
    %185 = vector.shape_cast %173 : vector<2x16xf32> to vector<1x2x16xf32>
    tpu.vector_store %arg6[%182, %c0_96, %c0_97], %185 {strides = array<i32>} : memref<8x2x16xf32, #tpu.memory_space<vmem>>, vector<1x2x16xf32>,
    %c3_i32 = arith.constant 3 : i32
    %c7_i32_98 = arith.constant 7 : i32
    %186 = arith.subi %c7_i32_98, %c3_i32 : i32
    %187 = arith.index_cast %c3_i32 : i32 to index
    %c0_99 = arith.constant 0 : index
    %c0_100 = arith.constant 0 : index
    %188 = vector.load %arg1[%187, %c0_99, %c0_100] : memref<8x2x64xf32, #tpu.memory_space<vmem>>, vector<1x2x64xf32>
    %189 = vector.shape_cast %188 : vector<1x2x64xf32> to vector<2x64xf32>
    %c0_101 = arith.constant 0 : index
    %c0_102 = arith.constant 0 : index
    %190 = vector.load %arg7[%c0_101, %c0_102] : memref<2x16xf32, #tpu.memory_space<vmem>>, vector<2x16xf32>
    %c0_103 = arith.constant 0 : index
    %c0_104 = arith.constant 0 : index
    %191 = vector.load %arg3[%c0_103, %c0_104] : memref<16x64xf32, #tpu.memory_space<vmem>>, vector<16x64xf32>
    %cst_105 = arith.constant dense<0.000000e+00> : vector<2x64xf32>
    %192 = tpu.matmul %190, %191, %cst_105 {dimension_numbers = #tpu.dot_dimension_numbers<[1], [0], [0], [1], [0, 0, 1, 1], [], []>} : vector<2x16xf32>, vector<16x64xf32>, vector<2x64xf32> -> vector<2x64xf32>
    %193 = arith.addf %189, %192 : vector<2x64xf32>
    %194 = arith.index_cast %186 : i32 to index
    %c0_106 = arith.constant 0 : index
    %c0_107 = arith.constant 0 : index
    %195 = vector.load %arg2[%194, %c0_106, %c0_107] : memref<8x2x64xf32, #tpu.memory_space<vmem>>, vector<1x2x64xf32>
    %196 = vector.shape_cast %195 : vector<1x2x64xf32> to vector<2x64xf32>
    %c0_108 = arith.constant 0 : index
    %c0_109 = arith.constant 0 : index
    %197 = vector.load %arg9[%c0_108, %c0_109] : memref<2x16xf32, #tpu.memory_space<vmem>>, vector<2x16xf32>
    %c0_110 = arith.constant 0 : index
    %c0_111 = arith.constant 0 : index
    %198 = vector.load %arg4[%c0_110, %c0_111] : memref<16x64xf32, #tpu.memory_space<vmem>>, vector<16x64xf32>
    %cst_112 = arith.constant dense<0.000000e+00> : vector<2x64xf32>
    %199 = tpu.matmul %197, %198, %cst_112 {dimension_numbers = #tpu.dot_dimension_numbers<[1], [0], [0], [1], [0, 0, 1, 1], [], []>} : vector<2x16xf32>, vector<16x64xf32>, vector<2x64xf32> -> vector<2x64xf32>
    %200 = arith.addf %196, %199 : vector<2x64xf32>
    %201 = vector.extract_strided_slice %193 {offsets = [0, 0], sizes = [2, 48], strides = [1, 1]} : vector<2x64xf32> to vector<2x48xf32>
    %202 = arith.negf %201 : vector<2x48xf32>
    %203 = math.exp %202 : vector<2x48xf32>
    %cst_113 = arith.constant 1.000000e+00 : f32
    %204 = vector.broadcast %cst_113 : f32 to vector<2x48xf32>
    %205 = arith.addf %204, %203 : vector<2x48xf32>
    %206 = arith.divf %204, %205 : vector<2x48xf32>
    %207 = vector.extract_strided_slice %200 {offsets = [0, 0], sizes = [2, 48], strides = [1, 1]} : vector<2x64xf32> to vector<2x48xf32>
    %208 = arith.negf %207 : vector<2x48xf32>
    %209 = math.exp %208 : vector<2x48xf32>
    %cst_114 = arith.constant 1.000000e+00 : f32
    %210 = vector.broadcast %cst_114 : f32 to vector<2x48xf32>
    %211 = arith.addf %210, %209 : vector<2x48xf32>
    %212 = arith.divf %210, %211 : vector<2x48xf32>
    %213 = vector.extract_strided_slice %193 {offsets = [0, 48], sizes = [2, 16], strides = [1, 1]} : vector<2x64xf32> to vector<2x16xf32>
    %214 = math.tanh %213 : vector<2x16xf32>
    %215 = vector.extract_strided_slice %200 {offsets = [0, 48], sizes = [2, 16], strides = [1, 1]} : vector<2x64xf32> to vector<2x16xf32>
    %216 = math.tanh %215 : vector<2x16xf32>
    %217 = vector.extract_strided_slice %206 {offsets = [0, 16], sizes = [2, 16], strides = [1, 1]} : vector<2x48xf32> to vector<2x16xf32>
    %c0_115 = arith.constant 0 : index
    %c0_116 = arith.constant 0 : index
    %218 = vector.load %arg8[%c0_115, %c0_116] : memref<2x16xf32, #tpu.memory_space<vmem>>, vector<2x16xf32>
    %219 = arith.mulf %217, %218 : vector<2x16xf32>
    %220 = vector.extract_strided_slice %206 {offsets = [0, 0], sizes = [2, 16], strides = [1, 1]} : vector<2x48xf32> to vector<2x16xf32>
    %221 = arith.mulf %220, %214 : vector<2x16xf32>
    %222 = arith.addf %219, %221 : vector<2x16xf32>
    %223 = vector.extract_strided_slice %212 {offsets = [0, 16], sizes = [2, 16], strides = [1, 1]} : vector<2x48xf32> to vector<2x16xf32>
    %c0_117 = arith.constant 0 : index
    %c0_118 = arith.constant 0 : index
    %224 = vector.load %arg10[%c0_117, %c0_118] : memref<2x16xf32, #tpu.memory_space<vmem>>, vector<2x16xf32>
    %225 = arith.mulf %223, %224 : vector<2x16xf32>
    %226 = vector.extract_strided_slice %212 {offsets = [0, 0], sizes = [2, 16], strides = [1, 1]} : vector<2x48xf32> to vector<2x16xf32>
    %227 = arith.mulf %226, %216 : vector<2x16xf32>
    %228 = arith.addf %225, %227 : vector<2x16xf32>
    %229 = vector.extract_strided_slice %206 {offsets = [0, 32], sizes = [2, 16], strides = [1, 1]} : vector<2x48xf32> to vector<2x16xf32>
    %230 = math.tanh %222 : vector<2x16xf32>
    %231 = arith.mulf %229, %230 : vector<2x16xf32>
    %232 = vector.extract_strided_slice %212 {offsets = [0, 32], sizes = [2, 16], strides = [1, 1]} : vector<2x48xf32> to vector<2x16xf32>
    %233 = math.tanh %228 : vector<2x16xf32>
    %234 = arith.mulf %232, %233 : vector<2x16xf32>
    %c0_119 = arith.constant 0 : index
    %c0_120 = arith.constant 0 : index
    %235 = vector.load %arg8[%c0_119, %c0_120] : memref<2x16xf32, #tpu.memory_space<vmem>>, vector<2x16xf32>
    tpu.vector_store %arg8[%c0_119, %c0_120], %222 {strides = array<i32>} : memref<2x16xf32, #tpu.memory_space<vmem>>, vector<2x16xf32>,
    %c0_121 = arith.constant 0 : index
    %c0_122 = arith.constant 0 : index
    %236 = vector.load %arg10[%c0_121, %c0_122] : memref<2x16xf32, #tpu.memory_space<vmem>>, vector<2x16xf32>
    tpu.vector_store %arg10[%c0_121, %c0_122], %228 {strides = array<i32>} : memref<2x16xf32, #tpu.memory_space<vmem>>, vector<2x16xf32>,
    %c0_123 = arith.constant 0 : index
    %c0_124 = arith.constant 0 : index
    %237 = vector.load %arg7[%c0_123, %c0_124] : memref<2x16xf32, #tpu.memory_space<vmem>>, vector<2x16xf32>
    tpu.vector_store %arg7[%c0_123, %c0_124], %231 {strides = array<i32>} : memref<2x16xf32, #tpu.memory_space<vmem>>, vector<2x16xf32>,
    %c0_125 = arith.constant 0 : index
    %c0_126 = arith.constant 0 : index
    %238 = vector.load %arg9[%c0_125, %c0_126] : memref<2x16xf32, #tpu.memory_space<vmem>>, vector<2x16xf32>
    tpu.vector_store %arg9[%c0_125, %c0_126], %234 {strides = array<i32>} : memref<2x16xf32, #tpu.memory_space<vmem>>, vector<2x16xf32>,
    %239 = arith.index_cast %c3_i32 : i32 to index
    %c0_127 = arith.constant 0 : index
    %c0_128 = arith.constant 0 : index
    %240 = vector.load %arg5[%239, %c0_127, %c0_128] : memref<8x2x16xf32, #tpu.memory_space<vmem>>, vector<1x2x16xf32>
    %241 = vector.shape_cast %240 : vector<1x2x16xf32> to vector<2x16xf32>
    %242 = vector.shape_cast %231 : vector<2x16xf32> to vector<1x2x16xf32>
    tpu.vector_store %arg5[%239, %c0_127, %c0_128], %242 {strides = array<i32>} : memref<8x2x16xf32, #tpu.memory_space<vmem>>, vector<1x2x16xf32>,
    %243 = arith.index_cast %186 : i32 to index
    %c0_129 = arith.constant 0 : index
    %c0_130 = arith.constant 0 : index
    %244 = vector.load %arg6[%243, %c0_129, %c0_130] : memref<8x2x16xf32, #tpu.memory_space<vmem>>, vector<1x2x16xf32>
    %245 = vector.shape_cast %244 : vector<1x2x16xf32> to vector<2x16xf32>
    %246 = vector.shape_cast %234 : vector<2x16xf32> to vector<1x2x16xf32>
    tpu.vector_store %arg6[%243, %c0_129, %c0_130], %246 {strides = array<i32>} : memref<8x2x16xf32, #tpu.memory_space<vmem>>, vector<1x2x16xf32>,
    %c4_i32 = arith.constant 4 : i32
    %c7_i32_131 = arith.constant 7 : i32
    %247 = arith.subi %c7_i32_131, %c4_i32 : i32
    %248 = arith.index_cast %c4_i32 : i32 to index
    %c0_132 = arith.constant 0 : index
    %c0_133 = arith.constant 0 : index
    %249 = vector.load %arg1[%248, %c0_132, %c0_133] : memref<8x2x64xf32, #tpu.memory_space<vmem>>, vector<1x2x64xf32>
    %250 = vector.shape_cast %249 : vector<1x2x64xf32> to vector<2x64xf32>
    %c0_134 = arith.constant 0 : index
    %c0_135 = arith.constant 0 : index
    %251 = vector.load %arg7[%c0_134, %c0_135] : memref<2x16xf32, #tpu.memory_space<vmem>>, vector<2x16xf32>
    %c0_136 = arith.constant 0 : index
    %c0_137 = arith.constant 0 : index
    %252 = vector.load %arg3[%c0_136, %c0_137] : memref<16x64xf32, #tpu.memory_space<vmem>>, vector<16x64xf32>
    %cst_138 = arith.constant dense<0.000000e+00> : vector<2x64xf32>
    %253 = tpu.matmul %251, %252, %cst_138 {dimension_numbers = #tpu.dot_dimension_numbers<[1], [0], [0], [1], [0, 0, 1, 1], [], []>} : vector<2x16xf32>, vector<16x64xf32>, vector<2x64xf32> -> vector<2x64xf32>
    %254 = arith.addf %250, %253 : vector<2x64xf32>
    %255 = arith.index_cast %247 : i32 to index
    %c0_139 = arith.constant 0 : index
    %c0_140 = arith.constant 0 : index
    %256 = vector.load %arg2[%255, %c0_139, %c0_140] : memref<8x2x64xf32, #tpu.memory_space<vmem>>, vector<1x2x64xf32>
    %257 = vector.shape_cast %256 : vector<1x2x64xf32> to vector<2x64xf32>
    %c0_141 = arith.constant 0 : index
    %c0_142 = arith.constant 0 : index
    %258 = vector.load %arg9[%c0_141, %c0_142] : memref<2x16xf32, #tpu.memory_space<vmem>>, vector<2x16xf32>
    %c0_143 = arith.constant 0 : index
    %c0_144 = arith.constant 0 : index
    %259 = vector.load %arg4[%c0_143, %c0_144] : memref<16x64xf32, #tpu.memory_space<vmem>>, vector<16x64xf32>
    %cst_145 = arith.constant dense<0.000000e+00> : vector<2x64xf32>
    %260 = tpu.matmul %258, %259, %cst_145 {dimension_numbers = #tpu.dot_dimension_numbers<[1], [0], [0], [1], [0, 0, 1, 1], [], []>} : vector<2x16xf32>, vector<16x64xf32>, vector<2x64xf32> -> vector<2x64xf32>
    %261 = arith.addf %257, %260 : vector<2x64xf32>
    %262 = vector.extract_strided_slice %254 {offsets = [0, 0], sizes = [2, 48], strides = [1, 1]} : vector<2x64xf32> to vector<2x48xf32>
    %263 = arith.negf %262 : vector<2x48xf32>
    %264 = math.exp %263 : vector<2x48xf32>
    %cst_146 = arith.constant 1.000000e+00 : f32
    %265 = vector.broadcast %cst_146 : f32 to vector<2x48xf32>
    %266 = arith.addf %265, %264 : vector<2x48xf32>
    %267 = arith.divf %265, %266 : vector<2x48xf32>
    %268 = vector.extract_strided_slice %261 {offsets = [0, 0], sizes = [2, 48], strides = [1, 1]} : vector<2x64xf32> to vector<2x48xf32>
    %269 = arith.negf %268 : vector<2x48xf32>
    %270 = math.exp %269 : vector<2x48xf32>
    %cst_147 = arith.constant 1.000000e+00 : f32
    %271 = vector.broadcast %cst_147 : f32 to vector<2x48xf32>
    %272 = arith.addf %271, %270 : vector<2x48xf32>
    %273 = arith.divf %271, %272 : vector<2x48xf32>
    %274 = vector.extract_strided_slice %254 {offsets = [0, 48], sizes = [2, 16], strides = [1, 1]} : vector<2x64xf32> to vector<2x16xf32>
    %275 = math.tanh %274 : vector<2x16xf32>
    %276 = vector.extract_strided_slice %261 {offsets = [0, 48], sizes = [2, 16], strides = [1, 1]} : vector<2x64xf32> to vector<2x16xf32>
    %277 = math.tanh %276 : vector<2x16xf32>
    %278 = vector.extract_strided_slice %267 {offsets = [0, 16], sizes = [2, 16], strides = [1, 1]} : vector<2x48xf32> to vector<2x16xf32>
    %c0_148 = arith.constant 0 : index
    %c0_149 = arith.constant 0 : index
    %279 = vector.load %arg8[%c0_148, %c0_149] : memref<2x16xf32, #tpu.memory_space<vmem>>, vector<2x16xf32>
    %280 = arith.mulf %278, %279 : vector<2x16xf32>
    %281 = vector.extract_strided_slice %267 {offsets = [0, 0], sizes = [2, 16], strides = [1, 1]} : vector<2x48xf32> to vector<2x16xf32>
    %282 = arith.mulf %281, %275 : vector<2x16xf32>
    %283 = arith.addf %280, %282 : vector<2x16xf32>
    %284 = vector.extract_strided_slice %273 {offsets = [0, 16], sizes = [2, 16], strides = [1, 1]} : vector<2x48xf32> to vector<2x16xf32>
    %c0_150 = arith.constant 0 : index
    %c0_151 = arith.constant 0 : index
    %285 = vector.load %arg10[%c0_150, %c0_151] : memref<2x16xf32, #tpu.memory_space<vmem>>, vector<2x16xf32>
    %286 = arith.mulf %284, %285 : vector<2x16xf32>
    %287 = vector.extract_strided_slice %273 {offsets = [0, 0], sizes = [2, 16], strides = [1, 1]} : vector<2x48xf32> to vector<2x16xf32>
    %288 = arith.mulf %287, %277 : vector<2x16xf32>
    %289 = arith.addf %286, %288 : vector<2x16xf32>
    %290 = vector.extract_strided_slice %267 {offsets = [0, 32], sizes = [2, 16], strides = [1, 1]} : vector<2x48xf32> to vector<2x16xf32>
    %291 = math.tanh %283 : vector<2x16xf32>
    %292 = arith.mulf %290, %291 : vector<2x16xf32>
    %293 = vector.extract_strided_slice %273 {offsets = [0, 32], sizes = [2, 16], strides = [1, 1]} : vector<2x48xf32> to vector<2x16xf32>
    %294 = math.tanh %289 : vector<2x16xf32>
    %295 = arith.mulf %293, %294 : vector<2x16xf32>
    %c0_152 = arith.constant 0 : index
    %c0_153 = arith.constant 0 : index
    %296 = vector.load %arg8[%c0_152, %c0_153] : memref<2x16xf32, #tpu.memory_space<vmem>>, vector<2x16xf32>
    tpu.vector_store %arg8[%c0_152, %c0_153], %283 {strides = array<i32>} : memref<2x16xf32, #tpu.memory_space<vmem>>, vector<2x16xf32>,
    %c0_154 = arith.constant 0 : index
    %c0_155 = arith.constant 0 : index
    %297 = vector.load %arg10[%c0_154, %c0_155] : memref<2x16xf32, #tpu.memory_space<vmem>>, vector<2x16xf32>
    tpu.vector_store %arg10[%c0_154, %c0_155], %289 {strides = array<i32>} : memref<2x16xf32, #tpu.memory_space<vmem>>, vector<2x16xf32>,
    %c0_156 = arith.constant 0 : index
    %c0_157 = arith.constant 0 : index
    %298 = vector.load %arg7[%c0_156, %c0_157] : memref<2x16xf32, #tpu.memory_space<vmem>>, vector<2x16xf32>
    tpu.vector_store %arg7[%c0_156, %c0_157], %292 {strides = array<i32>} : memref<2x16xf32, #tpu.memory_space<vmem>>, vector<2x16xf32>,
    %c0_158 = arith.constant 0 : index
    %c0_159 = arith.constant 0 : index
    %299 = vector.load %arg9[%c0_158, %c0_159] : memref<2x16xf32, #tpu.memory_space<vmem>>, vector<2x16xf32>
    tpu.vector_store %arg9[%c0_158, %c0_159], %295 {strides = array<i32>} : memref<2x16xf32, #tpu.memory_space<vmem>>, vector<2x16xf32>,
    %300 = arith.index_cast %c4_i32 : i32 to index
    %c0_160 = arith.constant 0 : index
    %c0_161 = arith.constant 0 : index
    %301 = vector.load %arg5[%300, %c0_160, %c0_161] : memref<8x2x16xf32, #tpu.memory_space<vmem>>, vector<1x2x16xf32>
    %302 = vector.shape_cast %301 : vector<1x2x16xf32> to vector<2x16xf32>
    %303 = vector.shape_cast %292 : vector<2x16xf32> to vector<1x2x16xf32>
    tpu.vector_store %arg5[%300, %c0_160, %c0_161], %303 {strides = array<i32>} : memref<8x2x16xf32, #tpu.memory_space<vmem>>, vector<1x2x16xf32>,
    %304 = arith.index_cast %247 : i32 to index
    %c0_162 = arith.constant 0 : index
    %c0_163 = arith.constant 0 : index
    %305 = vector.load %arg6[%304, %c0_162, %c0_163] : memref<8x2x16xf32, #tpu.memory_space<vmem>>, vector<1x2x16xf32>
    %306 = vector.shape_cast %305 : vector<1x2x16xf32> to vector<2x16xf32>
    %307 = vector.shape_cast %295 : vector<2x16xf32> to vector<1x2x16xf32>
    tpu.vector_store %arg6[%304, %c0_162, %c0_163], %307 {strides = array<i32>} : memref<8x2x16xf32, #tpu.memory_space<vmem>>, vector<1x2x16xf32>,
    %c5_i32 = arith.constant 5 : i32
    %c7_i32_164 = arith.constant 7 : i32
    %308 = arith.subi %c7_i32_164, %c5_i32 : i32
    %309 = arith.index_cast %c5_i32 : i32 to index
    %c0_165 = arith.constant 0 : index
    %c0_166 = arith.constant 0 : index
    %310 = vector.load %arg1[%309, %c0_165, %c0_166] : memref<8x2x64xf32, #tpu.memory_space<vmem>>, vector<1x2x64xf32>
    %311 = vector.shape_cast %310 : vector<1x2x64xf32> to vector<2x64xf32>
    %c0_167 = arith.constant 0 : index
    %c0_168 = arith.constant 0 : index
    %312 = vector.load %arg7[%c0_167, %c0_168] : memref<2x16xf32, #tpu.memory_space<vmem>>, vector<2x16xf32>
    %c0_169 = arith.constant 0 : index
    %c0_170 = arith.constant 0 : index
    %313 = vector.load %arg3[%c0_169, %c0_170] : memref<16x64xf32, #tpu.memory_space<vmem>>, vector<16x64xf32>
    %cst_171 = arith.constant dense<0.000000e+00> : vector<2x64xf32>
    %314 = tpu.matmul %312, %313, %cst_171 {dimension_numbers = #tpu.dot_dimension_numbers<[1], [0], [0], [1], [0, 0, 1, 1], [], []>} : vector<2x16xf32>, vector<16x64xf32>, vector<2x64xf32> -> vector<2x64xf32>
    %315 = arith.addf %311, %314 : vector<2x64xf32>
    %316 = arith.index_cast %308 : i32 to index
    %c0_172 = arith.constant 0 : index
    %c0_173 = arith.constant 0 : index
    %317 = vector.load %arg2[%316, %c0_172, %c0_173] : memref<8x2x64xf32, #tpu.memory_space<vmem>>, vector<1x2x64xf32>
    %318 = vector.shape_cast %317 : vector<1x2x64xf32> to vector<2x64xf32>
    %c0_174 = arith.constant 0 : index
    %c0_175 = arith.constant 0 : index
    %319 = vector.load %arg9[%c0_174, %c0_175] : memref<2x16xf32, #tpu.memory_space<vmem>>, vector<2x16xf32>
    %c0_176 = arith.constant 0 : index
    %c0_177 = arith.constant 0 : index
    %320 = vector.load %arg4[%c0_176, %c0_177] : memref<16x64xf32, #tpu.memory_space<vmem>>, vector<16x64xf32>
    %cst_178 = arith.constant dense<0.000000e+00> : vector<2x64xf32>
    %321 = tpu.matmul %319, %320, %cst_178 {dimension_numbers = #tpu.dot_dimension_numbers<[1], [0], [0], [1], [0, 0, 1, 1], [], []>} : vector<2x16xf32>, vector<16x64xf32>, vector<2x64xf32> -> vector<2x64xf32>
    %322 = arith.addf %318, %321 : vector<2x64xf32>
    %323 = vector.extract_strided_slice %315 {offsets = [0, 0], sizes = [2, 48], strides = [1, 1]} : vector<2x64xf32> to vector<2x48xf32>
    %324 = arith.negf %323 : vector<2x48xf32>
    %325 = math.exp %324 : vector<2x48xf32>
    %cst_179 = arith.constant 1.000000e+00 : f32
    %326 = vector.broadcast %cst_179 : f32 to vector<2x48xf32>
    %327 = arith.addf %326, %325 : vector<2x48xf32>
    %328 = arith.divf %326, %327 : vector<2x48xf32>
    %329 = vector.extract_strided_slice %322 {offsets = [0, 0], sizes = [2, 48], strides = [1, 1]} : vector<2x64xf32> to vector<2x48xf32>
    %330 = arith.negf %329 : vector<2x48xf32>
    %331 = math.exp %330 : vector<2x48xf32>
    %cst_180 = arith.constant 1.000000e+00 : f32
    %332 = vector.broadcast %cst_180 : f32 to vector<2x48xf32>
    %333 = arith.addf %332, %331 : vector<2x48xf32>
    %334 = arith.divf %332, %333 : vector<2x48xf32>
    %335 = vector.extract_strided_slice %315 {offsets = [0, 48], sizes = [2, 16], strides = [1, 1]} : vector<2x64xf32> to vector<2x16xf32>
    %336 = math.tanh %335 : vector<2x16xf32>
    %337 = vector.extract_strided_slice %322 {offsets = [0, 48], sizes = [2, 16], strides = [1, 1]} : vector<2x64xf32> to vector<2x16xf32>
    %338 = math.tanh %337 : vector<2x16xf32>
    %339 = vector.extract_strided_slice %328 {offsets = [0, 16], sizes = [2, 16], strides = [1, 1]} : vector<2x48xf32> to vector<2x16xf32>
    %c0_181 = arith.constant 0 : index
    %c0_182 = arith.constant 0 : index
    %340 = vector.load %arg8[%c0_181, %c0_182] : memref<2x16xf32, #tpu.memory_space<vmem>>, vector<2x16xf32>
    %341 = arith.mulf %339, %340 : vector<2x16xf32>
    %342 = vector.extract_strided_slice %328 {offsets = [0, 0], sizes = [2, 16], strides = [1, 1]} : vector<2x48xf32> to vector<2x16xf32>
    %343 = arith.mulf %342, %336 : vector<2x16xf32>
    %344 = arith.addf %341, %343 : vector<2x16xf32>
    %345 = vector.extract_strided_slice %334 {offsets = [0, 16], sizes = [2, 16], strides = [1, 1]} : vector<2x48xf32> to vector<2x16xf32>
    %c0_183 = arith.constant 0 : index
    %c0_184 = arith.constant 0 : index
    %346 = vector.load %arg10[%c0_183, %c0_184] : memref<2x16xf32, #tpu.memory_space<vmem>>, vector<2x16xf32>
    %347 = arith.mulf %345, %346 : vector<2x16xf32>
    %348 = vector.extract_strided_slice %334 {offsets = [0, 0], sizes = [2, 16], strides = [1, 1]} : vector<2x48xf32> to vector<2x16xf32>
    %349 = arith.mulf %348, %338 : vector<2x16xf32>
    %350 = arith.addf %347, %349 : vector<2x16xf32>
    %351 = vector.extract_strided_slice %328 {offsets = [0, 32], sizes = [2, 16], strides = [1, 1]} : vector<2x48xf32> to vector<2x16xf32>
    %352 = math.tanh %344 : vector<2x16xf32>
    %353 = arith.mulf %351, %352 : vector<2x16xf32>
    %354 = vector.extract_strided_slice %334 {offsets = [0, 32], sizes = [2, 16], strides = [1, 1]} : vector<2x48xf32> to vector<2x16xf32>
    %355 = math.tanh %350 : vector<2x16xf32>
    %356 = arith.mulf %354, %355 : vector<2x16xf32>
    %c0_185 = arith.constant 0 : index
    %c0_186 = arith.constant 0 : index
    %357 = vector.load %arg8[%c0_185, %c0_186] : memref<2x16xf32, #tpu.memory_space<vmem>>, vector<2x16xf32>
    tpu.vector_store %arg8[%c0_185, %c0_186], %344 {strides = array<i32>} : memref<2x16xf32, #tpu.memory_space<vmem>>, vector<2x16xf32>,
    %c0_187 = arith.constant 0 : index
    %c0_188 = arith.constant 0 : index
    %358 = vector.load %arg10[%c0_187, %c0_188] : memref<2x16xf32, #tpu.memory_space<vmem>>, vector<2x16xf32>
    tpu.vector_store %arg10[%c0_187, %c0_188], %350 {strides = array<i32>} : memref<2x16xf32, #tpu.memory_space<vmem>>, vector<2x16xf32>,
    %c0_189 = arith.constant 0 : index
    %c0_190 = arith.constant 0 : index
    %359 = vector.load %arg7[%c0_189, %c0_190] : memref<2x16xf32, #tpu.memory_space<vmem>>, vector<2x16xf32>
    tpu.vector_store %arg7[%c0_189, %c0_190], %353 {strides = array<i32>} : memref<2x16xf32, #tpu.memory_space<vmem>>, vector<2x16xf32>,
    %c0_191 = arith.constant 0 : index
    %c0_192 = arith.constant 0 : index
    %360 = vector.load %arg9[%c0_191, %c0_192] : memref<2x16xf32, #tpu.memory_space<vmem>>, vector<2x16xf32>
    tpu.vector_store %arg9[%c0_191, %c0_192], %356 {strides = array<i32>} : memref<2x16xf32, #tpu.memory_space<vmem>>, vector<2x16xf32>,
    %361 = arith.index_cast %c5_i32 : i32 to index
    %c0_193 = arith.constant 0 : index
    %c0_194 = arith.constant 0 : index
    %362 = vector.load %arg5[%361, %c0_193, %c0_194] : memref<8x2x16xf32, #tpu.memory_space<vmem>>, vector<1x2x16xf32>
    %363 = vector.shape_cast %362 : vector<1x2x16xf32> to vector<2x16xf32>
    %364 = vector.shape_cast %353 : vector<2x16xf32> to vector<1x2x16xf32>
    tpu.vector_store %arg5[%361, %c0_193, %c0_194], %364 {strides = array<i32>} : memref<8x2x16xf32, #tpu.memory_space<vmem>>, vector<1x2x16xf32>,
    %365 = arith.index_cast %308 : i32 to index
    %c0_195 = arith.constant 0 : index
    %c0_196 = arith.constant 0 : index
    %366 = vector.load %arg6[%365, %c0_195, %c0_196] : memref<8x2x16xf32, #tpu.memory_space<vmem>>, vector<1x2x16xf32>
    %367 = vector.shape_cast %366 : vector<1x2x16xf32> to vector<2x16xf32>
    %368 = vector.shape_cast %356 : vector<2x16xf32> to vector<1x2x16xf32>
    tpu.vector_store %arg6[%365, %c0_195, %c0_196], %368 {strides = array<i32>} : memref<8x2x16xf32, #tpu.memory_space<vmem>>, vector<1x2x16xf32>,
    %c6_i32 = arith.constant 6 : i32
    %c7_i32_197 = arith.constant 7 : i32
    %369 = arith.subi %c7_i32_197, %c6_i32 : i32
    %370 = arith.index_cast %c6_i32 : i32 to index
    %c0_198 = arith.constant 0 : index
    %c0_199 = arith.constant 0 : index
    %371 = vector.load %arg1[%370, %c0_198, %c0_199] : memref<8x2x64xf32, #tpu.memory_space<vmem>>, vector<1x2x64xf32>
    %372 = vector.shape_cast %371 : vector<1x2x64xf32> to vector<2x64xf32>
    %c0_200 = arith.constant 0 : index
    %c0_201 = arith.constant 0 : index
    %373 = vector.load %arg7[%c0_200, %c0_201] : memref<2x16xf32, #tpu.memory_space<vmem>>, vector<2x16xf32>
    %c0_202 = arith.constant 0 : index
    %c0_203 = arith.constant 0 : index
    %374 = vector.load %arg3[%c0_202, %c0_203] : memref<16x64xf32, #tpu.memory_space<vmem>>, vector<16x64xf32>
    %cst_204 = arith.constant dense<0.000000e+00> : vector<2x64xf32>
    %375 = tpu.matmul %373, %374, %cst_204 {dimension_numbers = #tpu.dot_dimension_numbers<[1], [0], [0], [1], [0, 0, 1, 1], [], []>} : vector<2x16xf32>, vector<16x64xf32>, vector<2x64xf32> -> vector<2x64xf32>
    %376 = arith.addf %372, %375 : vector<2x64xf32>
    %377 = arith.index_cast %369 : i32 to index
    %c0_205 = arith.constant 0 : index
    %c0_206 = arith.constant 0 : index
    %378 = vector.load %arg2[%377, %c0_205, %c0_206] : memref<8x2x64xf32, #tpu.memory_space<vmem>>, vector<1x2x64xf32>
    %379 = vector.shape_cast %378 : vector<1x2x64xf32> to vector<2x64xf32>
    %c0_207 = arith.constant 0 : index
    %c0_208 = arith.constant 0 : index
    %380 = vector.load %arg9[%c0_207, %c0_208] : memref<2x16xf32, #tpu.memory_space<vmem>>, vector<2x16xf32>
    %c0_209 = arith.constant 0 : index
    %c0_210 = arith.constant 0 : index
    %381 = vector.load %arg4[%c0_209, %c0_210] : memref<16x64xf32, #tpu.memory_space<vmem>>, vector<16x64xf32>
    %cst_211 = arith.constant dense<0.000000e+00> : vector<2x64xf32>
    %382 = tpu.matmul %380, %381, %cst_211 {dimension_numbers = #tpu.dot_dimension_numbers<[1], [0], [0], [1], [0, 0, 1, 1], [], []>} : vector<2x16xf32>, vector<16x64xf32>, vector<2x64xf32> -> vector<2x64xf32>
    %383 = arith.addf %379, %382 : vector<2x64xf32>
    %384 = vector.extract_strided_slice %376 {offsets = [0, 0], sizes = [2, 48], strides = [1, 1]} : vector<2x64xf32> to vector<2x48xf32>
    %385 = arith.negf %384 : vector<2x48xf32>
    %386 = math.exp %385 : vector<2x48xf32>
    %cst_212 = arith.constant 1.000000e+00 : f32
    %387 = vector.broadcast %cst_212 : f32 to vector<2x48xf32>
    %388 = arith.addf %387, %386 : vector<2x48xf32>
    %389 = arith.divf %387, %388 : vector<2x48xf32>
    %390 = vector.extract_strided_slice %383 {offsets = [0, 0], sizes = [2, 48], strides = [1, 1]} : vector<2x64xf32> to vector<2x48xf32>
    %391 = arith.negf %390 : vector<2x48xf32>
    %392 = math.exp %391 : vector<2x48xf32>
    %cst_213 = arith.constant 1.000000e+00 : f32
    %393 = vector.broadcast %cst_213 : f32 to vector<2x48xf32>
    %394 = arith.addf %393, %392 : vector<2x48xf32>
    %395 = arith.divf %393, %394 : vector<2x48xf32>
    %396 = vector.extract_strided_slice %376 {offsets = [0, 48], sizes = [2, 16], strides = [1, 1]} : vector<2x64xf32> to vector<2x16xf32>
    %397 = math.tanh %396 : vector<2x16xf32>
    %398 = vector.extract_strided_slice %383 {offsets = [0, 48], sizes = [2, 16], strides = [1, 1]} : vector<2x64xf32> to vector<2x16xf32>
    %399 = math.tanh %398 : vector<2x16xf32>
    %400 = vector.extract_strided_slice %389 {offsets = [0, 16], sizes = [2, 16], strides = [1, 1]} : vector<2x48xf32> to vector<2x16xf32>
    %c0_214 = arith.constant 0 : index
    %c0_215 = arith.constant 0 : index
    %401 = vector.load %arg8[%c0_214, %c0_215] : memref<2x16xf32, #tpu.memory_space<vmem>>, vector<2x16xf32>
    %402 = arith.mulf %400, %401 : vector<2x16xf32>
    %403 = vector.extract_strided_slice %389 {offsets = [0, 0], sizes = [2, 16], strides = [1, 1]} : vector<2x48xf32> to vector<2x16xf32>
    %404 = arith.mulf %403, %397 : vector<2x16xf32>
    %405 = arith.addf %402, %404 : vector<2x16xf32>
    %406 = vector.extract_strided_slice %395 {offsets = [0, 16], sizes = [2, 16], strides = [1, 1]} : vector<2x48xf32> to vector<2x16xf32>
    %c0_216 = arith.constant 0 : index
    %c0_217 = arith.constant 0 : index
    %407 = vector.load %arg10[%c0_216, %c0_217] : memref<2x16xf32, #tpu.memory_space<vmem>>, vector<2x16xf32>
    %408 = arith.mulf %406, %407 : vector<2x16xf32>
    %409 = vector.extract_strided_slice %395 {offsets = [0, 0], sizes = [2, 16], strides = [1, 1]} : vector<2x48xf32> to vector<2x16xf32>
    %410 = arith.mulf %409, %399 : vector<2x16xf32>
    %411 = arith.addf %408, %410 : vector<2x16xf32>
    %412 = vector.extract_strided_slice %389 {offsets = [0, 32], sizes = [2, 16], strides = [1, 1]} : vector<2x48xf32> to vector<2x16xf32>
    %413 = math.tanh %405 : vector<2x16xf32>
    %414 = arith.mulf %412, %413 : vector<2x16xf32>
    %415 = vector.extract_strided_slice %395 {offsets = [0, 32], sizes = [2, 16], strides = [1, 1]} : vector<2x48xf32> to vector<2x16xf32>
    %416 = math.tanh %411 : vector<2x16xf32>
    %417 = arith.mulf %415, %416 : vector<2x16xf32>
    %c0_218 = arith.constant 0 : index
    %c0_219 = arith.constant 0 : index
    %418 = vector.load %arg8[%c0_218, %c0_219] : memref<2x16xf32, #tpu.memory_space<vmem>>, vector<2x16xf32>
    tpu.vector_store %arg8[%c0_218, %c0_219], %405 {strides = array<i32>} : memref<2x16xf32, #tpu.memory_space<vmem>>, vector<2x16xf32>,
    %c0_220 = arith.constant 0 : index
    %c0_221 = arith.constant 0 : index
    %419 = vector.load %arg10[%c0_220, %c0_221] : memref<2x16xf32, #tpu.memory_space<vmem>>, vector<2x16xf32>
    tpu.vector_store %arg10[%c0_220, %c0_221], %411 {strides = array<i32>} : memref<2x16xf32, #tpu.memory_space<vmem>>, vector<2x16xf32>,
    %c0_222 = arith.constant 0 : index
    %c0_223 = arith.constant 0 : index
    %420 = vector.load %arg7[%c0_222, %c0_223] : memref<2x16xf32, #tpu.memory_space<vmem>>, vector<2x16xf32>
    tpu.vector_store %arg7[%c0_222, %c0_223], %414 {strides = array<i32>} : memref<2x16xf32, #tpu.memory_space<vmem>>, vector<2x16xf32>,
    %c0_224 = arith.constant 0 : index
    %c0_225 = arith.constant 0 : index
    %421 = vector.load %arg9[%c0_224, %c0_225] : memref<2x16xf32, #tpu.memory_space<vmem>>, vector<2x16xf32>
    tpu.vector_store %arg9[%c0_224, %c0_225], %417 {strides = array<i32>} : memref<2x16xf32, #tpu.memory_space<vmem>>, vector<2x16xf32>,
    %422 = arith.index_cast %c6_i32 : i32 to index
    %c0_226 = arith.constant 0 : index
    %c0_227 = arith.constant 0 : index
    %423 = vector.load %arg5[%422, %c0_226, %c0_227] : memref<8x2x16xf32, #tpu.memory_space<vmem>>, vector<1x2x16xf32>
    %424 = vector.shape_cast %423 : vector<1x2x16xf32> to vector<2x16xf32>
    %425 = vector.shape_cast %414 : vector<2x16xf32> to vector<1x2x16xf32>
    tpu.vector_store %arg5[%422, %c0_226, %c0_227], %425 {strides = array<i32>} : memref<8x2x16xf32, #tpu.memory_space<vmem>>, vector<1x2x16xf32>,
    %426 = arith.index_cast %369 : i32 to index
    %c0_228 = arith.constant 0 : index
    %c0_229 = arith.constant 0 : index
    %427 = vector.load %arg6[%426, %c0_228, %c0_229] : memref<8x2x16xf32, #tpu.memory_space<vmem>>, vector<1x2x16xf32>
    %428 = vector.shape_cast %427 : vector<1x2x16xf32> to vector<2x16xf32>
    %429 = vector.shape_cast %417 : vector<2x16xf32> to vector<1x2x16xf32>
    tpu.vector_store %arg6[%426, %c0_228, %c0_229], %429 {strides = array<i32>} : memref<8x2x16xf32, #tpu.memory_space<vmem>>, vector<1x2x16xf32>,
    %c7_i32_230 = arith.constant 7 : i32
    %c7_i32_231 = arith.constant 7 : i32
    %430 = arith.subi %c7_i32_231, %c7_i32_230 : i32
    %431 = arith.index_cast %c7_i32_230 : i32 to index
    %c0_232 = arith.constant 0 : index
    %c0_233 = arith.constant 0 : index
    %432 = vector.load %arg1[%431, %c0_232, %c0_233] : memref<8x2x64xf32, #tpu.memory_space<vmem>>, vector<1x2x64xf32>
    %433 = vector.shape_cast %432 : vector<1x2x64xf32> to vector<2x64xf32>
    %c0_234 = arith.constant 0 : index
    %c0_235 = arith.constant 0 : index
    %434 = vector.load %arg7[%c0_234, %c0_235] : memref<2x16xf32, #tpu.memory_space<vmem>>, vector<2x16xf32>
    %c0_236 = arith.constant 0 : index
    %c0_237 = arith.constant 0 : index
    %435 = vector.load %arg3[%c0_236, %c0_237] : memref<16x64xf32, #tpu.memory_space<vmem>>, vector<16x64xf32>
    %cst_238 = arith.constant dense<0.000000e+00> : vector<2x64xf32>
    %436 = tpu.matmul %434, %435, %cst_238 {dimension_numbers = #tpu.dot_dimension_numbers<[1], [0], [0], [1], [0, 0, 1, 1], [], []>} : vector<2x16xf32>, vector<16x64xf32>, vector<2x64xf32> -> vector<2x64xf32>
    %437 = arith.addf %433, %436 : vector<2x64xf32>
    %438 = arith.index_cast %430 : i32 to index
    %c0_239 = arith.constant 0 : index
    %c0_240 = arith.constant 0 : index
    %439 = vector.load %arg2[%438, %c0_239, %c0_240] : memref<8x2x64xf32, #tpu.memory_space<vmem>>, vector<1x2x64xf32>
    %440 = vector.shape_cast %439 : vector<1x2x64xf32> to vector<2x64xf32>
    %c0_241 = arith.constant 0 : index
    %c0_242 = arith.constant 0 : index
    %441 = vector.load %arg9[%c0_241, %c0_242] : memref<2x16xf32, #tpu.memory_space<vmem>>, vector<2x16xf32>
    %c0_243 = arith.constant 0 : index
    %c0_244 = arith.constant 0 : index
    %442 = vector.load %arg4[%c0_243, %c0_244] : memref<16x64xf32, #tpu.memory_space<vmem>>, vector<16x64xf32>
    %cst_245 = arith.constant dense<0.000000e+00> : vector<2x64xf32>
    %443 = tpu.matmul %441, %442, %cst_245 {dimension_numbers = #tpu.dot_dimension_numbers<[1], [0], [0], [1], [0, 0, 1, 1], [], []>} : vector<2x16xf32>, vector<16x64xf32>, vector<2x64xf32> -> vector<2x64xf32>
    %444 = arith.addf %440, %443 : vector<2x64xf32>
    %445 = vector.extract_strided_slice %437 {offsets = [0, 0], sizes = [2, 48], strides = [1, 1]} : vector<2x64xf32> to vector<2x48xf32>
    %446 = arith.negf %445 : vector<2x48xf32>
    %447 = math.exp %446 : vector<2x48xf32>
    %cst_246 = arith.constant 1.000000e+00 : f32
    %448 = vector.broadcast %cst_246 : f32 to vector<2x48xf32>
    %449 = arith.addf %448, %447 : vector<2x48xf32>
    %450 = arith.divf %448, %449 : vector<2x48xf32>
    %451 = vector.extract_strided_slice %444 {offsets = [0, 0], sizes = [2, 48], strides = [1, 1]} : vector<2x64xf32> to vector<2x48xf32>
    %452 = arith.negf %451 : vector<2x48xf32>
    %453 = math.exp %452 : vector<2x48xf32>
    %cst_247 = arith.constant 1.000000e+00 : f32
    %454 = vector.broadcast %cst_247 : f32 to vector<2x48xf32>
    %455 = arith.addf %454, %453 : vector<2x48xf32>
    %456 = arith.divf %454, %455 : vector<2x48xf32>
    %457 = vector.extract_strided_slice %437 {offsets = [0, 48], sizes = [2, 16], strides = [1, 1]} : vector<2x64xf32> to vector<2x16xf32>
    %458 = math.tanh %457 : vector<2x16xf32>
    %459 = vector.extract_strided_slice %444 {offsets = [0, 48], sizes = [2, 16], strides = [1, 1]} : vector<2x64xf32> to vector<2x16xf32>
    %460 = math.tanh %459 : vector<2x16xf32>
    %461 = vector.extract_strided_slice %450 {offsets = [0, 16], sizes = [2, 16], strides = [1, 1]} : vector<2x48xf32> to vector<2x16xf32>
    %c0_248 = arith.constant 0 : index
    %c0_249 = arith.constant 0 : index
    %462 = vector.load %arg8[%c0_248, %c0_249] : memref<2x16xf32, #tpu.memory_space<vmem>>, vector<2x16xf32>
    %463 = arith.mulf %461, %462 : vector<2x16xf32>
    %464 = vector.extract_strided_slice %450 {offsets = [0, 0], sizes = [2, 16], strides = [1, 1]} : vector<2x48xf32> to vector<2x16xf32>
    %465 = arith.mulf %464, %458 : vector<2x16xf32>
    %466 = arith.addf %463, %465 : vector<2x16xf32>
    %467 = vector.extract_strided_slice %456 {offsets = [0, 16], sizes = [2, 16], strides = [1, 1]} : vector<2x48xf32> to vector<2x16xf32>
    %c0_250 = arith.constant 0 : index
    %c0_251 = arith.constant 0 : index
    %468 = vector.load %arg10[%c0_250, %c0_251] : memref<2x16xf32, #tpu.memory_space<vmem>>, vector<2x16xf32>
    %469 = arith.mulf %467, %468 : vector<2x16xf32>
    %470 = vector.extract_strided_slice %456 {offsets = [0, 0], sizes = [2, 16], strides = [1, 1]} : vector<2x48xf32> to vector<2x16xf32>
    %471 = arith.mulf %470, %460 : vector<2x16xf32>
    %472 = arith.addf %469, %471 : vector<2x16xf32>
    %473 = vector.extract_strided_slice %450 {offsets = [0, 32], sizes = [2, 16], strides = [1, 1]} : vector<2x48xf32> to vector<2x16xf32>
    %474 = math.tanh %466 : vector<2x16xf32>
    %475 = arith.mulf %473, %474 : vector<2x16xf32>
    %476 = vector.extract_strided_slice %456 {offsets = [0, 32], sizes = [2, 16], strides = [1, 1]} : vector<2x48xf32> to vector<2x16xf32>
    %477 = math.tanh %472 : vector<2x16xf32>
    %478 = arith.mulf %476, %477 : vector<2x16xf32>
    %c0_252 = arith.constant 0 : index
    %c0_253 = arith.constant 0 : index
    %479 = vector.load %arg8[%c0_252, %c0_253] : memref<2x16xf32, #tpu.memory_space<vmem>>, vector<2x16xf32>
    tpu.vector_store %arg8[%c0_252, %c0_253], %466 {strides = array<i32>} : memref<2x16xf32, #tpu.memory_space<vmem>>, vector<2x16xf32>,
    %c0_254 = arith.constant 0 : index
    %c0_255 = arith.constant 0 : index
    %480 = vector.load %arg10[%c0_254, %c0_255] : memref<2x16xf32, #tpu.memory_space<vmem>>, vector<2x16xf32>
    tpu.vector_store %arg10[%c0_254, %c0_255], %472 {strides = array<i32>} : memref<2x16xf32, #tpu.memory_space<vmem>>, vector<2x16xf32>,
    %c0_256 = arith.constant 0 : index
    %c0_257 = arith.constant 0 : index
    %481 = vector.load %arg7[%c0_256, %c0_257] : memref<2x16xf32, #tpu.memory_space<vmem>>, vector<2x16xf32>
    tpu.vector_store %arg7[%c0_256, %c0_257], %475 {strides = array<i32>} : memref<2x16xf32, #tpu.memory_space<vmem>>, vector<2x16xf32>,
    %c0_258 = arith.constant 0 : index
    %c0_259 = arith.constant 0 : index
    %482 = vector.load %arg9[%c0_258, %c0_259] : memref<2x16xf32, #tpu.memory_space<vmem>>, vector<2x16xf32>
    tpu.vector_store %arg9[%c0_258, %c0_259], %478 {strides = array<i32>} : memref<2x16xf32, #tpu.memory_space<vmem>>, vector<2x16xf32>,
    %483 = arith.index_cast %c7_i32_230 : i32 to index
    %c0_260 = arith.constant 0 : index
    %c0_261 = arith.constant 0 : index
    %484 = vector.load %arg5[%483, %c0_260, %c0_261] : memref<8x2x16xf32, #tpu.memory_space<vmem>>, vector<1x2x16xf32>
    %485 = vector.shape_cast %484 : vector<1x2x16xf32> to vector<2x16xf32>
    %486 = vector.shape_cast %475 : vector<2x16xf32> to vector<1x2x16xf32>
    tpu.vector_store %arg5[%483, %c0_260, %c0_261], %486 {strides = array<i32>} : memref<8x2x16xf32, #tpu.memory_space<vmem>>, vector<1x2x16xf32>,
    %487 = arith.index_cast %430 : i32 to index
    %c0_262 = arith.constant 0 : index
    %c0_263 = arith.constant 0 : index
    %488 = vector.load %arg6[%487, %c0_262, %c0_263] : memref<8x2x16xf32, #tpu.memory_space<vmem>>, vector<1x2x16xf32>
    %489 = vector.shape_cast %488 : vector<1x2x16xf32> to vector<2x16xf32>
    %490 = vector.shape_cast %478 : vector<2x16xf32> to vector<1x2x16xf32>
    tpu.vector_store %arg6[%487, %c0_262, %c0_263], %490 {strides = array<i32>} : memref<8x2x16xf32, #tpu.memory_space<vmem>>, vector<1x2x16xf32>,
    %c8_i32 = arith.constant 8 : i32
    return
  }
  func.func @transform_0(%arg0: i32) -> (i32, i32, i32) {
    %c0_i32 = arith.constant 0 : i32
    %c0_i32_0 = arith.constant 0 : i32
    %c0_i32_1 = arith.constant 0 : i32
    return %arg0, %c0_i32, %c0_i32_0 : i32, i32, i32
  }
  func.func @transform_1(%arg0: i32) -> (i32, i32, i32) {
    %c0_i32 = arith.constant 0 : i32
    %0 = arith.subi %c0_i32, %arg0 : i32
    %c0_i32_0 = arith.constant 0 : i32
    %c0_i32_1 = arith.constant 0 : i32
    %c0_i32_2 = arith.constant 0 : i32
    return %0, %c0_i32_0, %c0_i32_1 : i32, i32, i32
  }
  func.func @transform_2(%arg0: i32) -> (i32, i32) {
    %c0_i32 = arith.constant 0 : i32
    %c0_i32_0 = arith.constant 0 : i32
    %c0_i32_1 = arith.constant 0 : i32
    return %c0_i32, %c0_i32_0 : i32, i32
  }
  func.func @transform_3(%arg0: i32) -> (i32, i32) {
    %c0_i32 = arith.constant 0 : i32
    %c0_i32_0 = arith.constant 0 : i32
    %c0_i32_1 = arith.constant 0 : i32
    return %c0_i32, %c0_i32_0 : i32, i32
  }
  func.func @transform_4(%arg0: i32) -> (i32, i32, i32) {
    %c0_i32 = arith.constant 0 : i32
    %c0_i32_0 = arith.constant 0 : i32
    %c0_i32_1 = arith.constant 0 : i32
    return %arg0, %c0_i32, %c0_i32_0 : i32, i32, i32
  }
  func.func @transform_5(%arg0: i32) -> (i32, i32, i32) {
    %c0_i32 = arith.constant 0 : i32
    %0 = arith.subi %c0_i32, %arg0 : i32
    %c0_i32_0 = arith.constant 0 : i32
    %c0_i32_1 = arith.constant 0 : i32
    %c0_i32_2 = arith.constant 0 : i32
    return %0, %c0_i32_0, %c0_i32_1 : i32, i32, i32
  }
}

</mosaic_0001>

<llo_original>
// kernel: _lambda_.9
$region0: #{_lambda_.9}
  #allocation0 [shape = 'u32[]', space=smem, size = 0x4, offset = 0x4, fixed_abs, tag = 'smem constant byte address 0x4 - core index']
  #allocation1 [shape = 'u32[144,128]{1,0:T(1,128)}', space=vmem, size = 0x12000, scoped, tag = 'internal scratch']
  %s0 = inlined_call_operand.vmem [shape: f32[16,16], index: 0, kind: input, shape index: {}]
  %s1 = inlined_call_operand.vmem [shape: f32[16,32], index: 1, kind: input, shape index: {}]
  %s2 = inlined_call_operand.vmem [shape: f32[1,32], index: 2, kind: input, shape index: {}]
  %s3 = inlined_call_operand.vmem [shape: f32[32,32], index: 3, kind: input, shape index: {}]
  %s4 = inlined_call_operand.vmem [shape: f32[1,32], index: 4, kind: input, shape index: {}]
  %s5 = inlined_call_operand.vmem [shape: f32[16,32], index: 5, kind: output, shape index: {}]
  %s6 = sld [smem:[#allocation0]]
  $region30: #{_lambda_.9} parent=0
    _
  %s8 = ssub.s32 1, %s6
  %s9 = scalar_select 0, %s8, %s6
  // Predicated region
  $region2: #{_lambda_.9} parent=0 // pred_check
    _
  $region3: #{_lambda_.9} parent=0 // pred_check_branch
    %11 = sbr.rel (0) target = $region5
  $region4: #{_lambda_.9} parent=0 // pred_region
    _
  $region5: #{_lambda_.9} parent=0 // pred_fallthru
    _
  // Predicated region
  $region6: #{_lambda_.9} parent=0 // pred_check
    _
  $region7: #{_lambda_.9} parent=0 // pred_check_branch
    %13 = sbr.rel (0) target = $region9
  $region8: #{_lambda_.9} parent=0 // pred_region
    _
  $region9: #{_lambda_.9} parent=0 // pred_fallthru
    _
  // Predicated region
  $region10: #{_lambda_.9} parent=0 // pred_check
    _
  $region11: #{_lambda_.9} parent=0 // pred_check_branch
    %15 = sbr.rel (0) target = $region13
  $region12: #{_lambda_.9} parent=0 // pred_region
    _
  $region13: #{_lambda_.9} parent=0 // pred_fallthru
    _
  // Predicated region
  $region14: #{_lambda_.9} parent=0 // pred_check
    _
  $region15: #{_lambda_.9} parent=0 // pred_check_branch
    %17 = sbr.rel (0) target = $region17
  $region16: #{_lambda_.9} parent=0 // pred_region
    _
  $region17: #{_lambda_.9} parent=0 // pred_fallthru
    _
  // Predicated region
  $region18: #{_lambda_.9} parent=0 // pred_check
    _
  $region19: #{_lambda_.9} parent=0 // pred_check_branch
    %19 = sbr.rel (0) target = $region21
  $region20: #{_lambda_.9} parent=0 // pred_region
    _
  $region21: #{_lambda_.9} parent=0 // pred_fallthru
    _
  %v20 = vld [vmem:[%s0] sm:$0xff]
  %v21 = vld [vmem:[%s0 + $0x8] sm:$0xff]
  %v22 = vld [vmem:[%s1] sm:$0xff]
  %v23 = vld [vmem:[%s1 + $0x8] sm:$0xff]
  %v24 = vld [vmem:[%s2] sm:$0x1]
  %v26 = vlaneseq
  %v27 = vshrl.u32 %v26, 7
  %v28 = vsub.s32 0, %v27
  %v29 = vrot.slane %v24, %v28
  %vm31 = vcmask 130048
  %v33 = vsel %vm31, %v20, 0
  %v36 = vsel %vm31, %v21, 0
  %38 = vmatprep.subr.mxu0 0.0
  %39 = vmatpush1.msra.mxu0 %v22
  %40 = vmatprep.subr.mxu0 0.0
  %41 = vmatpush1.msra.mxu0 %v23
  %42 = vmatprep.subr.mxu0 0.0
  %43 = vmatpush1.msra.mxu0 0.0
  %44 = vmatprep.subr.mxu0 0.0
  %45 = vmatpush1.msra.mxu0 0.0
  %46 = vmatprep.subr.mxu0 0.0
  %47 = vmatpush1.msra.mxu0 0.0
  %48 = vmatprep.subr.mxu0 0.0
  %49 = vmatpush1.msra.mxu0 0.0
  %50 = vmatprep.subr.mxu0 0.0
  %51 = vmatpush1.msra.mxu0 0.0
  %52 = vmatprep.subr.mxu0 0.0
  %53 = vmatpush1.msra.mxu0 0.0
  %54 = vmatprep.subr.mxu0 0.0
  %55 = vmatpush1.msra.mxu0 0.0
  %56 = vmatprep.subr.mxu0 0.0
  %57 = vmatpush1.msra.mxu0 0.0
  %58 = vmatprep.subr.mxu0 0.0
  %59 = vmatpush1.msra.mxu0 0.0
  %60 = vmatprep.subr.mxu0 0.0
  %61 = vmatpush1.msra.mxu0 0.0
  %62 = vmatprep.subr.mxu0 0.0
  %63 = vmatpush1.msra.mxu0 0.0
  %64 = vmatprep.subr.mxu0 0.0
  %65 = vmatpush1.msra.mxu0 0.0
  %66 = vmatprep.subr.mxu0 0.0
  %67 = vmatpush1.msra.mxu0 0.0
  %68 = vmatprep.subr.mxu0 0.0
  %69 = vmatpush1.msra.mxu0 0.0
  %70 = vmatprep.subr.mxu0 0.0
  %71 = vmatpush1.msra.mxu0 0.0
  %72 = vmatprep.subr.mxu0 0.0
  %73 = vmatpush1.msra.mxu0 0.0
  %74 = vmatprep.subr.mxu0 0.0
  %75 = vmatpush1.msra.mxu0 0.0
  %76 = vmatprep.subr.mxu0 0.0
  %77 = vmatpush1.msra.mxu0 0.0
  %78 = vmatprep.subr.mxu0 0.0
  %79 = vmatpush1.msra.mxu0 0.0
  %80 = vmatprep.subr.mxu0 0.0
  %81 = vmatpush1.msra.mxu0 0.0
  %82 = vmatprep.subr.mxu0 0.0
  %83 = vmatpush1.msra.mxu0 0.0
  %84 = vmatprep.subr.mxu0 0.0
  %85 = vmatpush1.msra.mxu0 0.0
  %86 = vmatprep.subr.mxu0 0.0
  %87 = vmatpush1.msra.mxu0 0.0
  %88 = vmatprep.subr.mxu0 0.0
  %89 = vmatpush1.msra.mxu0 0.0
  %90 = vmatprep.subr.mxu0 0.0
  %91 = vmatpush1.msra.mxu0 0.0
  %92 = vmatprep.subr.mxu0 0.0
  %93 = vmatpush1.msra.mxu0 0.0
  %94 = vmatprep.subr.mxu0 0.0
  %95 = vmatpush1.msra.mxu0 0.0
  %96 = vmatprep.subr.mxu0 0.0
  %97 = vmatpush1.msra.mxu0 0.0
  %98 = vmatprep.subr.mxu0 0.0
  %99 = vmatpush1.msra.mxu0 0.0
  %100 = vmatprep.subr.mxu0 0.0
  %101 = vmatpush1.msra.mxu0 0.0
  %102 = vmatprep.mubr.f32.mxu0 0.0
  %103 = vmatmul.mubr.f32.gmra.mrb[0].mxu0 %v33
  %v104 = vpop.f32.mrb[0].mxu0
  %v105 = vadd.f32 %v29, %v104
  %v106 = vpop.f32.mrb[0].mxu0
  %107 = vmatprep.mubr.f32.mxu0 0.0
  %108 = vmatmul.mubr.f32.gmra.mrb[0].mxu0 %v36
  %v109 = vpop.f32.mrb[0].mxu0
  %v110 = vadd.f32 %v29, %v109
  %v111 = vpop.f32.mrb[0].mxu0
  %112 = vdwg.mxu0
  %v113 = vmax.f32 %v105, 0.0
  %v114 = vmax.f32 %v110, 0.0
  %v115 = vld [vmem:[%s3] sm:$0xff]
  %v116 = vld [vmem:[%s3 + $0x8] sm:$0xff]
  %v117 = vld [vmem:[%s3 + $0x10] sm:$0xff]
  %v118 = vld [vmem:[%s3 + $0x18] sm:$0xff]
  %v119 = vld [vmem:[%s4] sm:$0x1]
  %v121 = vlaneseq
  %v122 = vshrl.u32 %v121, 7
  %v123 = vsub.s32 0, %v122
  %v124 = vrot.slane %v119, %v123
  %vm126 = vcmask 261120
  %v128 = vsel %vm126, %v113, 0
  %v131 = vsel %vm126, %v114, 0
  %133 = vmatprep.subr.mxu0 0.0
  %134 = vmatpush1.msra.mxu0 %v115
  %135 = vmatprep.subr.mxu0 0.0
  %136 = vmatpush1.msra.mxu0 %v116
  %137 = vmatprep.subr.mxu0 0.0
  %138 = vmatpush1.msra.mxu0 %v117
  %139 = vmatprep.subr.mxu0 0.0
  %140 = vmatpush1.msra.mxu0 %v118
  %141 = vmatprep.subr.mxu0 0.0
  %142 = vmatpush1.msra.mxu0 0.0
  %143 = vmatprep.subr.mxu0 0.0
  %144 = vmatpush1.msra.mxu0 0.0
  %145 = vmatprep.subr.mxu0 0.0
  %146 = vmatpush1.msra.mxu0 0.0
  %147 = vmatprep.subr.mxu0 0.0
  %148 = vmatpush1.msra.mxu0 0.0
  %149 = vmatprep.subr.mxu0 0.0
  %150 = vmatpush1.msra.mxu0 0.0
  %151 = vmatprep.subr.mxu0 0.0
  %152 = vmatpush1.msra.mxu0 0.0
  %153 = vmatprep.subr.mxu0 0.0
  %154 = vmatpush1.msra.mxu0 0.0
  %155 = vmatprep.subr.mxu0 0.0
  %156 = vmatpush1.msra.mxu0 0.0
  %157 = vmatprep.subr.mxu0 0.0
  %158 = vmatpush1.msra.mxu0 0.0
  %159 = vmatprep.subr.mxu0 0.0
  %160 = vmatpush1.msra.mxu0 0.0
  %161 = vmatprep.subr.mxu0 0.0
  %162 = vmatpush1.msra.mxu0 0.0
  %163 = vmatprep.subr.mxu0 0.0
  %164 = vmatpush1.msra.mxu0 0.0
  %165 = vmatprep.subr.mxu0 0.0
  %166 = vmatpush1.msra.mxu0 0.0
  %167 = vmatprep.subr.mxu0 0.0
  %168 = vmatpush1.msra.mxu0 0.0
  %169 = vmatprep.subr.mxu0 0.0
  %170 = vmatpush1.msra.mxu0 0.0
  %171 = vmatprep.subr.mxu0 0.0
  %172 = vmatpush1.msra.mxu0 0.0
  %173 = vmatprep.subr.mxu0 0.0
  %174 = vmatpush1.msra.mxu0 0.0
  %175 = vmatprep.subr.mxu0 0.0
  %176 = vmatpush1.msra.mxu0 0.0
  %177 = vmatprep.subr.mxu0 0.0
  %178 = vmatpush1.msra.mxu0 0.0
  %179 = vmatprep.subr.mxu0 0.0
  %180 = vmatpush1.msra.mxu0 0.0
  %181 = vmatprep.subr.mxu0 0.0
  %182 = vmatpush1.msra.mxu0 0.0
  %183 = vmatprep.subr.mxu0 0.0
  %184 = vmatpush1.msra.mxu0 0.0
  %185 = vmatprep.subr.mxu0 0.0
  %186 = vmatpush1.msra.mxu0 0.0
  %187 = vmatprep.subr.mxu0 0.0
  %188 = vmatpush1.msra.mxu0 0.0
  %189 = vmatprep.subr.mxu0 0.0
  %190 = vmatpush1.msra.mxu0 0.0
  %191 = vmatprep.subr.mxu0 0.0
  %192 = vmatpush1.msra.mxu0 0.0
  %193 = vmatprep.subr.mxu0 0.0
  %194 = vmatpush1.msra.mxu0 0.0
  %195 = vmatprep.subr.mxu0 0.0
  %196 = vmatpush1.msra.mxu0 0.0
  %197 = vmatprep.mubr.f32.mxu0 0.0
  %198 = vmatmul.mubr.f32.gmra.mrb[0].mxu0 %v128
  %v199 = vpop.f32.mrb[0].mxu0
  %v200 = vadd.f32 %v124, %v199
  %v201 = vpop.f32.mrb[0].mxu0
  %202 = vmatprep.mubr.f32.mxu0 0.0
  %203 = vmatmul.mubr.f32.gmra.mrb[0].mxu0 %v131
  %v204 = vpop.f32.mrb[0].mxu0
  %v205 = vadd.f32 %v124, %v204
  %v206 = vpop.f32.mrb[0].mxu0
  %207 = vdwg.mxu0
  %v208 = vmax.f32 %v200, 0.0
  %v209 = vmax.f32 %v205, 0.0
  %210 = vst.msk [vmem:[%s5] sm:$0xff] %vm126, %v208
  %211 = vst.msk [vmem:[%s5 + $0x8] sm:$0xff] %vm126, %v209
  // Predicated region
  $region22: #{_lambda_.9} parent=0 // pred_check
    _
  $region23: #{_lambda_.9} parent=0 // pred_check_branch
    %213 = sbr.rel (0) target = $region25
  $region24: #{_lambda_.9} parent=0 // pred_region
    _
  $region25: #{_lambda_.9} parent=0 // pred_fallthru
    _
  // Predicated region
  $region26: #{_lambda_.9} parent=0 // pred_check
    _
  $region27: #{_lambda_.9} parent=0 // pred_check_branch
    %215 = sbr.rel (0) target = $region29
  $region28: #{_lambda_.9} parent=0 // pred_region
    _
  $region29: #{_lambda_.9} parent=0 // pred_fallthru
    _

// kernel: _lambda_.12
$region0: #{_lambda_.12}
  #allocation0 [shape = 'u32[]', space=smem, size = 0x4, offset = 0x4, fixed_abs, tag = 'smem constant byte address 0x4 - core index']
  #allocation1 [shape = 'u32[144,128]{1,0:T(1,128)}', space=vmem, size = 0x12000, scoped, tag = 'internal scratch']
  %s0 = inlined_call_operand.vmem [shape: f32[16,32], index: 0, kind: input, shape index: {}]
  %s1 = inlined_call_operand.vmem [shape: f32[16,32], index: 1, kind: input, shape index: {}]
  %s2 = inlined_call_operand.vmem [shape: f32[32,32], index: 2, kind: input, shape index: {}]
  %s3 = inlined_call_operand.vmem [shape: f32[1,32], index: 3, kind: input, shape index: {}]
  %s4 = inlined_call_operand.vmem [shape: f32[16,32], index: 4, kind: output, shape index: {}]
  %s5 = sld [smem:[#allocation0]]
  $region26: #{_lambda_.12} parent=0
    _
  %s7 = ssub.s32 1, %s5
  %s8 = scalar_select 0, %s7, %s5
  // Predicated region
  $region2: #{_lambda_.12} parent=0 // pred_check
    _
  $region3: #{_lambda_.12} parent=0 // pred_check_branch
    %10 = sbr.rel (0) target = $region5
  $region4: #{_lambda_.12} parent=0 // pred_region
    _
  $region5: #{_lambda_.12} parent=0 // pred_fallthru
    _
  // Predicated region
  $region6: #{_lambda_.12} parent=0 // pred_check
    _
  $region7: #{_lambda_.12} parent=0 // pred_check_branch
    %12 = sbr.rel (0) target = $region9
  $region8: #{_lambda_.12} parent=0 // pred_region
    _
  $region9: #{_lambda_.12} parent=0 // pred_fallthru
    _
  // Predicated region
  $region10: #{_lambda_.12} parent=0 // pred_check
    _
  $region11: #{_lambda_.12} parent=0 // pred_check_branch
    %14 = sbr.rel (0) target = $region13
  $region12: #{_lambda_.12} parent=0 // pred_region
    _
  $region13: #{_lambda_.12} parent=0 // pred_fallthru
    _
  // Predicated region
  $region14: #{_lambda_.12} parent=0 // pred_check
    _
  $region15: #{_lambda_.12} parent=0 // pred_check_branch
    %16 = sbr.rel (0) target = $region17
  $region16: #{_lambda_.12} parent=0 // pred_region
    _
  $region17: #{_lambda_.12} parent=0 // pred_fallthru
    _
  %v17 = vld [vmem:[%s0] sm:$0xff]
  %v18 = vld [vmem:[%s0 + $0x8] sm:$0xff]
  %v19 = vld [vmem:[%s2] sm:$0xff]
  %v20 = vld [vmem:[%s2 + $0x8] sm:$0xff]
  %v21 = vld [vmem:[%s2 + $0x10] sm:$0xff]
  %v22 = vld [vmem:[%s2 + $0x18] sm:$0xff]
  %v23 = vld [vmem:[%s3] sm:$0x1]
  %v25 = vlaneseq
  %v26 = vshrl.u32 %v25, 7
  %v27 = vsub.s32 0, %v26
  %v28 = vrot.slane %v23, %v27
  %vm30 = vcmask 261120
  %v32 = vsel %vm30, %v17, 0
  %v35 = vsel %vm30, %v18, 0
  %37 = vmatprep.subr.mxu0 0.0
  %38 = vmatpush1.msra.mxu0 %v19
  %39 = vmatprep.subr.mxu0 0.0
  %40 = vmatpush1.msra.mxu0 %v20
  %41 = vmatprep.subr.mxu0 0.0
  %42 = vmatpush1.msra.mxu0 %v21
  %43 = vmatprep.subr.mxu0 0.0
  %44 = vmatpush1.msra.mxu0 %v22
  %45 = vmatprep.subr.mxu0 0.0
  %46 = vmatpush1.msra.mxu0 0.0
  %47 = vmatprep.subr.mxu0 0.0
  %48 = vmatpush1.msra.mxu0 0.0
  %49 = vmatprep.subr.mxu0 0.0
  %50 = vmatpush1.msra.mxu0 0.0
  %51 = vmatprep.subr.mxu0 0.0
  %52 = vmatpush1.msra.mxu0 0.0
  %53 = vmatprep.subr.mxu0 0.0
  %54 = vmatpush1.msra.mxu0 0.0
  %55 = vmatprep.subr.mxu0 0.0
  %56 = vmatpush1.msra.mxu0 0.0
  %57 = vmatprep.subr.mxu0 0.0
  %58 = vmatpush1.msra.mxu0 0.0
  %59 = vmatprep.subr.mxu0 0.0
  %60 = vmatpush1.msra.mxu0 0.0
  %61 = vmatprep.subr.mxu0 0.0
  %62 = vmatpush1.msra.mxu0 0.0
  %63 = vmatprep.subr.mxu0 0.0
  %64 = vmatpush1.msra.mxu0 0.0
  %65 = vmatprep.subr.mxu0 0.0
  %66 = vmatpush1.msra.mxu0 0.0
  %67 = vmatprep.subr.mxu0 0.0
  %68 = vmatpush1.msra.mxu0 0.0
  %69 = vmatprep.subr.mxu0 0.0
  %70 = vmatpush1.msra.mxu0 0.0
  %71 = vmatprep.subr.mxu0 0.0
  %72 = vmatpush1.msra.mxu0 0.0
  %73 = vmatprep.subr.mxu0 0.0
  %74 = vmatpush1.msra.mxu0 0.0
  %75 = vmatprep.subr.mxu0 0.0
  %76 = vmatpush1.msra.mxu0 0.0
  %77 = vmatprep.subr.mxu0 0.0
  %78 = vmatpush1.msra.mxu0 0.0
  %79 = vmatprep.subr.mxu0 0.0
  %80 = vmatpush1.msra.mxu0 0.0
  %81 = vmatprep.subr.mxu0 0.0
  %82 = vmatpush1.msra.mxu0 0.0
  %83 = vmatprep.subr.mxu0 0.0
  %84 = vmatpush1.msra.mxu0 0.0
  %85 = vmatprep.subr.mxu0 0.0
  %86 = vmatpush1.msra.mxu0 0.0
  %87 = vmatprep.subr.mxu0 0.0
  %88 = vmatpush1.msra.mxu0 0.0
  %89 = vmatprep.subr.mxu0 0.0
  %90 = vmatpush1.msra.mxu0 0.0
  %91 = vmatprep.subr.mxu0 0.0
  %92 = vmatpush1.msra.mxu0 0.0
  %93 = vmatprep.subr.mxu0 0.0
  %94 = vmatpush1.msra.mxu0 0.0
  %95 = vmatprep.subr.mxu0 0.0
  %96 = vmatpush1.msra.mxu0 0.0
  %97 = vmatprep.subr.mxu0 0.0
  %98 = vmatpush1.msra.mxu0 0.0
  %99 = vmatprep.subr.mxu0 0.0
  %100 = vmatpush1.msra.mxu0 0.0
  %101 = vmatprep.mubr.f32.mxu0 0.0
  %102 = vmatmul.mubr.f32.gmra.mrb[0].mxu0 %v32
  %v103 = vpop.f32.mrb[0].mxu0
  %v104 = vadd.f32 %v28, %v103
  %v105 = vpop.f32.mrb[0].mxu0
  %106 = vmatprep.mubr.f32.mxu0 0.0
  %107 = vmatmul.mubr.f32.gmra.mrb[0].mxu0 %v35
  %v108 = vpop.f32.mrb[0].mxu0
  %v109 = vadd.f32 %v28, %v108
  %v110 = vpop.f32.mrb[0].mxu0
  %111 = vdwg.mxu0
  %v112 = vmax.f32 %v104, 0.0
  %v113 = vmax.f32 %v109, 0.0
  %v114 = vld [vmem:[%s1] sm:$0xff]
  %v115 = vld [vmem:[%s1 + $0x8] sm:$0xff]
  %v116 = vadd.f32 %v112, %v114
  %v117 = vadd.f32 %v113, %v115
  %118 = vst.msk [vmem:[%s4] sm:$0xff] %vm30, %v116
  %119 = vst.msk [vmem:[%s4 + $0x8] sm:$0xff] %vm30, %v117
  // Predicated region
  $region18: #{_lambda_.12} parent=0 // pred_check
    _
  $region19: #{_lambda_.12} parent=0 // pred_check_branch
    %121 = sbr.rel (0) target = $region21
  $region20: #{_lambda_.12} parent=0 // pred_region
    _
  $region21: #{_lambda_.12} parent=0 // pred_fallthru
    _
  // Predicated region
  $region22: #{_lambda_.12} parent=0 // pred_check
    _
  $region23: #{_lambda_.12} parent=0 // pred_check_branch
    %123 = sbr.rel (0) target = $region25
  $region24: #{_lambda_.12} parent=0 // pred_region
    _
  $region25: #{_lambda_.12} parent=0 // pred_fallthru
    _

// kernel: _lambda_.10
$region0: #{_lambda_.10}
  #allocation0 [shape = 'u32[]', space=smem, size = 0x4, offset = 0x4, fixed_abs, tag = 'smem constant byte address 0x4 - core index']
  #allocation1 [shape = 'u32[144,128]{1,0:T(1,128)}', space=vmem, size = 0x12000, scoped, tag = 'internal scratch']
  %s0 = inlined_call_operand.vmem [shape: f32[16,32], index: 0, kind: input, shape index: {}]
  %s1 = inlined_call_operand.vmem [shape: f32[32,32], index: 1, kind: input, shape index: {}]
  %s2 = inlined_call_operand.vmem [shape: f32[3,32,32], index: 2, kind: input, shape index: {}]
  %s3 = inlined_call_operand.vmem [shape: f32[3,32,32], index: 3, kind: input, shape index: {}]
  %s4 = inlined_call_operand.vmem [shape: f32[1,32], index: 4, kind: input, shape index: {}]
  %s5 = inlined_call_operand.vmem [shape: f32[1,32], index: 5, kind: input, shape index: {}]
  %s6 = inlined_call_operand.vmem [shape: f32[1,32], index: 6, kind: input, shape index: {}]
  %s7 = inlined_call_operand.vmem [shape: f32[1,32], index: 7, kind: input, shape index: {}]
  %s8 = inlined_call_operand.vmem [shape: f32[1,32], index: 8, kind: input, shape index: {}]
  %s9 = inlined_call_operand.vmem [shape: f32[1,32], index: 9, kind: input, shape index: {}]
  %s10 = inlined_call_operand.vmem [shape: f32[16,32], index: 10, kind: output, shape index: {}]
  %s11 = sld [smem:[#allocation0]]
  $region50: #{_lambda_.10} parent=0
    _
  %s13 = ssub.s32 1, %s11
  %s14 = scalar_select 0, %s13, %s11
  // Predicated region
  $region2: #{_lambda_.10} parent=0 // pred_check
    _
  $region3: #{_lambda_.10} parent=0 // pred_check_branch
    %16 = sbr.rel (0) target = $region5
  $region4: #{_lambda_.10} parent=0 // pred_region
    _
  $region5: #{_lambda_.10} parent=0 // pred_fallthru
    _
  // Predicated region
  $region6: #{_lambda_.10} parent=0 // pred_check
    _
  $region7: #{_lambda_.10} parent=0 // pred_check_branch
    %18 = sbr.rel (0) target = $region9
  $region8: #{_lambda_.10} parent=0 // pred_region
    _
  $region9: #{_lambda_.10} parent=0 // pred_fallthru
    _
  // Predicated region
  $region10: #{_lambda_.10} parent=0 // pred_check
    _
  $region11: #{_lambda_.10} parent=0 // pred_check_branch
    %20 = sbr.rel (0) target = $region13
  $region12: #{_lambda_.10} parent=0 // pred_region
    _
  $region13: #{_lambda_.10} parent=0 // pred_fallthru
    _
  // Predicated region
  $region14: #{_lambda_.10} parent=0 // pred_check
    _
  $region15: #{_lambda_.10} parent=0 // pred_check_branch
    %22 = sbr.rel (0) target = $region17
  $region16: #{_lambda_.10} parent=0 // pred_region
    _
  $region17: #{_lambda_.10} parent=0 // pred_fallthru
    _
  // Predicated region
  $region18: #{_lambda_.10} parent=0 // pred_check
    _
  $region19: #{_lambda_.10} parent=0 // pred_check_branch
    %24 = sbr.rel (0) target = $region21
  $region20: #{_lambda_.10} parent=0 // pred_region
    _
  $region21: #{_lambda_.10} parent=0 // pred_fallthru
    _
  // Predicated region
  $region22: #{_lambda_.10} parent=0 // pred_check
    _
  $region23: #{_lambda_.10} parent=0 // pred_check_branch
    %26 = sbr.rel (0) target = $region25
  $region24: #{_lambda_.10} parent=0 // pred_region
    _
  $region25: #{_lambda_.10} parent=0 // pred_fallthru
    _
  // Predicated region
  $region26: #{_lambda_.10} parent=0 // pred_check
    _
  $region27: #{_lambda_.10} parent=0 // pred_check_branch
    %28 = sbr.rel (0) target = $region29
  $region28: #{_lambda_.10} parent=0 // pred_region
    _
  $region29: #{_lambda_.10} parent=0 // pred_fallthru
    _
  // Predicated region
  $region30: #{_lambda_.10} parent=0 // pred_check
    _
  $region31: #{_lambda_.10} parent=0 // pred_check_branch
    %30 = sbr.rel (0) target = $region33
  $region32: #{_lambda_.10} parent=0 // pred_region
    _
  $region33: #{_lambda_.10} parent=0 // pred_fallthru
    _
  // Predicated region
  $region34: #{_lambda_.10} parent=0 // pred_check
    _
  $region35: #{_lambda_.10} parent=0 // pred_check_branch
    %32 = sbr.rel (0) target = $region37
  $region36: #{_lambda_.10} parent=0 // pred_region
    _
  $region37: #{_lambda_.10} parent=0 // pred_fallthru
    _
  // Predicated region
  $region38: #{_lambda_.10} parent=0 // pred_check
    _
  $region39: #{_lambda_.10} parent=0 // pred_check_branch
    %34 = sbr.rel (0) target = $region41
  $region40: #{_lambda_.10} parent=0 // pred_region
    _
  $region41: #{_lambda_.10} parent=0 // pred_fallthru
    _
  %v35 = vld [vmem:[%s0] sm:$0xff]
  %v36 = vld [vmem:[%s0 + $0x8] sm:$0xff]
  %v37 = vlaneseq
  %v38 = vshrl.u32 %v37, 7
  %v39 = vadd.s32 %v38, 8
  %vm40 = vcmp.lt.s32.totalorder %v38, 0
  %v41 = vsub.s32 0, %v38
  %v42 = vsel %vm40, %v41, %v38
  %v43 = vshrl.u32 %v42, 3
  %v44 = vand.u32 %v42, 7
  %v45 = vsub.s32 0, %v44
  %v46 = vsel %vm40, %v45, %v44
  %vm47 = vcmp.lt.s32.totalorder %v39, 0
  %v48 = vsub.s32 0, %v39
  %v49 = vsel %vm47, %v48, %v39
  %v50 = vshrl.u32 %v49, 3
  %v51 = vand.u32 %v49, 7
  %v52 = vsub.s32 0, %v51
  %v53 = vsel %vm47, %v52, %v51
  %vm54 = vcmp.ne.s32.totalorder %v46, 0
  %vm55 = vcmp.ne.s32.totalorder %v53, 0
  %vm56 = vcmp.lt.s32.totalorder %v46, 0
  %vm57 = vcmp.lt.s32.totalorder %v53, 0
  %vm58 = vmand %vm56, %vm54
  %vm59 = vmand %vm57, %vm55
  %v60 = vadd.s32 %v46, 8
  %v61 = vadd.s32 %v53, 8
  %v62 = vsel %vm58, %v60, %v46
  %v63 = vsel %vm59, %v61, %v53
  %vm64 = vcmp.eq.s32.totalorder %v62, 0
  %vm65 = vcmp.eq.s32.totalorder %v63, 0
  %vm66 = vcmp.eq.s32.totalorder %v62, 7
  %vm67 = vcmp.eq.s32.totalorder %v63, 7
  %v68 = vrot.slane %v35, 7
  %v69 = vrot.slane %v36, 7
  %vm70 = vcmp.lt.s32.totalorder %v38, 1
  %v71 = vsel %vm70, %v68, %v69
  %v72 = vsel %vm70, %v69, %v68
  %v73 = vsel %vm64, 1, 0
  %v74 = vsel %vm65, 1, 0
  %vm75 = vcmp.eq.s32.totalorder %v73, 1
  %vm76 = vcmp.eq.s32.totalorder %v74, 1
  %v77 = vsel %vm75, 0.0, %v72
  %v78 = vsel %vm76, 0.0, %v71
  %v79 = vrot.slane %v35, 1
  %v80 = vrot.slane %v36, 1
  %vm81 = vcmp.lt.s32.totalorder %v38, 7
  %v82 = vsel %vm81, %v79, %v80
  %v83 = vsel %vm81, %v80, %v79
  %v84 = vsel %vm66, 1, 0
  %v85 = vsel %vm67, 1, 0
  %vm86 = vcmp.eq.s32.totalorder %v84, 1
  %vm87 = vcmp.eq.s32.totalorder %v85, 1
  %v88 = vsel %vm86, 0.0, %v82
  %v89 = vsel %vm87, 0.0, %v83
  %v90 = vld [vmem:[%s2] sm:$0xff]
  %v91 = vld [vmem:[%s2 + $0x8] sm:$0xff]
  %v92 = vld [vmem:[%s2 + $0x10] sm:$0xff]
  %v93 = vld [vmem:[%s2 + $0x18] sm:$0xff]
  %s94 = scalar_lea.vmem %s2, 32
  %v95 = vld [vmem:[%s94] sm:$0xff]
  %v96 = vld [vmem:[%s94 + $0x8] sm:$0xff]
  %v97 = vld [vmem:[%s94 + $0x10] sm:$0xff]
  %v98 = vld [vmem:[%s94 + $0x18] sm:$0xff]
  %vm99 = vcmask 261120
  %v101 = vsel %vm99, %v35, 0
  %v104 = vsel %vm99, %v36, 0
  %106 = vmatprep.subr.mxu0 0.0
  %107 = vmatpush1.msra.mxu0 %v95
  %108 = vmatprep.subr.mxu0 0.0
  %109 = vmatpush1.msra.mxu0 %v96
  %110 = vmatprep.subr.mxu0 0.0
  %111 = vmatpush1.msra.mxu0 %v97
  %112 = vmatprep.subr.mxu0 0.0
  %113 = vmatpush1.msra.mxu0 %v98
  %114 = vmatprep.subr.mxu0 0.0
  %115 = vmatpush1.msra.mxu0 0.0
  %116 = vmatprep.subr.mxu0 0.0
  %117 = vmatpush1.msra.mxu0 0.0
  %118 = vmatprep.subr.mxu0 0.0
  %119 = vmatpush1.msra.mxu0 0.0
  %120 = vmatprep.subr.mxu0 0.0
  %121 = vmatpush1.msra.mxu0 0.0
  %122 = vmatprep.subr.mxu0 0.0
  %123 = vmatpush1.msra.mxu0 0.0
  %124 = vmatprep.subr.mxu0 0.0
  %125 = vmatpush1.msra.mxu0 0.0
  %126 = vmatprep.subr.mxu0 0.0
  %127 = vmatpush1.msra.mxu0 0.0
  %128 = vmatprep.subr.mxu0 0.0
  %129 = vmatpush1.msra.mxu0 0.0
  %130 = vmatprep.subr.mxu0 0.0
  %131 = vmatpush1.msra.mxu0 0.0
  %132 = vmatprep.subr.mxu0 0.0
  %133 = vmatpush1.msra.mxu0 0.0
  %134 = vmatprep.subr.mxu0 0.0
  %135 = vmatpush1.msra.mxu0 0.0
  %136 = vmatprep.subr.mxu0 0.0
  %137 = vmatpush1.msra.mxu0 0.0
  %138 = vmatprep.subr.mxu0 0.0
  %139 = vmatpush1.msra.mxu0 0.0
  %140 = vmatprep.subr.mxu0 0.0
  %141 = vmatpush1.msra.mxu0 0.0
  %142 = vmatprep.subr.mxu0 0.0
  %143 = vmatpush1.msra.mxu0 0.0
  %144 = vmatprep.subr.mxu0 0.0
  %145 = vmatpush1.msra.mxu0 0.0
  %146 = vmatprep.subr.mxu0 0.0
  %147 = vmatpush1.msra.mxu0 0.0
  %148 = vmatprep.subr.mxu0 0.0
  %149 = vmatpush1.msra.mxu0 0.0
  %150 = vmatprep.subr.mxu0 0.0
  %151 = vmatpush1.msra.mxu0 0.0
  %152 = vmatprep.subr.mxu0 0.0
  %153 = vmatpush1.msra.mxu0 0.0
  %154 = vmatprep.subr.mxu0 0.0
  %155 = vmatpush1.msra.mxu0 0.0
  %156 = vmatprep.subr.mxu0 0.0
  %157 = vmatpush1.msra.mxu0 0.0
  %158 = vmatprep.subr.mxu0 0.0
  %159 = vmatpush1.msra.mxu0 0.0
  %160 = vmatprep.subr.mxu0 0.0
  %161 = vmatpush1.msra.mxu0 0.0
  %162 = vmatprep.subr.mxu0 0.0
  %163 = vmatpush1.msra.mxu0 0.0
  %164 = vmatprep.subr.mxu0 0.0
  %165 = vmatpush1.msra.mxu0 0.0
  %166 = vmatprep.subr.mxu0 0.0
  %167 = vmatpush1.msra.mxu0 0.0
  %168 = vmatprep.subr.mxu0 0.0
  %169 = vmatpush1.msra.mxu0 0.0
  %170 = vmatprep.mubr.f32.mxu0 0.0
  %171 = vmatmul.mubr.f32.gmra.mrb[0].mxu0 %v101
  %v172 = vpop.f32.mrb[0].mxu0
  %v173 = vadd.f32 0.0, %v172
  %v174 = vpop.f32.mrb[0].mxu0
  %175 = vmatprep.mubr.f32.mxu0 0.0
  %176 = vmatmul.mubr.f32.gmra.mrb[0].mxu0 %v104
  %v177 = vpop.f32.mrb[0].mxu0
  %v178 = vadd.f32 0.0, %v177
  %v179 = vpop.f32.mrb[0].mxu0
  %180 = vdwg.mxu0
  %v182 = vsel %vm99, %v77, 0
  %v185 = vsel %vm99, %v78, 0
  %187 = vmatprep.subr.mxu0 0.0
  %188 = vmatpush1.msra.mxu0 %v90
  %189 = vmatprep.subr.mxu0 0.0
  %190 = vmatpush1.msra.mxu0 %v91
  %191 = vmatprep.subr.mxu0 0.0
  %192 = vmatpush1.msra.mxu0 %v92
  %193 = vmatprep.subr.mxu0 0.0
  %194 = vmatpush1.msra.mxu0 %v93
  %195 = vmatprep.subr.mxu0 0.0
  %196 = vmatpush1.msra.mxu0 0.0
  %197 = vmatprep.subr.mxu0 0.0
  %198 = vmatpush1.msra.mxu0 0.0
  %199 = vmatprep.subr.mxu0 0.0
  %200 = vmatpush1.msra.mxu0 0.0
  %201 = vmatprep.subr.mxu0 0.0
  %202 = vmatpush1.msra.mxu0 0.0
  %203 = vmatprep.subr.mxu0 0.0
  %204 = vmatpush1.msra.mxu0 0.0
  %205 = vmatprep.subr.mxu0 0.0
  %206 = vmatpush1.msra.mxu0 0.0
  %207 = vmatprep.subr.mxu0 0.0
  %208 = vmatpush1.msra.mxu0 0.0
  %209 = vmatprep.subr.mxu0 0.0
  %210 = vmatpush1.msra.mxu0 0.0
  %211 = vmatprep.subr.mxu0 0.0
  %212 = vmatpush1.msra.mxu0 0.0
  %213 = vmatprep.subr.mxu0 0.0
  %214 = vmatpush1.msra.mxu0 0.0
  %215 = vmatprep.subr.mxu0 0.0
  %216 = vmatpush1.msra.mxu0 0.0
  %217 = vmatprep.subr.mxu0 0.0
  %218 = vmatpush1.msra.mxu0 0.0
  %219 = vmatprep.subr.mxu0 0.0
  %220 = vmatpush1.msra.mxu0 0.0
  %221 = vmatprep.subr.mxu0 0.0
  %222 = vmatpush1.msra.mxu0 0.0
  %223 = vmatprep.subr.mxu0 0.0
  %224 = vmatpush1.msra.mxu0 0.0
  %225 = vmatprep.subr.mxu0 0.0
  %226 = vmatpush1.msra.mxu0 0.0
  %227 = vmatprep.subr.mxu0 0.0
  %228 = vmatpush1.msra.mxu0 0.0
  %229 = vmatprep.subr.mxu0 0.0
  %230 = vmatpush1.msra.mxu0 0.0
  %231 = vmatprep.subr.mxu0 0.0
  %232 = vmatpush1.msra.mxu0 0.0
  %233 = vmatprep.subr.mxu0 0.0
  %234 = vmatpush1.msra.mxu0 0.0
  %235 = vmatprep.subr.mxu0 0.0
  %236 = vmatpush1.msra.mxu0 0.0
  %237 = vmatprep.subr.mxu0 0.0
  %238 = vmatpush1.msra.mxu0 0.0
  %239 = vmatprep.subr.mxu0 0.0
  %240 = vmatpush1.msra.mxu0 0.0
  %241 = vmatprep.subr.mxu0 0.0
  %242 = vmatpush1.msra.mxu0 0.0
  %243 = vmatprep.subr.mxu0 0.0
  %244 = vmatpush1.msra.mxu0 0.0
  %245 = vmatprep.subr.mxu0 0.0
  %246 = vmatpush1.msra.mxu0 0.0
  %247 = vmatprep.subr.mxu0 0.0
  %248 = vmatpush1.msra.mxu0 0.0
  %249 = vmatprep.subr.mxu0 0.0
  %250 = vmatpush1.msra.mxu0 0.0
  %251 = vmatprep.mubr.f32.mxu0 0.0
  %252 = vmatmul.mubr.f32.gmra.mrb[0].mxu0 %v182
  %v253 = vpop.f32.mrb[0].mxu0
  %v254 = vadd.f32 %v173, %v253
  %v255 = vpop.f32.mrb[0].mxu0
  %256 = vmatprep.mubr.f32.mxu0 0.0
  %257 = vmatmul.mubr.f32.gmra.mrb[0].mxu0 %v185
  %v258 = vpop.f32.mrb[0].mxu0
  %v259 = vadd.f32 %v178, %v258
  %v260 = vpop.f32.mrb[0].mxu0
  %261 = vdwg.mxu0
  %s262 = scalar_lea.vmem %s2, 64
  %v263 = vld [vmem:[%s262] sm:$0xff]
  %v264 = vld [vmem:[%s262 + $0x8] sm:$0xff]
  %v265 = vld [vmem:[%s262 + $0x10] sm:$0xff]
  %v266 = vld [vmem:[%s262 + $0x18] sm:$0xff]
  %v268 = vsel %vm99, %v88, 0
  %v271 = vsel %vm99, %v89, 0
  %273 = vmatprep.subr.mxu0 0.0
  %274 = vmatpush1.msra.mxu0 %v263
  %275 = vmatprep.subr.mxu0 0.0
  %276 = vmatpush1.msra.mxu0 %v264
  %277 = vmatprep.subr.mxu0 0.0
  %278 = vmatpush1.msra.mxu0 %v265
  %279 = vmatprep.subr.mxu0 0.0
  %280 = vmatpush1.msra.mxu0 %v266
  %281 = vmatprep.subr.mxu0 0.0
  %282 = vmatpush1.msra.mxu0 0.0
  %283 = vmatprep.subr.mxu0 0.0
  %284 = vmatpush1.msra.mxu0 0.0
  %285 = vmatprep.subr.mxu0 0.0
  %286 = vmatpush1.msra.mxu0 0.0
  %287 = vmatprep.subr.mxu0 0.0
  %288 = vmatpush1.msra.mxu0 0.0
  %289 = vmatprep.subr.mxu0 0.0
  %290 = vmatpush1.msra.mxu0 0.0
  %291 = vmatprep.subr.mxu0 0.0
  %292 = vmatpush1.msra.mxu0 0.0
  %293 = vmatprep.subr.mxu0 0.0
  %294 = vmatpush1.msra.mxu0 0.0
  %295 = vmatprep.subr.mxu0 0.0
  %296 = vmatpush1.msra.mxu0 0.0
  %297 = vmatprep.subr.mxu0 0.0
  %298 = vmatpush1.msra.mxu0 0.0
  %299 = vmatprep.subr.mxu0 0.0
  %300 = vmatpush1.msra.mxu0 0.0
  %301 = vmatprep.subr.mxu0 0.0
  %302 = vmatpush1.msra.mxu0 0.0
  %303 = vmatprep.subr.mxu0 0.0
  %304 = vmatpush1.msra.mxu0 0.0
  %305 = vmatprep.subr.mxu0 0.0
  %306 = vmatpush1.msra.mxu0 0.0
  %307 = vmatprep.subr.mxu0 0.0
  %308 = vmatpush1.msra.mxu0 0.0
  %309 = vmatprep.subr.mxu0 0.0
  %310 = vmatpush1.msra.mxu0 0.0
  %311 = vmatprep.subr.mxu0 0.0
  %312 = vmatpush1.msra.mxu0 0.0
  %313 = vmatprep.subr.mxu0 0.0
  %314 = vmatpush1.msra.mxu0 0.0
  %315 = vmatprep.subr.mxu0 0.0
  %316 = vmatpush1.msra.mxu0 0.0
  %317 = vmatprep.subr.mxu0 0.0
  %318 = vmatpush1.msra.mxu0 0.0
  %319 = vmatprep.subr.mxu0 0.0
  %320 = vmatpush1.msra.mxu0 0.0
  %321 = vmatprep.subr.mxu0 0.0
  %322 = vmatpush1.msra.mxu0 0.0
  %323 = vmatprep.subr.mxu0 0.0
  %324 = vmatpush1.msra.mxu0 0.0
  %325 = vmatprep.subr.mxu0 0.0
  %326 = vmatpush1.msra.mxu0 0.0
  %327 = vmatprep.subr.mxu0 0.0
  %328 = vmatpush1.msra.mxu0 0.0
  %329 = vmatprep.subr.mxu0 0.0
  %330 = vmatpush1.msra.mxu0 0.0
  %331 = vmatprep.subr.mxu0 0.0
  %332 = vmatpush1.msra.mxu0 0.0
  %333 = vmatprep.subr.mxu0 0.0
  %334 = vmatpush1.msra.mxu0 0.0
  %335 = vmatprep.subr.mxu0 0.0
  %336 = vmatpush1.msra.mxu0 0.0
  %337 = vmatprep.mubr.f32.mxu0 0.0
  %338 = vmatmul.mubr.f32.gmra.mrb[0].mxu0 %v268
  %v339 = vpop.f32.mrb[0].mxu0
  %v340 = vadd.f32 0.0, %v339
  %v341 = vpop.f32.mrb[0].mxu0
  %342 = vmatprep.mubr.f32.mxu0 0.0
  %343 = vmatmul.mubr.f32.gmra.mrb[0].mxu0 %v271
  %v344 = vpop.f32.mrb[0].mxu0
  %v345 = vadd.f32 0.0, %v344
  %v346 = vpop.f32.mrb[0].mxu0
  %347 = vdwg.mxu0
  %v348 = vadd.f32 %v254, %v340
  %v349 = vadd.f32 %v259, %v345
  %v350 = vld [vmem:[%s6] sm:$0x1]
  %v352 = vlaneseq
  %v353 = vshrl.u32 %v352, 7
  %v354 = vsub.s32 0, %v353
  %v355 = vrot.slane %v350, %v354
  %v357 = vmul.f32 %v348, %v355
  %v358 = vmul.f32 %v349, %v355
  %v359 = vld [vmem:[%s7] sm:$0x1]
  %v361 = vlaneseq
  %v362 = vshrl.u32 %v361, 7
  %v363 = vsub.s32 0, %v362
  %v364 = vrot.slane %v359, %v363
  %v366 = vadd.f32 %v357, %v364
  %v367 = vadd.f32 %v358, %v364
  %v368 = vmax.f32 %v366, 0.0
  %v369 = vmax.f32 %v367, 0.0
  %v370 = vrot.slane %v368, 7
  %v371 = vrot.slane %v369, 7
  %v372 = vsel %vm70, %v370, %v371
  %v373 = vsel %vm70, %v371, %v370
  %v374 = vsel %vm75, 0.0, %v373
  %v375 = vsel %vm76, 0.0, %v372
  %v376 = vrot.slane %v368, 1
  %v377 = vrot.slane %v369, 1
  %v378 = vsel %vm81, %v376, %v377
  %v379 = vsel %vm81, %v377, %v376
  %v380 = vsel %vm86, 0.0, %v378
  %v381 = vsel %vm87, 0.0, %v379
  %v382 = vld [vmem:[%s3] sm:$0xff]
  %v383 = vld [vmem:[%s3 + $0x8] sm:$0xff]
  %v384 = vld [vmem:[%s3 + $0x10] sm:$0xff]
  %v385 = vld [vmem:[%s3 + $0x18] sm:$0xff]
  %s386 = scalar_lea.vmem %s3, 32
  %v387 = vld [vmem:[%s386] sm:$0xff]
  %v388 = vld [vmem:[%s386 + $0x8] sm:$0xff]
  %v389 = vld [vmem:[%s386 + $0x10] sm:$0xff]
  %v390 = vld [vmem:[%s386 + $0x18] sm:$0xff]
  %v392 = vsel %vm99, %v368, 0
  %v395 = vsel %vm99, %v369, 0
  %397 = vmatprep.subr.mxu0 0.0
  %398 = vmatpush1.msra.mxu0 %v387
  %399 = vmatprep.subr.mxu0 0.0
  %400 = vmatpush1.msra.mxu0 %v388
  %401 = vmatprep.subr.mxu0 0.0
  %402 = vmatpush1.msra.mxu0 %v389
  %403 = vmatprep.subr.mxu0 0.0
  %404 = vmatpush1.msra.mxu0 %v390
  %405 = vmatprep.subr.mxu0 0.0
  %406 = vmatpush1.msra.mxu0 0.0
  %407 = vmatprep.subr.mxu0 0.0
  %408 = vmatpush1.msra.mxu0 0.0
  %409 = vmatprep.subr.mxu0 0.0
  %410 = vmatpush1.msra.mxu0 0.0
  %411 = vmatprep.subr.mxu0 0.0
  %412 = vmatpush1.msra.mxu0 0.0
  %413 = vmatprep.subr.mxu0 0.0
  %414 = vmatpush1.msra.mxu0 0.0
  %415 = vmatprep.subr.mxu0 0.0
  %416 = vmatpush1.msra.mxu0 0.0
  %417 = vmatprep.subr.mxu0 0.0
  %418 = vmatpush1.msra.mxu0 0.0
  %419 = vmatprep.subr.mxu0 0.0
  %420 = vmatpush1.msra.mxu0 0.0
  %421 = vmatprep.subr.mxu0 0.0
  %422 = vmatpush1.msra.mxu0 0.0
  %423 = vmatprep.subr.mxu0 0.0
  %424 = vmatpush1.msra.mxu0 0.0
  %425 = vmatprep.subr.mxu0 0.0
  %426 = vmatpush1.msra.mxu0 0.0
  %427 = vmatprep.subr.mxu0 0.0
  %428 = vmatpush1.msra.mxu0 0.0
  %429 = vmatprep.subr.mxu0 0.0
  %430 = vmatpush1.msra.mxu0 0.0
  %431 = vmatprep.subr.mxu0 0.0
  %432 = vmatpush1.msra.mxu0 0.0
  %433 = vmatprep.subr.mxu0 0.0
  %434 = vmatpush1.msra.mxu0 0.0
  %435 = vmatprep.subr.mxu0 0.0
  %436 = vmatpush1.msra.mxu0 0.0
  %437 = vmatprep.subr.mxu0 0.0
  %438 = vmatpush1.msra.mxu0 0.0
  %439 = vmatprep.subr.mxu0 0.0
  %440 = vmatpush1.msra.mxu0 0.0
  %441 = vmatprep.subr.mxu0 0.0
  %442 = vmatpush1.msra.mxu0 0.0
  %443 = vmatprep.subr.mxu0 0.0
  %444 = vmatpush1.msra.mxu0 0.0
  %445 = vmatprep.subr.mxu0 0.0
  %446 = vmatpush1.msra.mxu0 0.0
  %447 = vmatprep.subr.mxu0 0.0
  %448 = vmatpush1.msra.mxu0 0.0
  %449 = vmatprep.subr.mxu0 0.0
  %450 = vmatpush1.msra.mxu0 0.0
  %451 = vmatprep.subr.mxu0 0.0
  %452 = vmatpush1.msra.mxu0 0.0
  %453 = vmatprep.subr.mxu0 0.0
  %454 = vmatpush1.msra.mxu0 0.0
  %455 = vmatprep.subr.mxu0 0.0
  %456 = vmatpush1.msra.mxu0 0.0
  %457 = vmatprep.subr.mxu0 0.0
  %458 = vmatpush1.msra.mxu0 0.0
  %459 = vmatprep.subr.mxu0 0.0
  %460 = vmatpush1.msra.mxu0 0.0
  %461 = vmatprep.mubr.f32.mxu0 0.0
  %462 = vmatmul.mubr.f32.gmra.mrb[0].mxu0 %v392
  %v463 = vpop.f32.mrb[0].mxu0
  %v464 = vadd.f32 0.0, %v463
  %v465 = vpop.f32.mrb[0].mxu0
  %466 = vmatprep.mubr.f32.mxu0 0.0
  %467 = vmatmul.mubr.f32.gmra.mrb[0].mxu0 %v395
  %v468 = vpop.f32.mrb[0].mxu0
  %v469 = vadd.f32 0.0, %v468
  %v470 = vpop.f32.mrb[0].mxu0
  %471 = vdwg.mxu0
  %v473 = vsel %vm99, %v374, 0
  %v476 = vsel %vm99, %v375, 0
  %478 = vmatprep.subr.mxu0 0.0
  %479 = vmatpush1.msra.mxu0 %v382
  %480 = vmatprep.subr.mxu0 0.0
  %481 = vmatpush1.msra.mxu0 %v383
  %482 = vmatprep.subr.mxu0 0.0
  %483 = vmatpush1.msra.mxu0 %v384
  %484 = vmatprep.subr.mxu0 0.0
  %485 = vmatpush1.msra.mxu0 %v385
  %486 = vmatprep.subr.mxu0 0.0
  %487 = vmatpush1.msra.mxu0 0.0
  %488 = vmatprep.subr.mxu0 0.0
  %489 = vmatpush1.msra.mxu0 0.0
  %490 = vmatprep.subr.mxu0 0.0
  %491 = vmatpush1.msra.mxu0 0.0
  %492 = vmatprep.subr.mxu0 0.0
  %493 = vmatpush1.msra.mxu0 0.0
  %494 = vmatprep.subr.mxu0 0.0
  %495 = vmatpush1.msra.mxu0 0.0
  %496 = vmatprep.subr.mxu0 0.0
  %497 = vmatpush1.msra.mxu0 0.0
  %498 = vmatprep.subr.mxu0 0.0
  %499 = vmatpush1.msra.mxu0 0.0
  %500 = vmatprep.subr.mxu0 0.0
  %501 = vmatpush1.msra.mxu0 0.0
  %502 = vmatprep.subr.mxu0 0.0
  %503 = vmatpush1.msra.mxu0 0.0
  %504 = vmatprep.subr.mxu0 0.0
  %505 = vmatpush1.msra.mxu0 0.0
  %506 = vmatprep.subr.mxu0 0.0
  %507 = vmatpush1.msra.mxu0 0.0
  %508 = vmatprep.subr.mxu0 0.0
  %509 = vmatpush1.msra.mxu0 0.0
  %510 = vmatprep.subr.mxu0 0.0
  %511 = vmatpush1.msra.mxu0 0.0
  %512 = vmatprep.subr.mxu0 0.0
  %513 = vmatpush1.msra.mxu0 0.0
  %514 = vmatprep.subr.mxu0 0.0
  %515 = vmatpush1.msra.mxu0 0.0
  %516 = vmatprep.subr.mxu0 0.0
  %517 = vmatpush1.msra.mxu0 0.0
  %518 = vmatprep.subr.mxu0 0.0
  %519 = vmatpush1.msra.mxu0 0.0
  %520 = vmatprep.subr.mxu0 0.0
  %521 = vmatpush1.msra.mxu0 0.0
  %522 = vmatprep.subr.mxu0 0.0
  %523 = vmatpush1.msra.mxu0 0.0
  %524 = vmatprep.subr.mxu0 0.0
  %525 = vmatpush1.msra.mxu0 0.0
  %526 = vmatprep.subr.mxu0 0.0
  %527 = vmatpush1.msra.mxu0 0.0
  %528 = vmatprep.subr.mxu0 0.0
  %529 = vmatpush1.msra.mxu0 0.0
  %530 = vmatprep.subr.mxu0 0.0
  %531 = vmatpush1.msra.mxu0 0.0
  %532 = vmatprep.subr.mxu0 0.0
  %533 = vmatpush1.msra.mxu0 0.0
  %534 = vmatprep.subr.mxu0 0.0
  %535 = vmatpush1.msra.mxu0 0.0
  %536 = vmatprep.subr.mxu0 0.0
  %537 = vmatpush1.msra.mxu0 0.0
  %538 = vmatprep.subr.mxu0 0.0
  %539 = vmatpush1.msra.mxu0 0.0
  %540 = vmatprep.subr.mxu0 0.0
  %541 = vmatpush1.msra.mxu0 0.0
  %542 = vmatprep.mubr.f32.mxu0 0.0
  %543 = vmatmul.mubr.f32.gmra.mrb[0].mxu0 %v473
  %v544 = vpop.f32.mrb[0].mxu0
  %v545 = vadd.f32 %v464, %v544
  %v546 = vpop.f32.mrb[0].mxu0
  %547 = vmatprep.mubr.f32.mxu0 0.0
  %548 = vmatmul.mubr.f32.gmra.mrb[0].mxu0 %v476
  %v549 = vpop.f32.mrb[0].mxu0
  %v550 = vadd.f32 %v469, %v549
  %v551 = vpop.f32.mrb[0].mxu0
  %552 = vdwg.mxu0
  %s553 = scalar_lea.vmem %s3, 64
  %v554 = vld [vmem:[%s553] sm:$0xff]
  %v555 = vld [vmem:[%s553 + $0x8] sm:$0xff]
  %v556 = vld [vmem:[%s553 + $0x10] sm:$0xff]
  %v557 = vld [vmem:[%s553 + $0x18] sm:$0xff]
  %v559 = vsel %vm99, %v380, 0
  %v562 = vsel %vm99, %v381, 0
  %564 = vmatprep.subr.mxu0 0.0
  %565 = vmatpush1.msra.mxu0 %v554
  %566 = vmatprep.subr.mxu0 0.0
  %567 = vmatpush1.msra.mxu0 %v555
  %568 = vmatprep.subr.mxu0 0.0
  %569 = vmatpush1.msra.mxu0 %v556
  %570 = vmatprep.subr.mxu0 0.0
  %571 = vmatpush1.msra.mxu0 %v557
  %572 = vmatprep.subr.mxu0 0.0
  %573 = vmatpush1.msra.mxu0 0.0
  %574 = vmatprep.subr.mxu0 0.0
  %575 = vmatpush1.msra.mxu0 0.0
  %576 = vmatprep.subr.mxu0 0.0
  %577 = vmatpush1.msra.mxu0 0.0
  %578 = vmatprep.subr.mxu0 0.0
  %579 = vmatpush1.msra.mxu0 0.0
  %580 = vmatprep.subr.mxu0 0.0
  %581 = vmatpush1.msra.mxu0 0.0
  %582 = vmatprep.subr.mxu0 0.0
  %583 = vmatpush1.msra.mxu0 0.0
  %584 = vmatprep.subr.mxu0 0.0
  %585 = vmatpush1.msra.mxu0 0.0
  %586 = vmatprep.subr.mxu0 0.0
  %587 = vmatpush1.msra.mxu0 0.0
  %588 = vmatprep.subr.mxu0 0.0
  %589 = vmatpush1.msra.mxu0 0.0
  %590 = vmatprep.subr.mxu0 0.0
  %591 = vmatpush1.msra.mxu0 0.0
  %592 = vmatprep.subr.mxu0 0.0
  %593 = vmatpush1.msra.mxu0 0.0
  %594 = vmatprep.subr.mxu0 0.0
  %595 = vmatpush1.msra.mxu0 0.0
  %596 = vmatprep.subr.mxu0 0.0
  %597 = vmatpush1.msra.mxu0 0.0
  %598 = vmatprep.subr.mxu0 0.0
  %599 = vmatpush1.msra.mxu0 0.0
  %600 = vmatprep.subr.mxu0 0.0
  %601 = vmatpush1.msra.mxu0 0.0
  %602 = vmatprep.subr.mxu0 0.0
  %603 = vmatpush1.msra.mxu0 0.0
  %604 = vmatprep.subr.mxu0 0.0
  %605 = vmatpush1.msra.mxu0 0.0
  %606 = vmatprep.subr.mxu0 0.0
  %607 = vmatpush1.msra.mxu0 0.0
  %608 = vmatprep.subr.mxu0 0.0
  %609 = vmatpush1.msra.mxu0 0.0
  %610 = vmatprep.subr.mxu0 0.0
  %611 = vmatpush1.msra.mxu0 0.0
  %612 = vmatprep.subr.mxu0 0.0
  %613 = vmatpush1.msra.mxu0 0.0
  %614 = vmatprep.subr.mxu0 0.0
  %615 = vmatpush1.msra.mxu0 0.0
  %616 = vmatprep.subr.mxu0 0.0
  %617 = vmatpush1.msra.mxu0 0.0
  %618 = vmatprep.subr.mxu0 0.0
  %619 = vmatpush1.msra.mxu0 0.0
  %620 = vmatprep.subr.mxu0 0.0
  %621 = vmatpush1.msra.mxu0 0.0
  %622 = vmatprep.subr.mxu0 0.0
  %623 = vmatpush1.msra.mxu0 0.0
  %624 = vmatprep.subr.mxu0 0.0
  %625 = vmatpush1.msra.mxu0 0.0
  %626 = vmatprep.subr.mxu0 0.0
  %627 = vmatpush1.msra.mxu0 0.0
  %628 = vmatprep.mubr.f32.mxu0 0.0
  %629 = vmatmul.mubr.f32.gmra.mrb[0].mxu0 %v559
  %v630 = vpop.f32.mrb[0].mxu0
  %v631 = vadd.f32 0.0, %v630
  %v632 = vpop.f32.mrb[0].mxu0
  %633 = vmatprep.mubr.f32.mxu0 0.0
  %634 = vmatmul.mubr.f32.gmra.mrb[0].mxu0 %v562
  %v635 = vpop.f32.mrb[0].mxu0
  %v636 = vadd.f32 0.0, %v635
  %v637 = vpop.f32.mrb[0].mxu0
  %638 = vdwg.mxu0
  %v639 = vadd.f32 %v545, %v631
  %v640 = vadd.f32 %v550, %v636
  %v641 = vld [vmem:[%s8] sm:$0x1]
  %v643 = vlaneseq
  %v644 = vshrl.u32 %v643, 7
  %v645 = vsub.s32 0, %v644
  %v646 = vrot.slane %v641, %v645
  %v648 = vmul.f32 %v639, %v646
  %v649 = vmul.f32 %v640, %v646
  %v650 = vld [vmem:[%s9] sm:$0x1]
  %v652 = vlaneseq
  %v653 = vshrl.u32 %v652, 7
  %v654 = vsub.s32 0, %v653
  %v655 = vrot.slane %v650, %v654
  %v657 = vadd.f32 %v648, %v655
  %v658 = vadd.f32 %v649, %v655
  %v659 = vld [vmem:[%s1] sm:$0xff]
  %v660 = vld [vmem:[%s1 + $0x8] sm:$0xff]
  %v661 = vld [vmem:[%s1 + $0x10] sm:$0xff]
  %v662 = vld [vmem:[%s1 + $0x18] sm:$0xff]
  %663 = vmatprep.subr.mxu0 0.0
  %664 = vmatpush1.msra.mxu0 %v659
  %665 = vmatprep.subr.mxu0 0.0
  %666 = vmatpush1.msra.mxu0 %v660
  %667 = vmatprep.subr.mxu0 0.0
  %668 = vmatpush1.msra.mxu0 %v661
  %669 = vmatprep.subr.mxu0 0.0
  %670 = vmatpush1.msra.mxu0 %v662
  %671 = vmatprep.subr.mxu0 0.0
  %672 = vmatpush1.msra.mxu0 0.0
  %673 = vmatprep.subr.mxu0 0.0
  %674 = vmatpush1.msra.mxu0 0.0
  %675 = vmatprep.subr.mxu0 0.0
  %676 = vmatpush1.msra.mxu0 0.0
  %677 = vmatprep.subr.mxu0 0.0
  %678 = vmatpush1.msra.mxu0 0.0
  %679 = vmatprep.subr.mxu0 0.0
  %680 = vmatpush1.msra.mxu0 0.0
  %681 = vmatprep.subr.mxu0 0.0
  %682 = vmatpush1.msra.mxu0 0.0
  %683 = vmatprep.subr.mxu0 0.0
  %684 = vmatpush1.msra.mxu0 0.0
  %685 = vmatprep.subr.mxu0 0.0
  %686 = vmatpush1.msra.mxu0 0.0
  %687 = vmatprep.subr.mxu0 0.0
  %688 = vmatpush1.msra.mxu0 0.0
  %689 = vmatprep.subr.mxu0 0.0
  %690 = vmatpush1.msra.mxu0 0.0
  %691 = vmatprep.subr.mxu0 0.0
  %692 = vmatpush1.msra.mxu0 0.0
  %693 = vmatprep.subr.mxu0 0.0
  %694 = vmatpush1.msra.mxu0 0.0
  %695 = vmatprep.subr.mxu0 0.0
  %696 = vmatpush1.msra.mxu0 0.0
  %697 = vmatprep.subr.mxu0 0.0
  %698 = vmatpush1.msra.mxu0 0.0
  %699 = vmatprep.subr.mxu0 0.0
  %700 = vmatpush1.msra.mxu0 0.0
  %701 = vmatprep.subr.mxu0 0.0
  %702 = vmatpush1.msra.mxu0 0.0
  %703 = vmatprep.subr.mxu0 0.0
  %704 = vmatpush1.msra.mxu0 0.0
  %705 = vmatprep.subr.mxu0 0.0
  %706 = vmatpush1.msra.mxu0 0.0
  %707 = vmatprep.subr.mxu0 0.0
  %708 = vmatpush1.msra.mxu0 0.0
  %709 = vmatprep.subr.mxu0 0.0
  %710 = vmatpush1.msra.mxu0 0.0
  %711 = vmatprep.subr.mxu0 0.0
  %712 = vmatpush1.msra.mxu0 0.0
  %713 = vmatprep.subr.mxu0 0.0
  %714 = vmatpush1.msra.mxu0 0.0
  %715 = vmatprep.subr.mxu0 0.0
  %716 = vmatpush1.msra.mxu0 0.0
  %717 = vmatprep.subr.mxu0 0.0
  %718 = vmatpush1.msra.mxu0 0.0
  %719 = vmatprep.subr.mxu0 0.0
  %720 = vmatpush1.msra.mxu0 0.0
  %721 = vmatprep.subr.mxu0 0.0
  %722 = vmatpush1.msra.mxu0 0.0
  %723 = vmatprep.subr.mxu0 0.0
  %724 = vmatpush1.msra.mxu0 0.0
  %725 = vmatprep.subr.mxu0 0.0
  %726 = vmatpush1.msra.mxu0 0.0
  %727 = vmatprep.mubr.f32.mxu0 0.0
  %728 = vmatmul.mubr.f32.gmra.mrb[0].mxu0 %v101
  %v729 = vpop.f32.mrb[0].mxu0
  %v730 = vadd.f32 0.0, %v729
  %v731 = vpop.f32.mrb[0].mxu0
  %732 = vmatprep.mubr.f32.mxu0 0.0
  %733 = vmatmul.mubr.f32.gmra.mrb[0].mxu0 %v104
  %v734 = vpop.f32.mrb[0].mxu0
  %v735 = vadd.f32 0.0, %v734
  %v736 = vpop.f32.mrb[0].mxu0
  %737 = vdwg.mxu0
  %v738 = vld [vmem:[%s4] sm:$0x1]
  %v740 = vlaneseq
  %v741 = vshrl.u32 %v740, 7
  %v742 = vsub.s32 0, %v741
  %v743 = vrot.slane %v738, %v742
  %v745 = vmul.f32 %v730, %v743
  %v746 = vmul.f32 %v735, %v743
  %v747 = vld [vmem:[%s5] sm:$0x1]
  %v749 = vlaneseq
  %v750 = vshrl.u32 %v749, 7
  %v751 = vsub.s32 0, %v750
  %v752 = vrot.slane %v747, %v751
  %v754 = vadd.f32 %v745, %v752
  %v755 = vadd.f32 %v746, %v752
  %v756 = vadd.f32 %v754, %v657
  %v757 = vadd.f32 %v755, %v658
  %758 = vst.msk [vmem:[%s10] sm:$0xff] %vm99, %v756
  %759 = vst.msk [vmem:[%s10 + $0x8] sm:$0xff] %vm99, %v757
  // Predicated region
  $region42: #{_lambda_.10} parent=0 // pred_check
    _
  $region43: #{_lambda_.10} parent=0 // pred_check_branch
    %761 = sbr.rel (0) target = $region45
  $region44: #{_lambda_.10} parent=0 // pred_region
    _
  $region45: #{_lambda_.10} parent=0 // pred_fallthru
    _
  // Predicated region
  $region46: #{_lambda_.10} parent=0 // pred_check
    _
  $region47: #{_lambda_.10} parent=0 // pred_check_branch
    %763 = sbr.rel (0) target = $region49
  $region48: #{_lambda_.10} parent=0 // pred_region
    _
  $region49: #{_lambda_.10} parent=0 // pred_fallthru
    _

// kernel: _lambda_.13
$region0: #{_lambda_.13}
  #allocation0 [shape = 'u32[]', space=smem, size = 0x4, offset = 0x4, fixed_abs, tag = 'smem constant byte address 0x4 - core index']
  #allocation1 [shape = 'u32[144,128]{1,0:T(1,128)}', space=vmem, size = 0x12000, scoped, tag = 'internal scratch']
  %s0 = inlined_call_operand.vmem [shape: f32[16,32], index: 0, kind: input, shape index: {}]
  %s1 = inlined_call_operand.vmem [shape: f32[32,64], index: 1, kind: input, shape index: {}]
  %s2 = inlined_call_operand.vmem [shape: f32[1,64], index: 2, kind: input, shape index: {}]
  %s3 = inlined_call_operand.vmem [shape: f32[32,64], index: 3, kind: input, shape index: {}]
  %s4 = inlined_call_operand.vmem [shape: f32[1,64], index: 4, kind: input, shape index: {}]
  %s5 = inlined_call_operand.vmem [shape: f32[16,64], index: 5, kind: output, shape index: {0}]
  %s6 = inlined_call_operand.vmem [shape: f32[16,64], index: 6, kind: output, shape index: {1}]
  %7 = xla_tuple %s5, %s6
  %s8 = sld [smem:[#allocation0]]
  $region38: #{_lambda_.13} parent=0
    _
  %s10 = ssub.s32 1, %s8
  %s11 = scalar_select 0, %s10, %s8
  // Predicated region
  $region2: #{_lambda_.13} parent=0 // pred_check
    _
  $region3: #{_lambda_.13} parent=0 // pred_check_branch
    %13 = sbr.rel (0) target = $region5
  $region4: #{_lambda_.13} parent=0 // pred_region
    _
  $region5: #{_lambda_.13} parent=0 // pred_fallthru
    _
  // Predicated region
  $region6: #{_lambda_.13} parent=0 // pred_check
    _
  $region7: #{_lambda_.13} parent=0 // pred_check_branch
    %15 = sbr.rel (0) target = $region9
  $region8: #{_lambda_.13} parent=0 // pred_region
    _
  $region9: #{_lambda_.13} parent=0 // pred_fallthru
    _
  // Predicated region
  $region10: #{_lambda_.13} parent=0 // pred_check
    _
  $region11: #{_lambda_.13} parent=0 // pred_check_branch
    %17 = sbr.rel (0) target = $region13
  $region12: #{_lambda_.13} parent=0 // pred_region
    _
  $region13: #{_lambda_.13} parent=0 // pred_fallthru
    _
  // Predicated region
  $region14: #{_lambda_.13} parent=0 // pred_check
    _
  $region15: #{_lambda_.13} parent=0 // pred_check_branch
    %19 = sbr.rel (0) target = $region17
  $region16: #{_lambda_.13} parent=0 // pred_region
    _
  $region17: #{_lambda_.13} parent=0 // pred_fallthru
    _
  // Predicated region
  $region18: #{_lambda_.13} parent=0 // pred_check
    _
  $region19: #{_lambda_.13} parent=0 // pred_check_branch
    %21 = sbr.rel (0) target = $region21
  $region20: #{_lambda_.13} parent=0 // pred_region
    _
  $region21: #{_lambda_.13} parent=0 // pred_fallthru
    _
  %v22 = vld [vmem:[%s0] sm:$0xff]
  %v23 = vld [vmem:[%s0 + $0x8] sm:$0xff]
  %v24 = vld [vmem:[%s1] sm:$0xff]
  %v25 = vld [vmem:[%s1 + $0x8] sm:$0xff]
  %v26 = vld [vmem:[%s1 + $0x10] sm:$0xff]
  %v27 = vld [vmem:[%s1 + $0x18] sm:$0xff]
  %v28 = vld [vmem:[%s2] sm:$0x1]
  %v30 = vlaneseq
  %v31 = vshrl.u32 %v30, 7
  %v32 = vsub.s32 0, %v31
  %v33 = vrot.slane %v28, %v32
  %vm35 = vcmask 261120
  %v37 = vsel %vm35, %v22, 0
  %v40 = vsel %vm35, %v23, 0
  %42 = vmatprep.subr.mxu0 0.0
  %43 = vmatpush1.msra.mxu0 %v24
  %44 = vmatprep.subr.mxu0 0.0
  %45 = vmatpush1.msra.mxu0 %v25
  %46 = vmatprep.subr.mxu0 0.0
  %47 = vmatpush1.msra.mxu0 %v26
  %48 = vmatprep.subr.mxu0 0.0
  %49 = vmatpush1.msra.mxu0 %v27
  %50 = vmatprep.subr.mxu0 0.0
  %51 = vmatpush1.msra.mxu0 0.0
  %52 = vmatprep.subr.mxu0 0.0
  %53 = vmatpush1.msra.mxu0 0.0
  %54 = vmatprep.subr.mxu0 0.0
  %55 = vmatpush1.msra.mxu0 0.0
  %56 = vmatprep.subr.mxu0 0.0
  %57 = vmatpush1.msra.mxu0 0.0
  %58 = vmatprep.subr.mxu0 0.0
  %59 = vmatpush1.msra.mxu0 0.0
  %60 = vmatprep.subr.mxu0 0.0
  %61 = vmatpush1.msra.mxu0 0.0
  %62 = vmatprep.subr.mxu0 0.0
  %63 = vmatpush1.msra.mxu0 0.0
  %64 = vmatprep.subr.mxu0 0.0
  %65 = vmatpush1.msra.mxu0 0.0
  %66 = vmatprep.subr.mxu0 0.0
  %67 = vmatpush1.msra.mxu0 0.0
  %68 = vmatprep.subr.mxu0 0.0
  %69 = vmatpush1.msra.mxu0 0.0
  %70 = vmatprep.subr.mxu0 0.0
  %71 = vmatpush1.msra.mxu0 0.0
  %72 = vmatprep.subr.mxu0 0.0
  %73 = vmatpush1.msra.mxu0 0.0
  %74 = vmatprep.subr.mxu0 0.0
  %75 = vmatpush1.msra.mxu0 0.0
  %76 = vmatprep.subr.mxu0 0.0
  %77 = vmatpush1.msra.mxu0 0.0
  %78 = vmatprep.subr.mxu0 0.0
  %79 = vmatpush1.msra.mxu0 0.0
  %80 = vmatprep.subr.mxu0 0.0
  %81 = vmatpush1.msra.mxu0 0.0
  %82 = vmatprep.subr.mxu0 0.0
  %83 = vmatpush1.msra.mxu0 0.0
  %84 = vmatprep.subr.mxu0 0.0
  %85 = vmatpush1.msra.mxu0 0.0
  %86 = vmatprep.subr.mxu0 0.0
  %87 = vmatpush1.msra.mxu0 0.0
  %88 = vmatprep.subr.mxu0 0.0
  %89 = vmatpush1.msra.mxu0 0.0
  %90 = vmatprep.subr.mxu0 0.0
  %91 = vmatpush1.msra.mxu0 0.0
  %92 = vmatprep.subr.mxu0 0.0
  %93 = vmatpush1.msra.mxu0 0.0
  %94 = vmatprep.subr.mxu0 0.0
  %95 = vmatpush1.msra.mxu0 0.0
  %96 = vmatprep.subr.mxu0 0.0
  %97 = vmatpush1.msra.mxu0 0.0
  %98 = vmatprep.subr.mxu0 0.0
  %99 = vmatpush1.msra.mxu0 0.0
  %100 = vmatprep.subr.mxu0 0.0
  %101 = vmatpush1.msra.mxu0 0.0
  %102 = vmatprep.subr.mxu0 0.0
  %103 = vmatpush1.msra.mxu0 0.0
  %104 = vmatprep.subr.mxu0 0.0
  %105 = vmatpush1.msra.mxu0 0.0
  %106 = vmatprep.mubr.f32.mxu0 0.0
  %107 = vmatmul.mubr.f32.gmra.mrb[0].mxu0 %v37
  %v108 = vpop.f32.mrb[0].mxu0
  %v109 = vadd.f32 %v33, %v108
  %v110 = vpop.f32.mrb[0].mxu0
  %111 = vmatprep.mubr.f32.mxu0 0.0
  %112 = vmatmul.mubr.f32.gmra.mrb[0].mxu0 %v40
  %v113 = vpop.f32.mrb[0].mxu0
  %v114 = vadd.f32 %v33, %v113
  %v115 = vpop.f32.mrb[0].mxu0
  %116 = vdwg.mxu0
  %vm117 = vcmask 523264
  %118 = vst.msk [vmem:[%s5] sm:$0xff] %vm117, %v109
  %119 = vst.msk [vmem:[%s5 + $0x8] sm:$0xff] %vm117, %v114
  %v120 = vld [vmem:[%s3] sm:$0xff]
  %v121 = vld [vmem:[%s3 + $0x8] sm:$0xff]
  %v122 = vld [vmem:[%s3 + $0x10] sm:$0xff]
  %v123 = vld [vmem:[%s3 + $0x18] sm:$0xff]
  %v124 = vld [vmem:[%s4] sm:$0x1]
  %v126 = vlaneseq
  %v127 = vshrl.u32 %v126, 7
  %v128 = vsub.s32 0, %v127
  %v129 = vrot.slane %v124, %v128
  %131 = vmatprep.subr.mxu0 0.0
  %132 = vmatpush1.msra.mxu0 %v120
  %133 = vmatprep.subr.mxu0 0.0
  %134 = vmatpush1.msra.mxu0 %v121
  %135 = vmatprep.subr.mxu0 0.0
  %136 = vmatpush1.msra.mxu0 %v122
  %137 = vmatprep.subr.mxu0 0.0
  %138 = vmatpush1.msra.mxu0 %v123
  %139 = vmatprep.subr.mxu0 0.0
  %140 = vmatpush1.msra.mxu0 0.0
  %141 = vmatprep.subr.mxu0 0.0
  %142 = vmatpush1.msra.mxu0 0.0
  %143 = vmatprep.subr.mxu0 0.0
  %144 = vmatpush1.msra.mxu0 0.0
  %145 = vmatprep.subr.mxu0 0.0
  %146 = vmatpush1.msra.mxu0 0.0
  %147 = vmatprep.subr.mxu0 0.0
  %148 = vmatpush1.msra.mxu0 0.0
  %149 = vmatprep.subr.mxu0 0.0
  %150 = vmatpush1.msra.mxu0 0.0
  %151 = vmatprep.subr.mxu0 0.0
  %152 = vmatpush1.msra.mxu0 0.0
  %153 = vmatprep.subr.mxu0 0.0
  %154 = vmatpush1.msra.mxu0 0.0
  %155 = vmatprep.subr.mxu0 0.0
  %156 = vmatpush1.msra.mxu0 0.0
  %157 = vmatprep.subr.mxu0 0.0
  %158 = vmatpush1.msra.mxu0 0.0
  %159 = vmatprep.subr.mxu0 0.0
  %160 = vmatpush1.msra.mxu0 0.0
  %161 = vmatprep.subr.mxu0 0.0
  %162 = vmatpush1.msra.mxu0 0.0
  %163 = vmatprep.subr.mxu0 0.0
  %164 = vmatpush1.msra.mxu0 0.0
  %165 = vmatprep.subr.mxu0 0.0
  %166 = vmatpush1.msra.mxu0 0.0
  %167 = vmatprep.subr.mxu0 0.0
  %168 = vmatpush1.msra.mxu0 0.0
  %169 = vmatprep.subr.mxu0 0.0
  %170 = vmatpush1.msra.mxu0 0.0
  %171 = vmatprep.subr.mxu0 0.0
  %172 = vmatpush1.msra.mxu0 0.0
  %173 = vmatprep.subr.mxu0 0.0
  %174 = vmatpush1.msra.mxu0 0.0
  %175 = vmatprep.subr.mxu0 0.0
  %176 = vmatpush1.msra.mxu0 0.0
  %177 = vmatprep.subr.mxu0 0.0
  %178 = vmatpush1.msra.mxu0 0.0
  %179 = vmatprep.subr.mxu0 0.0
  %180 = vmatpush1.msra.mxu0 0.0
  %181 = vmatprep.subr.mxu0 0.0
  %182 = vmatpush1.msra.mxu0 0.0
  %183 = vmatprep.subr.mxu0 0.0
  %184 = vmatpush1.msra.mxu0 0.0
  %185 = vmatprep.subr.mxu0 0.0
  %186 = vmatpush1.msra.mxu0 0.0
  %187 = vmatprep.subr.mxu0 0.0
  %188 = vmatpush1.msra.mxu0 0.0
  %189 = vmatprep.subr.mxu0 0.0
  %190 = vmatpush1.msra.mxu0 0.0
  %191 = vmatprep.subr.mxu0 0.0
  %192 = vmatpush1.msra.mxu0 0.0
  %193 = vmatprep.subr.mxu0 0.0
  %194 = vmatpush1.msra.mxu0 0.0
  %195 = vmatprep.mubr.f32.mxu0 0.0
  %196 = vmatmul.mubr.f32.gmra.mrb[0].mxu0 %v37
  %v197 = vpop.f32.mrb[0].mxu0
  %v198 = vadd.f32 %v129, %v197
  %v199 = vpop.f32.mrb[0].mxu0
  %200 = vmatprep.mubr.f32.mxu0 0.0
  %201 = vmatmul.mubr.f32.gmra.mrb[0].mxu0 %v40
  %v202 = vpop.f32.mrb[0].mxu0
  %v203 = vadd.f32 %v129, %v202
  %v204 = vpop.f32.mrb[0].mxu0
  %205 = vdwg.mxu0
  %206 = vst.msk [vmem:[%s6] sm:$0xff] %vm117, %v198
  %207 = vst.msk [vmem:[%s6 + $0x8] sm:$0xff] %vm117, %v203
  // Predicated region
  $region22: #{_lambda_.13} parent=0 // pred_check
    _
  $region23: #{_lambda_.13} parent=0 // pred_check_branch
    %209 = sbr.rel (0) target = $region25
  $region24: #{_lambda_.13} parent=0 // pred_region
    _
  $region25: #{_lambda_.13} parent=0 // pred_fallthru
    _
  // Predicated region
  $region26: #{_lambda_.13} parent=0 // pred_check
    _
  $region27: #{_lambda_.13} parent=0 // pred_check_branch
    %211 = sbr.rel (0) target = $region29
  $region28: #{_lambda_.13} parent=0 // pred_region
    _
  $region29: #{_lambda_.13} parent=0 // pred_fallthru
    _
  // Predicated region
  $region30: #{_lambda_.13} parent=0 // pred_check
    _
  $region31: #{_lambda_.13} parent=0 // pred_check_branch
    %213 = sbr.rel (0) target = $region33
  $region32: #{_lambda_.13} parent=0 // pred_region
    _
  $region33: #{_lambda_.13} parent=0 // pred_fallthru
    _
  // Predicated region
  $region34: #{_lambda_.13} parent=0 // pred_check
    _
  $region35: #{_lambda_.13} parent=0 // pred_check_branch
    %215 = sbr.rel (0) target = $region37
  $region36: #{_lambda_.13} parent=0 // pred_region
    _
  $region37: #{_lambda_.13} parent=0 // pred_fallthru
    _

// kernel: _lambda_.17
$region0: #{_lambda_.17}
  #allocation0 [shape = 'u32[]', space=smem, size = 0x4, offset = 0x4, fixed_abs, tag = 'smem constant byte address 0x4 - core index']
  #allocation1 [shape = 'u32[144,128]{1,0:T(1,128)}', space=vmem, size = 0x12000, scoped, tag = 'internal scratch']
  %s0 = inlined_call_operand.vmem [shape: f32[16,16], index: 0, kind: input, shape index: {}]
  %s1 = inlined_call_operand.vmem [shape: f32[16,16], index: 1, kind: input, shape index: {}]
  %s2 = inlined_call_operand.vmem [shape: f32[16,8], index: 2, kind: input, shape index: {}]
  %s3 = inlined_call_operand.vmem [shape: f32[16,8], index: 3, kind: input, shape index: {}]
  %s4 = inlined_call_operand.vmem [shape: f32[1,8], index: 4, kind: input, shape index: {}]
  %s5 = inlined_call_operand.vmem [shape: f32[16,8], index: 5, kind: output, shape index: {}]
  %s6 = sld [smem:[#allocation0]]
  $region30: #{_lambda_.17} parent=0
    _
  %s8 = ssub.s32 1, %s6
  %s9 = scalar_select 0, %s8, %s6
  // Predicated region
  $region2: #{_lambda_.17} parent=0 // pred_check
    _
  $region3: #{_lambda_.17} parent=0 // pred_check_branch
    %11 = sbr.rel (0) target = $region5
  $region4: #{_lambda_.17} parent=0 // pred_region
    _
  $region5: #{_lambda_.17} parent=0 // pred_fallthru
    _
  // Predicated region
  $region6: #{_lambda_.17} parent=0 // pred_check
    _
  $region7: #{_lambda_.17} parent=0 // pred_check_branch
    %13 = sbr.rel (0) target = $region9
  $region8: #{_lambda_.17} parent=0 // pred_region
    _
  $region9: #{_lambda_.17} parent=0 // pred_fallthru
    _
  // Predicated region
  $region10: #{_lambda_.17} parent=0 // pred_check
    _
  $region11: #{_lambda_.17} parent=0 // pred_check_branch
    %15 = sbr.rel (0) target = $region13
  $region12: #{_lambda_.17} parent=0 // pred_region
    _
  $region13: #{_lambda_.17} parent=0 // pred_fallthru
    _
  // Predicated region
  $region14: #{_lambda_.17} parent=0 // pred_check
    _
  $region15: #{_lambda_.17} parent=0 // pred_check_branch
    %17 = sbr.rel (0) target = $region17
  $region16: #{_lambda_.17} parent=0 // pred_region
    _
  $region17: #{_lambda_.17} parent=0 // pred_fallthru
    _
  // Predicated region
  $region18: #{_lambda_.17} parent=0 // pred_check
    _
  $region19: #{_lambda_.17} parent=0 // pred_check_branch
    %19 = sbr.rel (0) target = $region21
  $region20: #{_lambda_.17} parent=0 // pred_region
    _
  $region21: #{_lambda_.17} parent=0 // pred_fallthru
    _
  %v20 = vld [vmem:[%s0] sm:$0xff]
  %v21 = vld [vmem:[%s0 + $0x8] sm:$0xff]
  %v22 = vld [vmem:[%s2] sm:$0xff]
  %v23 = vld [vmem:[%s2 + $0x8] sm:$0xff]
  %v24 = vld [vmem:[%s1] sm:$0xff]
  %v25 = vld [vmem:[%s1 + $0x8] sm:$0xff]
  %v26 = vld [vmem:[%s3] sm:$0xff]
  %v27 = vld [vmem:[%s3 + $0x8] sm:$0xff]
  %vm28 = vcmask 130048
  %v30 = vsel %vm28, %v24, 0
  %v33 = vsel %vm28, %v25, 0
  %35 = vmatprep.subr.mxu0 0.0
  %36 = vmatpush1.msra.mxu0 %v26
  %37 = vmatprep.subr.mxu0 0.0
  %38 = vmatpush1.msra.mxu0 %v27
  %39 = vmatprep.subr.mxu0 0.0
  %40 = vmatpush1.msra.mxu0 0.0
  %41 = vmatprep.subr.mxu0 0.0
  %42 = vmatpush1.msra.mxu0 0.0
  %43 = vmatprep.subr.mxu0 0.0
  %44 = vmatpush1.msra.mxu0 0.0
  %45 = vmatprep.subr.mxu0 0.0
  %46 = vmatpush1.msra.mxu0 0.0
  %47 = vmatprep.subr.mxu0 0.0
  %48 = vmatpush1.msra.mxu0 0.0
  %49 = vmatprep.subr.mxu0 0.0
  %50 = vmatpush1.msra.mxu0 0.0
  %51 = vmatprep.subr.mxu0 0.0
  %52 = vmatpush1.msra.mxu0 0.0
  %53 = vmatprep.subr.mxu0 0.0
  %54 = vmatpush1.msra.mxu0 0.0
  %55 = vmatprep.subr.mxu0 0.0
  %56 = vmatpush1.msra.mxu0 0.0
  %57 = vmatprep.subr.mxu0 0.0
  %58 = vmatpush1.msra.mxu0 0.0
  %59 = vmatprep.subr.mxu0 0.0
  %60 = vmatpush1.msra.mxu0 0.0
  %61 = vmatprep.subr.mxu0 0.0
  %62 = vmatpush1.msra.mxu0 0.0
  %63 = vmatprep.subr.mxu0 0.0
  %64 = vmatpush1.msra.mxu0 0.0
  %65 = vmatprep.subr.mxu0 0.0
  %66 = vmatpush1.msra.mxu0 0.0
  %67 = vmatprep.subr.mxu0 0.0
  %68 = vmatpush1.msra.mxu0 0.0
  %69 = vmatprep.subr.mxu0 0.0
  %70 = vmatpush1.msra.mxu0 0.0
  %71 = vmatprep.subr.mxu0 0.0
  %72 = vmatpush1.msra.mxu0 0.0
  %73 = vmatprep.subr.mxu0 0.0
  %74 = vmatpush1.msra.mxu0 0.0
  %75 = vmatprep.subr.mxu0 0.0
  %76 = vmatpush1.msra.mxu0 0.0
  %77 = vmatprep.subr.mxu0 0.0
  %78 = vmatpush1.msra.mxu0 0.0
  %79 = vmatprep.subr.mxu0 0.0
  %80 = vmatpush1.msra.mxu0 0.0
  %81 = vmatprep.subr.mxu0 0.0
  %82 = vmatpush1.msra.mxu0 0.0
  %83 = vmatprep.subr.mxu0 0.0
  %84 = vmatpush1.msra.mxu0 0.0
  %85 = vmatprep.subr.mxu0 0.0
  %86 = vmatpush1.msra.mxu0 0.0
  %87 = vmatprep.subr.mxu0 0.0
  %88 = vmatpush1.msra.mxu0 0.0
  %89 = vmatprep.subr.mxu0 0.0
  %90 = vmatpush1.msra.mxu0 0.0
  %91 = vmatprep.subr.mxu0 0.0
  %92 = vmatpush1.msra.mxu0 0.0
  %93 = vmatprep.subr.mxu0 0.0
  %94 = vmatpush1.msra.mxu0 0.0
  %95 = vmatprep.subr.mxu0 0.0
  %96 = vmatpush1.msra.mxu0 0.0
  %97 = vmatprep.subr.mxu0 0.0
  %98 = vmatpush1.msra.mxu0 0.0
  %99 = vmatprep.mubr.f32.mxu0 0.0
  %100 = vmatmul.mubr.f32.gmra.mrb[0].mxu0 %v30
  %v101 = vpop.f32.mrb[0].mxu0
  %v102 = vadd.f32 0.0, %v101
  %v103 = vpop.f32.mrb[0].mxu0
  %104 = vmatprep.mubr.f32.mxu0 0.0
  %105 = vmatmul.mubr.f32.gmra.mrb[0].mxu0 %v33
  %v106 = vpop.f32.mrb[0].mxu0
  %v107 = vadd.f32 0.0, %v106
  %v108 = vpop.f32.mrb[0].mxu0
  %109 = vdwg.mxu0
  %v111 = vsel %vm28, %v20, 0
  %v114 = vsel %vm28, %v21, 0
  %116 = vmatprep.subr.mxu0 0.0
  %117 = vmatpush1.msra.mxu0 %v22
  %118 = vmatprep.subr.mxu0 0.0
  %119 = vmatpush1.msra.mxu0 %v23
  %120 = vmatprep.subr.mxu0 0.0
  %121 = vmatpush1.msra.mxu0 0.0
  %122 = vmatprep.subr.mxu0 0.0
  %123 = vmatpush1.msra.mxu0 0.0
  %124 = vmatprep.subr.mxu0 0.0
  %125 = vmatpush1.msra.mxu0 0.0
  %126 = vmatprep.subr.mxu0 0.0
  %127 = vmatpush1.msra.mxu0 0.0
  %128 = vmatprep.subr.mxu0 0.0
  %129 = vmatpush1.msra.mxu0 0.0
  %130 = vmatprep.subr.mxu0 0.0
  %131 = vmatpush1.msra.mxu0 0.0
  %132 = vmatprep.subr.mxu0 0.0
  %133 = vmatpush1.msra.mxu0 0.0
  %134 = vmatprep.subr.mxu0 0.0
  %135 = vmatpush1.msra.mxu0 0.0
  %136 = vmatprep.subr.mxu0 0.0
  %137 = vmatpush1.msra.mxu0 0.0
  %138 = vmatprep.subr.mxu0 0.0
  %139 = vmatpush1.msra.mxu0 0.0
  %140 = vmatprep.subr.mxu0 0.0
  %141 = vmatpush1.msra.mxu0 0.0
  %142 = vmatprep.subr.mxu0 0.0
  %143 = vmatpush1.msra.mxu0 0.0
  %144 = vmatprep.subr.mxu0 0.0
  %145 = vmatpush1.msra.mxu0 0.0
  %146 = vmatprep.subr.mxu0 0.0
  %147 = vmatpush1.msra.mxu0 0.0
  %148 = vmatprep.subr.mxu0 0.0
  %149 = vmatpush1.msra.mxu0 0.0
  %150 = vmatprep.subr.mxu0 0.0
  %151 = vmatpush1.msra.mxu0 0.0
  %152 = vmatprep.subr.mxu0 0.0
  %153 = vmatpush1.msra.mxu0 0.0
  %154 = vmatprep.subr.mxu0 0.0
  %155 = vmatpush1.msra.mxu0 0.0
  %156 = vmatprep.subr.mxu0 0.0
  %157 = vmatpush1.msra.mxu0 0.0
  %158 = vmatprep.subr.mxu0 0.0
  %159 = vmatpush1.msra.mxu0 0.0
  %160 = vmatprep.subr.mxu0 0.0
  %161 = vmatpush1.msra.mxu0 0.0
  %162 = vmatprep.subr.mxu0 0.0
  %163 = vmatpush1.msra.mxu0 0.0
  %164 = vmatprep.subr.mxu0 0.0
  %165 = vmatpush1.msra.mxu0 0.0
  %166 = vmatprep.subr.mxu0 0.0
  %167 = vmatpush1.msra.mxu0 0.0
  %168 = vmatprep.subr.mxu0 0.0
  %169 = vmatpush1.msra.mxu0 0.0
  %170 = vmatprep.subr.mxu0 0.0
  %171 = vmatpush1.msra.mxu0 0.0
  %172 = vmatprep.subr.mxu0 0.0
  %173 = vmatpush1.msra.mxu0 0.0
  %174 = vmatprep.subr.mxu0 0.0
  %175 = vmatpush1.msra.mxu0 0.0
  %176 = vmatprep.subr.mxu0 0.0
  %177 = vmatpush1.msra.mxu0 0.0
  %178 = vmatprep.subr.mxu0 0.0
  %179 = vmatpush1.msra.mxu0 0.0
  %180 = vmatprep.mubr.f32.mxu0 0.0
  %181 = vmatmul.mubr.f32.gmra.mrb[0].mxu0 %v111
  %v182 = vpop.f32.mrb[0].mxu0
  %v183 = vadd.f32 %v102, %v182
  %v184 = vpop.f32.mrb[0].mxu0
  %185 = vmatprep.mubr.f32.mxu0 0.0
  %186 = vmatmul.mubr.f32.gmra.mrb[0].mxu0 %v114
  %v187 = vpop.f32.mrb[0].mxu0
  %v188 = vadd.f32 %v107, %v187
  %v189 = vpop.f32.mrb[0].mxu0
  %190 = vdwg.mxu0
  %v191 = vld [vmem:[%s4] sm:$0x1]
  %v193 = vlaneseq
  %v194 = vshrl.u32 %v193, 7
  %v195 = vsub.s32 0, %v194
  %v196 = vrot.slane %v191, %v195
  %v198 = vadd.f32 %v183, %v196
  %v199 = vadd.f32 %v188, %v196
  %vm200 = vcmask 64512
  %201 = vst.msk [vmem:[%s5] sm:$0xff] %vm200, %v198
  %202 = vst.msk [vmem:[%s5 + $0x8] sm:$0xff] %vm200, %v199
  // Predicated region
  $region22: #{_lambda_.17} parent=0 // pred_check
    _
  $region23: #{_lambda_.17} parent=0 // pred_check_branch
    %204 = sbr.rel (0) target = $region25
  $region24: #{_lambda_.17} parent=0 // pred_region
    _
  $region25: #{_lambda_.17} parent=0 // pred_fallthru
    _
  // Predicated region
  $region26: #{_lambda_.17} parent=0 // pred_check
    _
  $region27: #{_lambda_.17} parent=0 // pred_check_branch
    %206 = sbr.rel (0) target = $region29
  $region28: #{_lambda_.17} parent=0 // pred_region
    _
  $region29: #{_lambda_.17} parent=0 // pred_fallthru
    _

// kernel: _lambda_.15
$region0: #{_lambda_.15}
  #allocation0 [shape = 'u32[]', space=smem, size = 0x4, offset = 0x4, fixed_abs, tag = 'smem constant byte address 0x4 - core index']
  #allocation1 [shape = 'u32[144,128]{1,0:T(1,128)}', space=vmem, size = 0x12000, scoped, tag = 'internal scratch']
  %s0 = inlined_call_operand.vmem [shape: f32[16,16], index: 0, kind: input, shape index: {}]
  %s1 = inlined_call_operand.vmem [shape: f32[16,16], index: 1, kind: input, shape index: {}]
  %s2 = inlined_call_operand.vmem [shape: f32[16,64], index: 2, kind: input, shape index: {}]
  %s3 = inlined_call_operand.vmem [shape: f32[16,64], index: 3, kind: input, shape index: {}]
  %s4 = inlined_call_operand.vmem [shape: f32[1,64], index: 4, kind: input, shape index: {}]
  %s5 = inlined_call_operand.vmem [shape: f32[16,64], index: 5, kind: input, shape index: {}]
  %s6 = inlined_call_operand.vmem [shape: f32[16,64], index: 6, kind: input, shape index: {}]
  %s7 = inlined_call_operand.vmem [shape: f32[1,64], index: 7, kind: input, shape index: {}]
  %s8 = inlined_call_operand.vmem [shape: f32[16,64], index: 8, kind: output, shape index: {0}]
  %s9 = inlined_call_operand.vmem [shape: f32[16,64], index: 9, kind: output, shape index: {1}]
  %10 = xla_tuple %s8, %s9
  %s11 = sld [smem:[#allocation0]]
  $region50: #{_lambda_.15} parent=0
    _
  %s13 = ssub.s32 1, %s11
  %s14 = scalar_select 0, %s13, %s11
  // Predicated region
  $region2: #{_lambda_.15} parent=0 // pred_check
    _
  $region3: #{_lambda_.15} parent=0 // pred_check_branch
    %16 = sbr.rel (0) target = $region5
  $region4: #{_lambda_.15} parent=0 // pred_region
    _
  $region5: #{_lambda_.15} parent=0 // pred_fallthru
    _
  // Predicated region
  $region6: #{_lambda_.15} parent=0 // pred_check
    _
  $region7: #{_lambda_.15} parent=0 // pred_check_branch
    %18 = sbr.rel (0) target = $region9
  $region8: #{_lambda_.15} parent=0 // pred_region
    _
  $region9: #{_lambda_.15} parent=0 // pred_fallthru
    _
  // Predicated region
  $region10: #{_lambda_.15} parent=0 // pred_check
    _
  $region11: #{_lambda_.15} parent=0 // pred_check_branch
    %20 = sbr.rel (0) target = $region13
  $region12: #{_lambda_.15} parent=0 // pred_region
    _
  $region13: #{_lambda_.15} parent=0 // pred_fallthru
    _
  // Predicated region
  $region14: #{_lambda_.15} parent=0 // pred_check
    _
  $region15: #{_lambda_.15} parent=0 // pred_check_branch
    %22 = sbr.rel (0) target = $region17
  $region16: #{_lambda_.15} parent=0 // pred_region
    _
  $region17: #{_lambda_.15} parent=0 // pred_fallthru
    _
  // Predicated region
  $region18: #{_lambda_.15} parent=0 // pred_check
    _
  $region19: #{_lambda_.15} parent=0 // pred_check_branch
    %24 = sbr.rel (0) target = $region21
  $region20: #{_lambda_.15} parent=0 // pred_region
    _
  $region21: #{_lambda_.15} parent=0 // pred_fallthru
    _
  // Predicated region
  $region22: #{_lambda_.15} parent=0 // pred_check
    _
  $region23: #{_lambda_.15} parent=0 // pred_check_branch
    %26 = sbr.rel (0) target = $region25
  $region24: #{_lambda_.15} parent=0 // pred_region
    _
  $region25: #{_lambda_.15} parent=0 // pred_fallthru
    _
  // Predicated region
  $region26: #{_lambda_.15} parent=0 // pred_check
    _
  $region27: #{_lambda_.15} parent=0 // pred_check_branch
    %28 = sbr.rel (0) target = $region29
  $region28: #{_lambda_.15} parent=0 // pred_region
    _
  $region29: #{_lambda_.15} parent=0 // pred_fallthru
    _
  // Predicated region
  $region30: #{_lambda_.15} parent=0 // pred_check
    _
  $region31: #{_lambda_.15} parent=0 // pred_check_branch
    %30 = sbr.rel (0) target = $region33
  $region32: #{_lambda_.15} parent=0 // pred_region
    _
  $region33: #{_lambda_.15} parent=0 // pred_fallthru
    _
  %v31 = vld [vmem:[%s0] sm:$0xff]
  %v32 = vld [vmem:[%s0 + $0x8] sm:$0xff]
  %v33 = vld [vmem:[%s1] sm:$0xff]
  %v34 = vld [vmem:[%s1 + $0x8] sm:$0xff]
  %v35 = vld [vmem:[%s2] sm:$0xff]
  %v36 = vld [vmem:[%s2 + $0x8] sm:$0xff]
  %v37 = vld [vmem:[%s3] sm:$0xff]
  %v38 = vld [vmem:[%s3 + $0x8] sm:$0xff]
  %vm39 = vcmask 130048
  %v41 = vsel %vm39, %v33, 0
  %v44 = vsel %vm39, %v34, 0
  %46 = vmatprep.subr.mxu0 0.0
  %47 = vmatpush1.msra.mxu0 %v37
  %48 = vmatprep.subr.mxu0 0.0
  %49 = vmatpush1.msra.mxu0 %v38
  %50 = vmatprep.subr.mxu0 0.0
  %51 = vmatpush1.msra.mxu0 0.0
  %52 = vmatprep.subr.mxu0 0.0
  %53 = vmatpush1.msra.mxu0 0.0
  %54 = vmatprep.subr.mxu0 0.0
  %55 = vmatpush1.msra.mxu0 0.0
  %56 = vmatprep.subr.mxu0 0.0
  %57 = vmatpush1.msra.mxu0 0.0
  %58 = vmatprep.subr.mxu0 0.0
  %59 = vmatpush1.msra.mxu0 0.0
  %60 = vmatprep.subr.mxu0 0.0
  %61 = vmatpush1.msra.mxu0 0.0
  %62 = vmatprep.subr.mxu0 0.0
  %63 = vmatpush1.msra.mxu0 0.0
  %64 = vmatprep.subr.mxu0 0.0
  %65 = vmatpush1.msra.mxu0 0.0
  %66 = vmatprep.subr.mxu0 0.0
  %67 = vmatpush1.msra.mxu0 0.0
  %68 = vmatprep.subr.mxu0 0.0
  %69 = vmatpush1.msra.mxu0 0.0
  %70 = vmatprep.subr.mxu0 0.0
  %71 = vmatpush1.msra.mxu0 0.0
  %72 = vmatprep.subr.mxu0 0.0
  %73 = vmatpush1.msra.mxu0 0.0
  %74 = vmatprep.subr.mxu0 0.0
  %75 = vmatpush1.msra.mxu0 0.0
  %76 = vmatprep.subr.mxu0 0.0
  %77 = vmatpush1.msra.mxu0 0.0
  %78 = vmatprep.subr.mxu0 0.0
  %79 = vmatpush1.msra.mxu0 0.0
  %80 = vmatprep.subr.mxu0 0.0
  %81 = vmatpush1.msra.mxu0 0.0
  %82 = vmatprep.subr.mxu0 0.0
  %83 = vmatpush1.msra.mxu0 0.0
  %84 = vmatprep.subr.mxu0 0.0
  %85 = vmatpush1.msra.mxu0 0.0
  %86 = vmatprep.subr.mxu0 0.0
  %87 = vmatpush1.msra.mxu0 0.0
  %88 = vmatprep.subr.mxu0 0.0
  %89 = vmatpush1.msra.mxu0 0.0
  %90 = vmatprep.subr.mxu0 0.0
  %91 = vmatpush1.msra.mxu0 0.0
  %92 = vmatprep.subr.mxu0 0.0
  %93 = vmatpush1.msra.mxu0 0.0
  %94 = vmatprep.subr.mxu0 0.0
  %95 = vmatpush1.msra.mxu0 0.0
  %96 = vmatprep.subr.mxu0 0.0
  %97 = vmatpush1.msra.mxu0 0.0
  %98 = vmatprep.subr.mxu0 0.0
  %99 = vmatpush1.msra.mxu0 0.0
  %100 = vmatprep.subr.mxu0 0.0
  %101 = vmatpush1.msra.mxu0 0.0
  %102 = vmatprep.subr.mxu0 0.0
  %103 = vmatpush1.msra.mxu0 0.0
  %104 = vmatprep.subr.mxu0 0.0
  %105 = vmatpush1.msra.mxu0 0.0
  %106 = vmatprep.subr.mxu0 0.0
  %107 = vmatpush1.msra.mxu0 0.0
  %108 = vmatprep.subr.mxu0 0.0
  %109 = vmatpush1.msra.mxu0 0.0
  %110 = vmatprep.mubr.f32.mxu0 0.0
  %111 = vmatmul.mubr.f32.gmra.mrb[0].mxu0 %v41
  %v112 = vpop.f32.mrb[0].mxu0
  %v113 = vadd.f32 0.0, %v112
  %v114 = vpop.f32.mrb[0].mxu0
  %115 = vmatprep.mubr.f32.mxu0 0.0
  %116 = vmatmul.mubr.f32.gmra.mrb[0].mxu0 %v44
  %v117 = vpop.f32.mrb[0].mxu0
  %v118 = vadd.f32 0.0, %v117
  %v119 = vpop.f32.mrb[0].mxu0
  %120 = vdwg.mxu0
  %v122 = vsel %vm39, %v31, 0
  %v125 = vsel %vm39, %v32, 0
  %127 = vmatprep.subr.mxu0 0.0
  %128 = vmatpush1.msra.mxu0 %v35
  %129 = vmatprep.subr.mxu0 0.0
  %130 = vmatpush1.msra.mxu0 %v36
  %131 = vmatprep.subr.mxu0 0.0
  %132 = vmatpush1.msra.mxu0 0.0
  %133 = vmatprep.subr.mxu0 0.0
  %134 = vmatpush1.msra.mxu0 0.0
  %135 = vmatprep.subr.mxu0 0.0
  %136 = vmatpush1.msra.mxu0 0.0
  %137 = vmatprep.subr.mxu0 0.0
  %138 = vmatpush1.msra.mxu0 0.0
  %139 = vmatprep.subr.mxu0 0.0
  %140 = vmatpush1.msra.mxu0 0.0
  %141 = vmatprep.subr.mxu0 0.0
  %142 = vmatpush1.msra.mxu0 0.0
  %143 = vmatprep.subr.mxu0 0.0
  %144 = vmatpush1.msra.mxu0 0.0
  %145 = vmatprep.subr.mxu0 0.0
  %146 = vmatpush1.msra.mxu0 0.0
  %147 = vmatprep.subr.mxu0 0.0
  %148 = vmatpush1.msra.mxu0 0.0
  %149 = vmatprep.subr.mxu0 0.0
  %150 = vmatpush1.msra.mxu0 0.0
  %151 = vmatprep.subr.mxu0 0.0
  %152 = vmatpush1.msra.mxu0 0.0
  %153 = vmatprep.subr.mxu0 0.0
  %154 = vmatpush1.msra.mxu0 0.0
  %155 = vmatprep.subr.mxu0 0.0
  %156 = vmatpush1.msra.mxu0 0.0
  %157 = vmatprep.subr.mxu0 0.0
  %158 = vmatpush1.msra.mxu0 0.0
  %159 = vmatprep.subr.mxu0 0.0
  %160 = vmatpush1.msra.mxu0 0.0
  %161 = vmatprep.subr.mxu0 0.0
  %162 = vmatpush1.msra.mxu0 0.0
  %163 = vmatprep.subr.mxu0 0.0
  %164 = vmatpush1.msra.mxu0 0.0
  %165 = vmatprep.subr.mxu0 0.0
  %166 = vmatpush1.msra.mxu0 0.0
  %167 = vmatprep.subr.mxu0 0.0
  %168 = vmatpush1.msra.mxu0 0.0
  %169 = vmatprep.subr.mxu0 0.0
  %170 = vmatpush1.msra.mxu0 0.0
  %171 = vmatprep.subr.mxu0 0.0
  %172 = vmatpush1.msra.mxu0 0.0
  %173 = vmatprep.subr.mxu0 0.0
  %174 = vmatpush1.msra.mxu0 0.0
  %175 = vmatprep.subr.mxu0 0.0
  %176 = vmatpush1.msra.mxu0 0.0
  %177 = vmatprep.subr.mxu0 0.0
  %178 = vmatpush1.msra.mxu0 0.0
  %179 = vmatprep.subr.mxu0 0.0
  %180 = vmatpush1.msra.mxu0 0.0
  %181 = vmatprep.subr.mxu0 0.0
  %182 = vmatpush1.msra.mxu0 0.0
  %183 = vmatprep.subr.mxu0 0.0
  %184 = vmatpush1.msra.mxu0 0.0
  %185 = vmatprep.subr.mxu0 0.0
  %186 = vmatpush1.msra.mxu0 0.0
  %187 = vmatprep.subr.mxu0 0.0
  %188 = vmatpush1.msra.mxu0 0.0
  %189 = vmatprep.subr.mxu0 0.0
  %190 = vmatpush1.msra.mxu0 0.0
  %191 = vmatprep.mubr.f32.mxu0 0.0
  %192 = vmatmul.mubr.f32.gmra.mrb[0].mxu0 %v122
  %v193 = vpop.f32.mrb[0].mxu0
  %v194 = vadd.f32 %v113, %v193
  %v195 = vpop.f32.mrb[0].mxu0
  %196 = vmatprep.mubr.f32.mxu0 0.0
  %197 = vmatmul.mubr.f32.gmra.mrb[0].mxu0 %v125
  %v198 = vpop.f32.mrb[0].mxu0
  %v199 = vadd.f32 %v118, %v198
  %v200 = vpop.f32.mrb[0].mxu0
  %201 = vdwg.mxu0
  %v202 = vld [vmem:[%s4] sm:$0x1]
  %v204 = vlaneseq
  %v205 = vshrl.u32 %v204, 7
  %v206 = vsub.s32 0, %v205
  %v207 = vrot.slane %v202, %v206
  %v209 = vadd.f32 %v194, %v207
  %v210 = vadd.f32 %v199, %v207
  %vm211 = vcmask 523264
  %212 = vst.msk [vmem:[%s8] sm:$0xff] %vm211, %v209
  %213 = vst.msk [vmem:[%s8 + $0x8] sm:$0xff] %vm211, %v210
  %v214 = vld [vmem:[%s5] sm:$0xff]
  %v215 = vld [vmem:[%s5 + $0x8] sm:$0xff]
  %v216 = vld [vmem:[%s6] sm:$0xff]
  %v217 = vld [vmem:[%s6 + $0x8] sm:$0xff]
  %218 = vmatprep.subr.mxu0 0.0
  %219 = vmatpush1.msra.mxu0 %v216
  %220 = vmatprep.subr.mxu0 0.0
  %221 = vmatpush1.msra.mxu0 %v217
  %222 = vmatprep.subr.mxu0 0.0
  %223 = vmatpush1.msra.mxu0 0.0
  %224 = vmatprep.subr.mxu0 0.0
  %225 = vmatpush1.msra.mxu0 0.0
  %226 = vmatprep.subr.mxu0 0.0
  %227 = vmatpush1.msra.mxu0 0.0
  %228 = vmatprep.subr.mxu0 0.0
  %229 = vmatpush1.msra.mxu0 0.0
  %230 = vmatprep.subr.mxu0 0.0
  %231 = vmatpush1.msra.mxu0 0.0
  %232 = vmatprep.subr.mxu0 0.0
  %233 = vmatpush1.msra.mxu0 0.0
  %234 = vmatprep.subr.mxu0 0.0
  %235 = vmatpush1.msra.mxu0 0.0
  %236 = vmatprep.subr.mxu0 0.0
  %237 = vmatpush1.msra.mxu0 0.0
  %238 = vmatprep.subr.mxu0 0.0
  %239 = vmatpush1.msra.mxu0 0.0
  %240 = vmatprep.subr.mxu0 0.0
  %241 = vmatpush1.msra.mxu0 0.0
  %242 = vmatprep.subr.mxu0 0.0
  %243 = vmatpush1.msra.mxu0 0.0
  %244 = vmatprep.subr.mxu0 0.0
  %245 = vmatpush1.msra.mxu0 0.0
  %246 = vmatprep.subr.mxu0 0.0
  %247 = vmatpush1.msra.mxu0 0.0
  %248 = vmatprep.subr.mxu0 0.0
  %249 = vmatpush1.msra.mxu0 0.0
  %250 = vmatprep.subr.mxu0 0.0
  %251 = vmatpush1.msra.mxu0 0.0
  %252 = vmatprep.subr.mxu0 0.0
  %253 = vmatpush1.msra.mxu0 0.0
  %254 = vmatprep.subr.mxu0 0.0
  %255 = vmatpush1.msra.mxu0 0.0
  %256 = vmatprep.subr.mxu0 0.0
  %257 = vmatpush1.msra.mxu0 0.0
  %258 = vmatprep.subr.mxu0 0.0
  %259 = vmatpush1.msra.mxu0 0.0
  %260 = vmatprep.subr.mxu0 0.0
  %261 = vmatpush1.msra.mxu0 0.0
  %262 = vmatprep.subr.mxu0 0.0
  %263 = vmatpush1.msra.mxu0 0.0
  %264 = vmatprep.subr.mxu0 0.0
  %265 = vmatpush1.msra.mxu0 0.0
  %266 = vmatprep.subr.mxu0 0.0
  %267 = vmatpush1.msra.mxu0 0.0
  %268 = vmatprep.subr.mxu0 0.0
  %269 = vmatpush1.msra.mxu0 0.0
  %270 = vmatprep.subr.mxu0 0.0
  %271 = vmatpush1.msra.mxu0 0.0
  %272 = vmatprep.subr.mxu0 0.0
  %273 = vmatpush1.msra.mxu0 0.0
  %274 = vmatprep.subr.mxu0 0.0
  %275 = vmatpush1.msra.mxu0 0.0
  %276 = vmatprep.subr.mxu0 0.0
  %277 = vmatpush1.msra.mxu0 0.0
  %278 = vmatprep.subr.mxu0 0.0
  %279 = vmatpush1.msra.mxu0 0.0
  %280 = vmatprep.subr.mxu0 0.0
  %281 = vmatpush1.msra.mxu0 0.0
  %282 = vmatprep.mubr.f32.mxu0 0.0
  %283 = vmatmul.mubr.f32.gmra.mrb[0].mxu0 %v41
  %v284 = vpop.f32.mrb[0].mxu0
  %v285 = vadd.f32 0.0, %v284
  %v286 = vpop.f32.mrb[0].mxu0
  %287 = vmatprep.mubr.f32.mxu0 0.0
  %288 = vmatmul.mubr.f32.gmra.mrb[0].mxu0 %v44
  %v289 = vpop.f32.mrb[0].mxu0
  %v290 = vadd.f32 0.0, %v289
  %v291 = vpop.f32.mrb[0].mxu0
  %292 = vdwg.mxu0
  %293 = vmatprep.subr.mxu0 0.0
  %294 = vmatpush1.msra.mxu0 %v214
  %295 = vmatprep.subr.mxu0 0.0
  %296 = vmatpush1.msra.mxu0 %v215
  %297 = vmatprep.subr.mxu0 0.0
  %298 = vmatpush1.msra.mxu0 0.0
  %299 = vmatprep.subr.mxu0 0.0
  %300 = vmatpush1.msra.mxu0 0.0
  %301 = vmatprep.subr.mxu0 0.0
  %302 = vmatpush1.msra.mxu0 0.0
  %303 = vmatprep.subr.mxu0 0.0
  %304 = vmatpush1.msra.mxu0 0.0
  %305 = vmatprep.subr.mxu0 0.0
  %306 = vmatpush1.msra.mxu0 0.0
  %307 = vmatprep.subr.mxu0 0.0
  %308 = vmatpush1.msra.mxu0 0.0
  %309 = vmatprep.subr.mxu0 0.0
  %310 = vmatpush1.msra.mxu0 0.0
  %311 = vmatprep.subr.mxu0 0.0
  %312 = vmatpush1.msra.mxu0 0.0
  %313 = vmatprep.subr.mxu0 0.0
  %314 = vmatpush1.msra.mxu0 0.0
  %315 = vmatprep.subr.mxu0 0.0
  %316 = vmatpush1.msra.mxu0 0.0
  %317 = vmatprep.subr.mxu0 0.0
  %318 = vmatpush1.msra.mxu0 0.0
  %319 = vmatprep.subr.mxu0 0.0
  %320 = vmatpush1.msra.mxu0 0.0
  %321 = vmatprep.subr.mxu0 0.0
  %322 = vmatpush1.msra.mxu0 0.0
  %323 = vmatprep.subr.mxu0 0.0
  %324 = vmatpush1.msra.mxu0 0.0
  %325 = vmatprep.subr.mxu0 0.0
  %326 = vmatpush1.msra.mxu0 0.0
  %327 = vmatprep.subr.mxu0 0.0
  %328 = vmatpush1.msra.mxu0 0.0
  %329 = vmatprep.subr.mxu0 0.0
  %330 = vmatpush1.msra.mxu0 0.0
  %331 = vmatprep.subr.mxu0 0.0
  %332 = vmatpush1.msra.mxu0 0.0
  %333 = vmatprep.subr.mxu0 0.0
  %334 = vmatpush1.msra.mxu0 0.0
  %335 = vmatprep.subr.mxu0 0.0
  %336 = vmatpush1.msra.mxu0 0.0
  %337 = vmatprep.subr.mxu0 0.0
  %338 = vmatpush1.msra.mxu0 0.0
  %339 = vmatprep.subr.mxu0 0.0
  %340 = vmatpush1.msra.mxu0 0.0
  %341 = vmatprep.subr.mxu0 0.0
  %342 = vmatpush1.msra.mxu0 0.0
  %343 = vmatprep.subr.mxu0 0.0
  %344 = vmatpush1.msra.mxu0 0.0
  %345 = vmatprep.subr.mxu0 0.0
  %346 = vmatpush1.msra.mxu0 0.0
  %347 = vmatprep.subr.mxu0 0.0
  %348 = vmatpush1.msra.mxu0 0.0
  %349 = vmatprep.subr.mxu0 0.0
  %350 = vmatpush1.msra.mxu0 0.0
  %351 = vmatprep.subr.mxu0 0.0
  %352 = vmatpush1.msra.mxu0 0.0
  %353 = vmatprep.subr.mxu0 0.0
  %354 = vmatpush1.msra.mxu0 0.0
  %355 = vmatprep.subr.mxu0 0.0
  %356 = vmatpush1.msra.mxu0 0.0
  %357 = vmatprep.mubr.f32.mxu0 0.0
  %358 = vmatmul.mubr.f32.gmra.mrb[0].mxu0 %v122
  %v359 = vpop.f32.mrb[0].mxu0
  %v360 = vadd.f32 %v285, %v359
  %v361 = vpop.f32.mrb[0].mxu0
  %362 = vmatprep.mubr.f32.mxu0 0.0
  %363 = vmatmul.mubr.f32.gmra.mrb[0].mxu0 %v125
  %v364 = vpop.f32.mrb[0].mxu0
  %v365 = vadd.f32 %v290, %v364
  %v366 = vpop.f32.mrb[0].mxu0
  %367 = vdwg.mxu0
  %v368 = vld [vmem:[%s7] sm:$0x1]
  %v370 = vlaneseq
  %v371 = vshrl.u32 %v370, 7
  %v372 = vsub.s32 0, %v371
  %v373 = vrot.slane %v368, %v372
  %v375 = vadd.f32 %v360, %v373
  %v376 = vadd.f32 %v365, %v373
  %377 = vst.msk [vmem:[%s9] sm:$0xff] %vm211, %v375
  %378 = vst.msk [vmem:[%s9 + $0x8] sm:$0xff] %vm211, %v376
  // Predicated region
  $region34: #{_lambda_.15} parent=0 // pred_check
    _
  $region35: #{_lambda_.15} parent=0 // pred_check_branch
    %380 = sbr.rel (0) target = $region37
  $region36: #{_lambda_.15} parent=0 // pred_region
    _
  $region37: #{_lambda_.15} parent=0 // pred_fallthru
    _
  // Predicated region
  $region38: #{_lambda_.15} parent=0 // pred_check
    _
  $region39: #{_lambda_.15} parent=0 // pred_check_branch
    %382 = sbr.rel (0) target = $region41
  $region40: #{_lambda_.15} parent=0 // pred_region
    _
  $region41: #{_lambda_.15} parent=0 // pred_fallthru
    _
  // Predicated region
  $region42: #{_lambda_.15} parent=0 // pred_check
    _
  $region43: #{_lambda_.15} parent=0 // pred_check_branch
    %384 = sbr.rel (0) target = $region45
  $region44: #{_lambda_.15} parent=0 // pred_region
    _
  $region45: #{_lambda_.15} parent=0 // pred_fallthru
    _
  // Predicated region
  $region46: #{_lambda_.15} parent=0 // pred_check
    _
  $region47: #{_lambda_.15} parent=0 // pred_check_branch
    %386 = sbr.rel (0) target = $region49
  $region48: #{_lambda_.15} parent=0 // pred_region
    _
  $region49: #{_lambda_.15} parent=0 // pred_fallthru
    _

// kernel: _lambda_.14
$region0: #{_lambda_.14}
  #allocation0 [shape = 'u32[]', space=smem, size = 0x4, offset = 0x4, fixed_abs, tag = 'smem constant byte address 0x4 - core index']
  #allocation1 [shape = 'u32[144,128]{1,0:T(1,128)}', space=vmem, size = 0x12000, scoped, tag = 'internal scratch']
  #allocation2 [shape = 'f32[2,16]{1,0:T(2,128)}', space=vmem, size = 0x400, scoped, tag = 'scratch operand']
  #allocation3 [shape = 'f32[2,16]{1,0:T(2,128)}', space=vmem, size = 0x400, scoped, tag = 'scratch operand']
  #allocation4 [shape = 'f32[2,16]{1,0:T(2,128)}', space=vmem, size = 0x400, scoped, tag = 'scratch operand']
  #allocation5 [shape = 'f32[2,16]{1,0:T(2,128)}', space=vmem, size = 0x400, scoped, tag = 'scratch operand']
  %s0 = inlined_call_operand.vmem [shape: f32[8,2,64], index: 0, kind: input, shape index: {}]
  %s1 = inlined_call_operand.vmem [shape: f32[8,2,64], index: 1, kind: input, shape index: {}]
  %s2 = inlined_call_operand.vmem [shape: f32[16,64], index: 2, kind: input, shape index: {}]
  %s3 = inlined_call_operand.vmem [shape: f32[16,64], index: 3, kind: input, shape index: {}]
  %s4 = inlined_call_operand.vmem [shape: f32[8,2,16], index: 4, kind: output, shape index: {0}]
  %s5 = inlined_call_operand.vmem [shape: f32[8,2,16], index: 5, kind: output, shape index: {1}]
  %6 = xla_tuple %s4, %s5
  %s7 = sld [smem:[#allocation0]]
  $region38: #{_lambda_.14} parent=0
    _
  %s9 = ssub.s32 1, %s7
  %s10 = scalar_select 0, %s9, %s7
  // Predicated region
  $region2: #{_lambda_.14} parent=0 // pred_check
    _
  $region3: #{_lambda_.14} parent=0 // pred_check_branch
    %12 = sbr.rel (0) target = $region5
  $region4: #{_lambda_.14} parent=0 // pred_region
    _
  $region5: #{_lambda_.14} parent=0 // pred_fallthru
    _
  // Predicated region
  $region6: #{_lambda_.14} parent=0 // pred_check
    _
  $region7: #{_lambda_.14} parent=0 // pred_check_branch
    %14 = sbr.rel (0) target = $region9
  $region8: #{_lambda_.14} parent=0 // pred_region
    %s15 = ssub.s32 0, 0
    %s16 = smul.u32 8, %s15
    %p17 = scmp.lt.s32.totalorder %s16, 7
    %s18 = scalar_select %p17, %s16, 7
    %s19 = smul.addr %s18, 2
    %s20 = scalar_lea.vmem %s1, %s19
    %s21 = ssub.s32 0, 0
    %s22 = smul.u32 8, %s21
  $region9: #{_lambda_.14} parent=0 // pred_fallthru
    _
  // Predicated region
  $region10: #{_lambda_.14} parent=0 // pred_check
    _
  $region11: #{_lambda_.14} parent=0 // pred_check_branch
    %24 = sbr.rel (0) target = $region13
  $region12: #{_lambda_.14} parent=0 // pred_region
    _
  $region13: #{_lambda_.14} parent=0 // pred_fallthru
    _
  // Predicated region
  $region14: #{_lambda_.14} parent=0 // pred_check
    _
  $region15: #{_lambda_.14} parent=0 // pred_check_branch
    %26 = sbr.rel (0) target = $region17
  $region16: #{_lambda_.14} parent=0 // pred_region
    _
  $region17: #{_lambda_.14} parent=0 // pred_fallthru
    _
  %s27 = ssub.s32 0, 0
  %s28 = smul.u32 8, %s27
  %p29 = scmp.lt.s32.totalorder %s28, 7
  %s30 = scalar_select %p29, %s28, 7
  %s31 = smul.addr %s30, 2
  %s32 = scalar_lea.vmem %s1, %s31
  %s33 = ssub.s32 0, 0
  %s34 = smul.u32 8, %s33
  %p35 = scmp.lt.s32.totalorder %s34, 7
  %s36 = scalar_select %p35, %s34, 7
  %s37 = smul.addr %s36, 2
  %s38 = scalar_lea.vmem %s5, %s37
  %s39 = ssub.s32 0, 0
  %s40 = smul.u32 8, %s39
  %p41 = scmp.lt.s32.totalorder %s40, 7
  %s42 = scalar_select %p41, %s40, 7
  %s43 = smul.addr %s42, 2
  %s44 = scalar_lea.vmem %s1, %s43
  %s45 = ssub.s32 0, 0
  %s46 = smul.u32 8, %s45
  %s47 = ssub.s32 0, 0
  %s48 = smul.u32 8, %s47
  %p49 = scmp.lt.s32.totalorder %s48, 7
  %s50 = scalar_select %p49, %s48, 7
  %s51 = smul.addr %s50, 2
  %s52 = scalar_lea.vmem %s5, %s51
  %s53 = ssub.s32 0, 0
  %s54 = smul.u32 8, %s53
  %p55 = scmp.eq.s32.totalorder 0, 0
  // Predicated region
  $region18: #{_lambda_.14} parent=0 // pred_check
    %p56 = pneg %p55
  $region19: #{_lambda_.14} parent=0 // pred_check_branch
    %58 = sbr.rel (%p56) target = $region21
  $region20: #{_lambda_.14} parent=0 // pred_region
    %vm59 = vcmask 123904
    %60 = vst.msk [vmem:[#allocation2] sm:$0x3] %vm59, 0.0
    %61 = vst.msk [vmem:[#allocation3] sm:$0x3] %vm59, 0.0
    %62 = vst.msk [vmem:[#allocation4] sm:$0x3] %vm59, 0.0
    %63 = vst.msk [vmem:[#allocation5] sm:$0x3] %vm59, 0.0
  $region21: #{_lambda_.14} parent=0 // pred_fallthru
    _
  %v64 = vld [vmem:[%s0] sm:$0x3]
  %v65 = vld [vmem:[#allocation2] sm:$0x3]
  %v66 = vld [vmem:[%s2] sm:$0xff]
  %v67 = vld [vmem:[%s2 + $0x8] sm:$0xff]
  %vm68 = vcmask 130048
  %v70 = vsel %vm68, %v65, 0
  %72 = vmatprep.subr.mxu0 0.0
  %73 = vmatpush1.msra.mxu0 %v66
  %74 = vmatprep.subr.mxu0 0.0
  %75 = vmatpush1.msra.mxu0 %v67
  %76 = vmatprep.subr.mxu0 0.0
  %77 = vmatpush1.msra.mxu0 0.0
  %78 = vmatprep.subr.mxu0 0.0
  %79 = vmatpush1.msra.mxu0 0.0
  %80 = vmatprep.subr.mxu0 0.0
  %81 = vmatpush1.msra.mxu0 0.0
  %82 = vmatprep.subr.mxu0 0.0
  %83 = vmatpush1.msra.mxu0 0.0
  %84 = vmatprep.subr.mxu0 0.0
  %85 = vmatpush1.msra.mxu0 0.0
  %86 = vmatprep.subr.mxu0 0.0
  %87 = vmatpush1.msra.mxu0 0.0
  %88 = vmatprep.subr.mxu0 0.0
  %89 = vmatpush1.msra.mxu0 0.0
  %90 = vmatprep.subr.mxu0 0.0
  %91 = vmatpush1.msra.mxu0 0.0
  %92 = vmatprep.subr.mxu0 0.0
  %93 = vmatpush1.msra.mxu0 0.0
  %94 = vmatprep.subr.mxu0 0.0
  %95 = vmatpush1.msra.mxu0 0.0
  %96 = vmatprep.subr.mxu0 0.0
  %97 = vmatpush1.msra.mxu0 0.0
  %98 = vmatprep.subr.mxu0 0.0
  %99 = vmatpush1.msra.mxu0 0.0
  %100 = vmatprep.subr.mxu0 0.0
  %101 = vmatpush1.msra.mxu0 0.0
  %102 = vmatprep.subr.mxu0 0.0
  %103 = vmatpush1.msra.mxu0 0.0
  %104 = vmatprep.subr.mxu0 0.0
  %105 = vmatpush1.msra.mxu0 0.0
  %106 = vmatprep.subr.mxu0 0.0
  %107 = vmatpush1.msra.mxu0 0.0
  %108 = vmatprep.subr.mxu0 0.0
  %109 = vmatpush1.msra.mxu0 0.0
  %110 = vmatprep.subr.mxu0 0.0
  %111 = vmatpush1.msra.mxu0 0.0
  %112 = vmatprep.subr.mxu0 0.0
  %113 = vmatpush1.msra.mxu0 0.0
  %114 = vmatprep.subr.mxu0 0.0
  %115 = vmatpush1.msra.mxu0 0.0
  %116 = vmatprep.subr.mxu0 0.0
  %117 = vmatpush1.msra.mxu0 0.0
  %118 = vmatprep.subr.mxu0 0.0
  %119 = vmatpush1.msra.mxu0 0.0
  %120 = vmatprep.subr.mxu0 0.0
  %121 = vmatpush1.msra.mxu0 0.0
  %122 = vmatprep.subr.mxu0 0.0
  %123 = vmatpush1.msra.mxu0 0.0
  %124 = vmatprep.subr.mxu0 0.0
  %125 = vmatpush1.msra.mxu0 0.0
  %126 = vmatprep.subr.mxu0 0.0
  %127 = vmatpush1.msra.mxu0 0.0
  %128 = vmatprep.subr.mxu0 0.0
  %129 = vmatpush1.msra.mxu0 0.0
  %130 = vmatprep.subr.mxu0 0.0
  %131 = vmatpush1.msra.mxu0 0.0
  %132 = vmatprep.subr.mxu0 0.0
  %133 = vmatpush1.msra.mxu0 0.0
  %134 = vmatprep.subr.mxu0 0.0
  %135 = vmatpush1.msra.mxu0 0.0
  %136 = vmatprep.mubr.f32.mxu0 0.0
  %137 = vmatmul.mubr.f32.gmra.mrb[0].mxu0 %v70
  %v138 = vpop.f32.mrb[0].mxu0
  %v139 = vadd.f32 0.0, %v138
  %v140 = vpop.f32.mrb[0].mxu0
  %141 = vdwg.mxu0
  %v142 = vadd.f32 %v64, %v139
  %s143 = scalar_lea.vmem %s44, 14
  %v144 = vld [vmem:[%s143] sm:$0x3]
  %v145 = vld [vmem:[#allocation4] sm:$0x3]
  %v146 = vld [vmem:[%s3] sm:$0xff]
  %v147 = vld [vmem:[%s3 + $0x8] sm:$0xff]
  %v149 = vsel %vm68, %v145, 0
  %151 = vmatprep.subr.mxu0 0.0
  %152 = vmatpush1.msra.mxu0 %v146
  %153 = vmatprep.subr.mxu0 0.0
  %154 = vmatpush1.msra.mxu0 %v147
  %155 = vmatprep.subr.mxu0 0.0
  %156 = vmatpush1.msra.mxu0 0.0
  %157 = vmatprep.subr.mxu0 0.0
  %158 = vmatpush1.msra.mxu0 0.0
  %159 = vmatprep.subr.mxu0 0.0
  %160 = vmatpush1.msra.mxu0 0.0
  %161 = vmatprep.subr.mxu0 0.0
  %162 = vmatpush1.msra.mxu0 0.0
  %163 = vmatprep.subr.mxu0 0.0
  %164 = vmatpush1.msra.mxu0 0.0
  %165 = vmatprep.subr.mxu0 0.0
  %166 = vmatpush1.msra.mxu0 0.0
  %167 = vmatprep.subr.mxu0 0.0
  %168 = vmatpush1.msra.mxu0 0.0
  %169 = vmatprep.subr.mxu0 0.0
  %170 = vmatpush1.msra.mxu0 0.0
  %171 = vmatprep.subr.mxu0 0.0
  %172 = vmatpush1.msra.mxu0 0.0
  %173 = vmatprep.subr.mxu0 0.0
  %174 = vmatpush1.msra.mxu0 0.0
  %175 = vmatprep.subr.mxu0 0.0
  %176 = vmatpush1.msra.mxu0 0.0
  %177 = vmatprep.subr.mxu0 0.0
  %178 = vmatpush1.msra.mxu0 0.0
  %179 = vmatprep.subr.mxu0 0.0
  %180 = vmatpush1.msra.mxu0 0.0
  %181 = vmatprep.subr.mxu0 0.0
  %182 = vmatpush1.msra.mxu0 0.0
  %183 = vmatprep.subr.mxu0 0.0
  %184 = vmatpush1.msra.mxu0 0.0
  %185 = vmatprep.subr.mxu0 0.0
  %186 = vmatpush1.msra.mxu0 0.0
  %187 = vmatprep.subr.mxu0 0.0
  %188 = vmatpush1.msra.mxu0 0.0
  %189 = vmatprep.subr.mxu0 0.0
  %190 = vmatpush1.msra.mxu0 0.0
  %191 = vmatprep.subr.mxu0 0.0
  %192 = vmatpush1.msra.mxu0 0.0
  %193 = vmatprep.subr.mxu0 0.0
  %194 = vmatpush1.msra.mxu0 0.0
  %195 = vmatprep.subr.mxu0 0.0
  %196 = vmatpush1.msra.mxu0 0.0
  %197 = vmatprep.subr.mxu0 0.0
  %198 = vmatpush1.msra.mxu0 0.0
  %199 = vmatprep.subr.mxu0 0.0
  %200 = vmatpush1.msra.mxu0 0.0
  %201 = vmatprep.subr.mxu0 0.0
  %202 = vmatpush1.msra.mxu0 0.0
  %203 = vmatprep.subr.mxu0 0.0
  %204 = vmatpush1.msra.mxu0 0.0
  %205 = vmatprep.subr.mxu0 0.0
  %206 = vmatpush1.msra.mxu0 0.0
  %207 = vmatprep.subr.mxu0 0.0
  %208 = vmatpush1.msra.mxu0 0.0
  %209 = vmatprep.subr.mxu0 0.0
  %210 = vmatpush1.msra.mxu0 0.0
  %211 = vmatprep.subr.mxu0 0.0
  %212 = vmatpush1.msra.mxu0 0.0
  %213 = vmatprep.subr.mxu0 0.0
  %214 = vmatpush1.msra.mxu0 0.0
  %215 = vmatprep.mubr.f32.mxu0 0.0
  %216 = vmatmul.mubr.f32.gmra.mrb[0].mxu0 %v149
  %v217 = vpop.f32.mrb[0].mxu0
  %v218 = vadd.f32 0.0, %v217
  %v219 = vpop.f32.mrb[0].mxu0
  %220 = vdwg.mxu0
  %v221 = vadd.f32 %v144, %v218
  %v222 = vxor.u32 %v142, 2147483648
  %v223 = vmul.f32 %v222, 1.442695
  %v224 = vpow.pop %v223
  %v225 = vadd.f32 %v224, 1.0
  %v226 = vrcp.pop %v225
  %v227 = vmul.f32 1.0, %v226
  %v228 = vxor.u32 %v221, 2147483648
  %v229 = vmul.f32 %v228, 1.442695
  %v230 = vpow.pop %v229
  %v231 = vadd.f32 %v230, 1.0
  %v232 = vrcp.pop %v231
  %v233 = vmul.f32 1.0, %v232
  %v234 = vtanh.pop %v142
  %v235 = vtanh.pop %v221
  %v236 = vld [vmem:[#allocation3] sm:$0x3]
  %238 = vrot.lane.b32.xlu0 %v236, 16
  %v239 = vpop.permute.xlu0 %238
  %v241 = vmul.f32 %v227, %v239
  %243 = vrot.lane.b32.xlu0 %v234, 80
  %v244 = vpop.permute.xlu0 %243
  %v246 = vmul.f32 %v227, %v244
  %248 = vrot.lane.b32.xlu0 %v246, 16
  %v249 = vpop.permute.xlu0 %248
  %v251 = vadd.f32 %v241, %v249
  %v252 = vld [vmem:[#allocation5] sm:$0x3]
  %254 = vrot.lane.b32.xlu0 %v252, 16
  %v255 = vpop.permute.xlu0 %254
  %v257 = vmul.f32 %v233, %v255
  %259 = vrot.lane.b32.xlu0 %v235, 80
  %v260 = vpop.permute.xlu0 %259
  %v262 = vmul.f32 %v233, %v260
  %264 = vrot.lane.b32.xlu0 %v262, 16
  %v265 = vpop.permute.xlu0 %264
  %v267 = vadd.f32 %v257, %v265
  %v268 = vtanh.pop %v251
  %270 = vrot.lane.b32.xlu0 %v268, 16
  %v271 = vpop.permute.xlu0 %270
  %v273 = vmul.f32 %v227, %v271
  %v274 = vtanh.pop %v267
  %276 = vrot.lane.b32.xlu0 %v274, 16
  %v277 = vpop.permute.xlu0 %276
  %v279 = vmul.f32 %v233, %v277
  %281 = vrot.lane.b32.xlu0 %v251, 112
  %v282 = vpop.permute.xlu0 %281
  %vm284 = vcmask 123904
  %285 = vst.msk [vmem:[#allocation3] sm:$0x3] %vm284, %v282
  %287 = vrot.lane.b32.xlu0 %v267, 112
  %v288 = vpop.permute.xlu0 %287
  %290 = vst.msk [vmem:[#allocation5] sm:$0x3] %vm284, %v288
  %292 = vrot.lane.b32.xlu0 %v273, 96
  %v293 = vpop.permute.xlu0 %292
  %295 = vst.msk [vmem:[#allocation2] sm:$0x3] %vm284, %v293
  %297 = vrot.lane.b32.xlu0 %v279, 96
  %v298 = vpop.permute.xlu0 %297
  %300 = vst.msk [vmem:[#allocation4] sm:$0x3] %vm284, %v298
  %301 = vst.msk [vmem:[%s4] sm:$0x3] %vm284, %v293
  %s302 = scalar_lea.vmem %s52, 14
  %303 = vst.msk [vmem:[%s302] sm:$0x3] %vm284, %v298
  %s304 = scalar_lea.vmem %s0, 2
  %v305 = vld [vmem:[%s304] sm:$0x3]
  %v306 = vld [vmem:[#allocation2] sm:$0x3]
  %v307 = vld [vmem:[%s2] sm:$0xff]
  %v308 = vld [vmem:[%s2 + $0x8] sm:$0xff]
  %v310 = vsel %vm68, %v306, 0
  %312 = vmatprep.subr.mxu0 0.0
  %313 = vmatpush1.msra.mxu0 %v307
  %314 = vmatprep.subr.mxu0 0.0
  %315 = vmatpush1.msra.mxu0 %v308
  %316 = vmatprep.subr.mxu0 0.0
  %317 = vmatpush1.msra.mxu0 0.0
  %318 = vmatprep.subr.mxu0 0.0
  %319 = vmatpush1.msra.mxu0 0.0
  %320 = vmatprep.subr.mxu0 0.0
  %321 = vmatpush1.msra.mxu0 0.0
  %322 = vmatprep.subr.mxu0 0.0
  %323 = vmatpush1.msra.mxu0 0.0
  %324 = vmatprep.subr.mxu0 0.0
  %325 = vmatpush1.msra.mxu0 0.0
  %326 = vmatprep.subr.mxu0 0.0
  %327 = vmatpush1.msra.mxu0 0.0
  %328 = vmatprep.subr.mxu0 0.0
  %329 = vmatpush1.msra.mxu0 0.0
  %330 = vmatprep.subr.mxu0 0.0
  %331 = vmatpush1.msra.mxu0 0.0
  %332 = vmatprep.subr.mxu0 0.0
  %333 = vmatpush1.msra.mxu0 0.0
  %334 = vmatprep.subr.mxu0 0.0
  %335 = vmatpush1.msra.mxu0 0.0
  %336 = vmatprep.subr.mxu0 0.0
  %337 = vmatpush1.msra.mxu0 0.0
  %338 = vmatprep.subr.mxu0 0.0
  %339 = vmatpush1.msra.mxu0 0.0
  %340 = vmatprep.subr.mxu0 0.0
  %341 = vmatpush1.msra.mxu0 0.0
  %342 = vmatprep.subr.mxu0 0.0
  %343 = vmatpush1.msra.mxu0 0.0
  %344 = vmatprep.subr.mxu0 0.0
  %345 = vmatpush1.msra.mxu0 0.0
  %346 = vmatprep.subr.mxu0 0.0
  %347 = vmatpush1.msra.mxu0 0.0
  %348 = vmatprep.subr.mxu0 0.0
  %349 = vmatpush1.msra.mxu0 0.0
  %350 = vmatprep.subr.mxu0 0.0
  %351 = vmatpush1.msra.mxu0 0.0
  %352 = vmatprep.subr.mxu0 0.0
  %353 = vmatpush1.msra.mxu0 0.0
  %354 = vmatprep.subr.mxu0 0.0
  %355 = vmatpush1.msra.mxu0 0.0
  %356 = vmatprep.subr.mxu0 0.0
  %357 = vmatpush1.msra.mxu0 0.0
  %358 = vmatprep.subr.mxu0 0.0
  %359 = vmatpush1.msra.mxu0 0.0
  %360 = vmatprep.subr.mxu0 0.0
  %361 = vmatpush1.msra.mxu0 0.0
  %362 = vmatprep.subr.mxu0 0.0
  %363 = vmatpush1.msra.mxu0 0.0
  %364 = vmatprep.subr.mxu0 0.0
  %365 = vmatpush1.msra.mxu0 0.0
  %366 = vmatprep.subr.mxu0 0.0
  %367 = vmatpush1.msra.mxu0 0.0
  %368 = vmatprep.subr.mxu0 0.0
  %369 = vmatpush1.msra.mxu0 0.0
  %370 = vmatprep.subr.mxu0 0.0
  %371 = vmatpush1.msra.mxu0 0.0
  %372 = vmatprep.subr.mxu0 0.0
  %373 = vmatpush1.msra.mxu0 0.0
  %374 = vmatprep.subr.mxu0 0.0
  %375 = vmatpush1.msra.mxu0 0.0
  %376 = vmatprep.mubr.f32.mxu0 0.0
  %377 = vmatmul.mubr.f32.gmra.mrb[0].mxu0 %v310
  %v378 = vpop.f32.mrb[0].mxu0
  %v379 = vadd.f32 0.0, %v378
  %v380 = vpop.f32.mrb[0].mxu0
  %381 = vdwg.mxu0
  %v382 = vadd.f32 %v305, %v379
  %s383 = scalar_lea.vmem %s44, 12
  %v384 = vld [vmem:[%s383] sm:$0x3]
  %v385 = vld [vmem:[#allocation4] sm:$0x3]
  %v386 = vld [vmem:[%s3] sm:$0xff]
  %v387 = vld [vmem:[%s3 + $0x8] sm:$0xff]
  %v389 = vsel %vm68, %v385, 0
  %391 = vmatprep.subr.mxu0 0.0
  %392 = vmatpush1.msra.mxu0 %v386
  %393 = vmatprep.subr.mxu0 0.0
  %394 = vmatpush1.msra.mxu0 %v387
  %395 = vmatprep.subr.mxu0 0.0
  %396 = vmatpush1.msra.mxu0 0.0
  %397 = vmatprep.subr.mxu0 0.0
  %398 = vmatpush1.msra.mxu0 0.0
  %399 = vmatprep.subr.mxu0 0.0
  %400 = vmatpush1.msra.mxu0 0.0
  %401 = vmatprep.subr.mxu0 0.0
  %402 = vmatpush1.msra.mxu0 0.0
  %403 = vmatprep.subr.mxu0 0.0
  %404 = vmatpush1.msra.mxu0 0.0
  %405 = vmatprep.subr.mxu0 0.0
  %406 = vmatpush1.msra.mxu0 0.0
  %407 = vmatprep.subr.mxu0 0.0
  %408 = vmatpush1.msra.mxu0 0.0
  %409 = vmatprep.subr.mxu0 0.0
  %410 = vmatpush1.msra.mxu0 0.0
  %411 = vmatprep.subr.mxu0 0.0
  %412 = vmatpush1.msra.mxu0 0.0
  %413 = vmatprep.subr.mxu0 0.0
  %414 = vmatpush1.msra.mxu0 0.0
  %415 = vmatprep.subr.mxu0 0.0
  %416 = vmatpush1.msra.mxu0 0.0
  %417 = vmatprep.subr.mxu0 0.0
  %418 = vmatpush1.msra.mxu0 0.0
  %419 = vmatprep.subr.mxu0 0.0
  %420 = vmatpush1.msra.mxu0 0.0
  %421 = vmatprep.subr.mxu0 0.0
  %422 = vmatpush1.msra.mxu0 0.0
  %423 = vmatprep.subr.mxu0 0.0
  %424 = vmatpush1.msra.mxu0 0.0
  %425 = vmatprep.subr.mxu0 0.0
  %426 = vmatpush1.msra.mxu0 0.0
  %427 = vmatprep.subr.mxu0 0.0
  %428 = vmatpush1.msra.mxu0 0.0
  %429 = vmatprep.subr.mxu0 0.0
  %430 = vmatpush1.msra.mxu0 0.0
  %431 = vmatprep.subr.mxu0 0.0
  %432 = vmatpush1.msra.mxu0 0.0
  %433 = vmatprep.subr.mxu0 0.0
  %434 = vmatpush1.msra.mxu0 0.0
  %435 = vmatprep.subr.mxu0 0.0
  %436 = vmatpush1.msra.mxu0 0.0
  %437 = vmatprep.subr.mxu0 0.0
  %438 = vmatpush1.msra.mxu0 0.0
  %439 = vmatprep.subr.mxu0 0.0
  %440 = vmatpush1.msra.mxu0 0.0
  %441 = vmatprep.subr.mxu0 0.0
  %442 = vmatpush1.msra.mxu0 0.0
  %443 = vmatprep.subr.mxu0 0.0
  %444 = vmatpush1.msra.mxu0 0.0
  %445 = vmatprep.subr.mxu0 0.0
  %446 = vmatpush1.msra.mxu0 0.0
  %447 = vmatprep.subr.mxu0 0.0
  %448 = vmatpush1.msra.mxu0 0.0
  %449 = vmatprep.subr.mxu0 0.0
  %450 = vmatpush1.msra.mxu0 0.0
  %451 = vmatprep.subr.mxu0 0.0
  %452 = vmatpush1.msra.mxu0 0.0
  %453 = vmatprep.subr.mxu0 0.0
  %454 = vmatpush1.msra.mxu0 0.0
  %455 = vmatprep.mubr.f32.mxu0 0.0
  %456 = vmatmul.mubr.f32.gmra.mrb[0].mxu0 %v389
  %v457 = vpop.f32.mrb[0].mxu0
  %v458 = vadd.f32 0.0, %v457
  %v459 = vpop.f32.mrb[0].mxu0
  %460 = vdwg.mxu0
  %v461 = vadd.f32 %v384, %v458
  %v462 = vxor.u32 %v382, 2147483648
  %v463 = vmul.f32 %v462, 1.442695
  %v464 = vpow.pop %v463
  %v465 = vadd.f32 %v464, 1.0
  %v466 = vrcp.pop %v465
  %v467 = vmul.f32 1.0, %v466
  %v468 = vxor.u32 %v461, 2147483648
  %v469 = vmul.f32 %v468, 1.442695
  %v470 = vpow.pop %v469
  %v471 = vadd.f32 %v470, 1.0
  %v472 = vrcp.pop %v471
  %v473 = vmul.f32 1.0, %v472
  %v474 = vtanh.pop %v382
  %v475 = vtanh.pop %v461
  %v476 = vld [vmem:[#allocation3] sm:$0x3]
  %478 = vrot.lane.b32.xlu0 %v476, 16
  %v479 = vpop.permute.xlu0 %478
  %v481 = vmul.f32 %v467, %v479
  %483 = vrot.lane.b32.xlu0 %v474, 80
  %v484 = vpop.permute.xlu0 %483
  %v486 = vmul.f32 %v467, %v484
  %488 = vrot.lane.b32.xlu0 %v486, 16
  %v489 = vpop.permute.xlu0 %488
  %v491 = vadd.f32 %v481, %v489
  %v492 = vld [vmem:[#allocation5] sm:$0x3]
  %494 = vrot.lane.b32.xlu0 %v492, 16
  %v495 = vpop.permute.xlu0 %494
  %v497 = vmul.f32 %v473, %v495
  %499 = vrot.lane.b32.xlu0 %v475, 80
  %v500 = vpop.permute.xlu0 %499
  %v502 = vmul.f32 %v473, %v500
  %504 = vrot.lane.b32.xlu0 %v502, 16
  %v505 = vpop.permute.xlu0 %504
  %v507 = vadd.f32 %v497, %v505
  %v508 = vtanh.pop %v491
  %510 = vrot.lane.b32.xlu0 %v508, 16
  %v511 = vpop.permute.xlu0 %510
  %v513 = vmul.f32 %v467, %v511
  %v514 = vtanh.pop %v507
  %516 = vrot.lane.b32.xlu0 %v514, 16
  %v517 = vpop.permute.xlu0 %516
  %v519 = vmul.f32 %v473, %v517
  %521 = vrot.lane.b32.xlu0 %v491, 112
  %v522 = vpop.permute.xlu0 %521
  %524 = vst.msk [vmem:[#allocation3] sm:$0x3] %vm284, %v522
  %526 = vrot.lane.b32.xlu0 %v507, 112
  %v527 = vpop.permute.xlu0 %526
  %529 = vst.msk [vmem:[#allocation5] sm:$0x3] %vm284, %v527
  %531 = vrot.lane.b32.xlu0 %v513, 96
  %v532 = vpop.permute.xlu0 %531
  %534 = vst.msk [vmem:[#allocation2] sm:$0x3] %vm284, %v532
  %536 = vrot.lane.b32.xlu0 %v519, 96
  %v537 = vpop.permute.xlu0 %536
  %539 = vst.msk [vmem:[#allocation4] sm:$0x3] %vm284, %v537
  %s540 = scalar_lea.vmem %s4, 2
  %541 = vst.msk [vmem:[%s540] sm:$0x3] %vm284, %v532
  %s542 = scalar_lea.vmem %s52, 12
  %543 = vst.msk [vmem:[%s542] sm:$0x3] %vm284, %v537
  %s544 = scalar_lea.vmem %s0, 4
  %v545 = vld [vmem:[%s544] sm:$0x3]
  %v546 = vld [vmem:[#allocation2] sm:$0x3]
  %v547 = vld [vmem:[%s2] sm:$0xff]
  %v548 = vld [vmem:[%s2 + $0x8] sm:$0xff]
  %v550 = vsel %vm68, %v546, 0
  %552 = vmatprep.subr.mxu0 0.0
  %553 = vmatpush1.msra.mxu0 %v547
  %554 = vmatprep.subr.mxu0 0.0
  %555 = vmatpush1.msra.mxu0 %v548
  %556 = vmatprep.subr.mxu0 0.0
  %557 = vmatpush1.msra.mxu0 0.0
  %558 = vmatprep.subr.mxu0 0.0
  %559 = vmatpush1.msra.mxu0 0.0
  %560 = vmatprep.subr.mxu0 0.0
  %561 = vmatpush1.msra.mxu0 0.0
  %562 = vmatprep.subr.mxu0 0.0
  %563 = vmatpush1.msra.mxu0 0.0
  %564 = vmatprep.subr.mxu0 0.0
  %565 = vmatpush1.msra.mxu0 0.0
  %566 = vmatprep.subr.mxu0 0.0
  %567 = vmatpush1.msra.mxu0 0.0
  %568 = vmatprep.subr.mxu0 0.0
  %569 = vmatpush1.msra.mxu0 0.0
  %570 = vmatprep.subr.mxu0 0.0
  %571 = vmatpush1.msra.mxu0 0.0
  %572 = vmatprep.subr.mxu0 0.0
  %573 = vmatpush1.msra.mxu0 0.0
  %574 = vmatprep.subr.mxu0 0.0
  %575 = vmatpush1.msra.mxu0 0.0
  %576 = vmatprep.subr.mxu0 0.0
  %577 = vmatpush1.msra.mxu0 0.0
  %578 = vmatprep.subr.mxu0 0.0
  %579 = vmatpush1.msra.mxu0 0.0
  %580 = vmatprep.subr.mxu0 0.0
  %581 = vmatpush1.msra.mxu0 0.0
  %582 = vmatprep.subr.mxu0 0.0
  %583 = vmatpush1.msra.mxu0 0.0
  %584 = vmatprep.subr.mxu0 0.0
  %585 = vmatpush1.msra.mxu0 0.0
  %586 = vmatprep.subr.mxu0 0.0
  %587 = vmatpush1.msra.mxu0 0.0
  %588 = vmatprep.subr.mxu0 0.0
  %589 = vmatpush1.msra.mxu0 0.0
  %590 = vmatprep.subr.mxu0 0.0
  %591 = vmatpush1.msra.mxu0 0.0
  %592 = vmatprep.subr.mxu0 0.0
  %593 = vmatpush1.msra.mxu0 0.0
  %594 = vmatprep.subr.mxu0 0.0
  %595 = vmatpush1.msra.mxu0 0.0
  %596 = vmatprep.subr.mxu0 0.0
  %597 = vmatpush1.msra.mxu0 0.0
  %598 = vmatprep.subr.mxu0 0.0
  %599 = vmatpush1.msra.mxu0 0.0
  %600 = vmatprep.subr.mxu0 0.0
  %601 = vmatpush1.msra.mxu0 0.0
  %602 = vmatprep.subr.mxu0 0.0
  %603 = vmatpush1.msra.mxu0 0.0
  %604 = vmatprep.subr.mxu0 0.0
  %605 = vmatpush1.msra.mxu0 0.0
  %606 = vmatprep.subr.mxu0 0.0
  %607 = vmatpush1.msra.mxu0 0.0
  %608 = vmatprep.subr.mxu0 0.0
  %609 = vmatpush1.msra.mxu0 0.0
  %610 = vmatprep.subr.mxu0 0.0
  %611 = vmatpush1.msra.mxu0 0.0
  %612 = vmatprep.subr.mxu0 0.0
  %613 = vmatpush1.msra.mxu0 0.0
  %614 = vmatprep.subr.mxu0 0.0
  %615 = vmatpush1.msra.mxu0 0.0
  %616 = vmatprep.mubr.f32.mxu0 0.0
  %617 = vmatmul.mubr.f32.gmra.mrb[0].mxu0 %v550
  %v618 = vpop.f32.mrb[0].mxu0
  %v619 = vadd.f32 0.0, %v618
  %v620 = vpop.f32.mrb[0].mxu0
  %621 = vdwg.mxu0
  %v622 = vadd.f32 %v545, %v619
  %s623 = scalar_lea.vmem %s44, 10
  %v624 = vld [vmem:[%s623] sm:$0x3]
  %v625 = vld [vmem:[#allocation4] sm:$0x3]
  %v626 = vld [vmem:[%s3] sm:$0xff]
  %v627 = vld [vmem:[%s3 + $0x8] sm:$0xff]
  %v629 = vsel %vm68, %v625, 0
  %631 = vmatprep.subr.mxu0 0.0
  %632 = vmatpush1.msra.mxu0 %v626
  %633 = vmatprep.subr.mxu0 0.0
  %634 = vmatpush1.msra.mxu0 %v627
  %635 = vmatprep.subr.mxu0 0.0
  %636 = vmatpush1.msra.mxu0 0.0
  %637 = vmatprep.subr.mxu0 0.0
  %638 = vmatpush1.msra.mxu0 0.0
  %639 = vmatprep.subr.mxu0 0.0
  %640 = vmatpush1.msra.mxu0 0.0
  %641 = vmatprep.subr.mxu0 0.0
  %642 = vmatpush1.msra.mxu0 0.0
  %643 = vmatprep.subr.mxu0 0.0
  %644 = vmatpush1.msra.mxu0 0.0
  %645 = vmatprep.subr.mxu0 0.0
  %646 = vmatpush1.msra.mxu0 0.0
  %647 = vmatprep.subr.mxu0 0.0
  %648 = vmatpush1.msra.mxu0 0.0
  %649 = vmatprep.subr.mxu0 0.0
  %650 = vmatpush1.msra.mxu0 0.0
  %651 = vmatprep.subr.mxu0 0.0
  %652 = vmatpush1.msra.mxu0 0.0
  %653 = vmatprep.subr.mxu0 0.0
  %654 = vmatpush1.msra.mxu0 0.0
  %655 = vmatprep.subr.mxu0 0.0
  %656 = vmatpush1.msra.mxu0 0.0
  %657 = vmatprep.subr.mxu0 0.0
  %658 = vmatpush1.msra.mxu0 0.0
  %659 = vmatprep.subr.mxu0 0.0
  %660 = vmatpush1.msra.mxu0 0.0
  %661 = vmatprep.subr.mxu0 0.0
  %662 = vmatpush1.msra.mxu0 0.0
  %663 = vmatprep.subr.mxu0 0.0
  %664 = vmatpush1.msra.mxu0 0.0
  %665 = vmatprep.subr.mxu0 0.0
  %666 = vmatpush1.msra.mxu0 0.0
  %667 = vmatprep.subr.mxu0 0.0
  %668 = vmatpush1.msra.mxu0 0.0
  %669 = vmatprep.subr.mxu0 0.0
  %670 = vmatpush1.msra.mxu0 0.0
  %671 = vmatprep.subr.mxu0 0.0
  %672 = vmatpush1.msra.mxu0 0.0
  %673 = vmatprep.subr.mxu0 0.0
  %674 = vmatpush1.msra.mxu0 0.0
  %675 = vmatprep.subr.mxu0 0.0
  %676 = vmatpush1.msra.mxu0 0.0
  %677 = vmatprep.subr.mxu0 0.0
  %678 = vmatpush1.msra.mxu0 0.0
  %679 = vmatprep.subr.mxu0 0.0
  %680 = vmatpush1.msra.mxu0 0.0
  %681 = vmatprep.subr.mxu0 0.0
  %682 = vmatpush1.msra.mxu0 0.0
  %683 = vmatprep.subr.mxu0 0.0
  %684 = vmatpush1.msra.mxu0 0.0
  %685 = vmatprep.subr.mxu0 0.0
  %686 = vmatpush1.msra.mxu0 0.0
  %687 = vmatprep.subr.mxu0 0.0
  %688 = vmatpush1.msra.mxu0 0.0
  %689 = vmatprep.subr.mxu0 0.0
  %690 = vmatpush1.msra.mxu0 0.0
  %691 = vmatprep.subr.mxu0 0.0
  %692 = vmatpush1.msra.mxu0 0.0
  %693 = vmatprep.subr.mxu0 0.0
  %694 = vmatpush1.msra.mxu0 0.0
  %695 = vmatprep.mubr.f32.mxu0 0.0
  %696 = vmatmul.mubr.f32.gmra.mrb[0].mxu0 %v629
  %v697 = vpop.f32.mrb[0].mxu0
  %v698 = vadd.f32 0.0, %v697
  %v699 = vpop.f32.mrb[0].mxu0
  %700 = vdwg.mxu0
  %v701 = vadd.f32 %v624, %v698
  %v702 = vxor.u32 %v622, 2147483648
  %v703 = vmul.f32 %v702, 1.442695
  %v704 = vpow.pop %v703
  %v705 = vadd.f32 %v704, 1.0
  %v706 = vrcp.pop %v705
  %v707 = vmul.f32 1.0, %v706
  %v708 = vxor.u32 %v701, 2147483648
  %v709 = vmul.f32 %v708, 1.442695
  %v710 = vpow.pop %v709
  %v711 = vadd.f32 %v710, 1.0
  %v712 = vrcp.pop %v711
  %v713 = vmul.f32 1.0, %v712
  %v714 = vtanh.pop %v622
  %v715 = vtanh.pop %v701
  %v716 = vld [vmem:[#allocation3] sm:$0x3]
  %718 = vrot.lane.b32.xlu0 %v716, 16
  %v719 = vpop.permute.xlu0 %718
  %v721 = vmul.f32 %v707, %v719
  %723 = vrot.lane.b32.xlu0 %v714, 80
  %v724 = vpop.permute.xlu0 %723
  %v726 = vmul.f32 %v707, %v724
  %728 = vrot.lane.b32.xlu0 %v726, 16
  %v729 = vpop.permute.xlu0 %728
  %v731 = vadd.f32 %v721, %v729
  %v732 = vld [vmem:[#allocation5] sm:$0x3]
  %734 = vrot.lane.b32.xlu0 %v732, 16
  %v735 = vpop.permute.xlu0 %734
  %v737 = vmul.f32 %v713, %v735
  %739 = vrot.lane.b32.xlu0 %v715, 80
  %v740 = vpop.permute.xlu0 %739
  %v742 = vmul.f32 %v713, %v740
  %744 = vrot.lane.b32.xlu0 %v742, 16
  %v745 = vpop.permute.xlu0 %744
  %v747 = vadd.f32 %v737, %v745
  %v748 = vtanh.pop %v731
  %750 = vrot.lane.b32.xlu0 %v748, 16
  %v751 = vpop.permute.xlu0 %750
  %v753 = vmul.f32 %v707, %v751
  %v754 = vtanh.pop %v747
  %756 = vrot.lane.b32.xlu0 %v754, 16
  %v757 = vpop.permute.xlu0 %756
  %v759 = vmul.f32 %v713, %v757
  %761 = vrot.lane.b32.xlu0 %v731, 112
  %v762 = vpop.permute.xlu0 %761
  %764 = vst.msk [vmem:[#allocation3] sm:$0x3] %vm284, %v762
  %766 = vrot.lane.b32.xlu0 %v747, 112
  %v767 = vpop.permute.xlu0 %766
  %769 = vst.msk [vmem:[#allocation5] sm:$0x3] %vm284, %v767
  %771 = vrot.lane.b32.xlu0 %v753, 96
  %v772 = vpop.permute.xlu0 %771
  %774 = vst.msk [vmem:[#allocation2] sm:$0x3] %vm284, %v772
  %776 = vrot.lane.b32.xlu0 %v759, 96
  %v777 = vpop.permute.xlu0 %776
  %779 = vst.msk [vmem:[#allocation4] sm:$0x3] %vm284, %v777
  %s780 = scalar_lea.vmem %s4, 4
  %781 = vst.msk [vmem:[%s780] sm:$0x3] %vm284, %v772
  %s782 = scalar_lea.vmem %s52, 10
  %783 = vst.msk [vmem:[%s782] sm:$0x3] %vm284, %v777
  %s784 = scalar_lea.vmem %s0, 6
  %v785 = vld [vmem:[%s784] sm:$0x3]
  %v786 = vld [vmem:[#allocation2] sm:$0x3]
  %v787 = vld [vmem:[%s2] sm:$0xff]
  %v788 = vld [vmem:[%s2 + $0x8] sm:$0xff]
  %v790 = vsel %vm68, %v786, 0
  %792 = vmatprep.subr.mxu0 0.0
  %793 = vmatpush1.msra.mxu0 %v787
  %794 = vmatprep.subr.mxu0 0.0
  %795 = vmatpush1.msra.mxu0 %v788
  %796 = vmatprep.subr.mxu0 0.0
  %797 = vmatpush1.msra.mxu0 0.0
  %798 = vmatprep.subr.mxu0 0.0
  %799 = vmatpush1.msra.mxu0 0.0
  %800 = vmatprep.subr.mxu0 0.0
  %801 = vmatpush1.msra.mxu0 0.0
  %802 = vmatprep.subr.mxu0 0.0
  %803 = vmatpush1.msra.mxu0 0.0
  %804 = vmatprep.subr.mxu0 0.0
  %805 = vmatpush1.msra.mxu0 0.0
  %806 = vmatprep.subr.mxu0 0.0
  %807 = vmatpush1.msra.mxu0 0.0
  %808 = vmatprep.subr.mxu0 0.0
  %809 = vmatpush1.msra.mxu0 0.0
  %810 = vmatprep.subr.mxu0 0.0
  %811 = vmatpush1.msra.mxu0 0.0
  %812 = vmatprep.subr.mxu0 0.0
  %813 = vmatpush1.msra.mxu0 0.0
  %814 = vmatprep.subr.mxu0 0.0
  %815 = vmatpush1.msra.mxu0 0.0
  %816 = vmatprep.subr.mxu0 0.0
  %817 = vmatpush1.msra.mxu0 0.0
  %818 = vmatprep.subr.mxu0 0.0
  %819 = vmatpush1.msra.mxu0 0.0
  %820 = vmatprep.subr.mxu0 0.0
  %821 = vmatpush1.msra.mxu0 0.0
  %822 = vmatprep.subr.mxu0 0.0
  %823 = vmatpush1.msra.mxu0 0.0
  %824 = vmatprep.subr.mxu0 0.0
  %825 = vmatpush1.msra.mxu0 0.0
  %826 = vmatprep.subr.mxu0 0.0
  %827 = vmatpush1.msra.mxu0 0.0
  %828 = vmatprep.subr.mxu0 0.0
  %829 = vmatpush1.msra.mxu0 0.0
  %830 = vmatprep.subr.mxu0 0.0
  %831 = vmatpush1.msra.mxu0 0.0
  %832 = vmatprep.subr.mxu0 0.0
  %833 = vmatpush1.msra.mxu0 0.0
  %834 = vmatprep.subr.mxu0 0.0
  %835 = vmatpush1.msra.mxu0 0.0
  %836 = vmatprep.subr.mxu0 0.0
  %837 = vmatpush1.msra.mxu0 0.0
  %838 = vmatprep.subr.mxu0 0.0
  %839 = vmatpush1.msra.mxu0 0.0
  %840 = vmatprep.subr.mxu0 0.0
  %841 = vmatpush1.msra.mxu0 0.0
  %842 = vmatprep.subr.mxu0 0.0
  %843 = vmatpush1.msra.mxu0 0.0
  %844 = vmatprep.subr.mxu0 0.0
  %845 = vmatpush1.msra.mxu0 0.0
  %846 = vmatprep.subr.mxu0 0.0
  %847 = vmatpush1.msra.mxu0 0.0
  %848 = vmatprep.subr.mxu0 0.0
  %849 = vmatpush1.msra.mxu0 0.0
  %850 = vmatprep.subr.mxu0 0.0
  %851 = vmatpush1.msra.mxu0 0.0
  %852 = vmatprep.subr.mxu0 0.0
  %853 = vmatpush1.msra.mxu0 0.0
  %854 = vmatprep.subr.mxu0 0.0
  %855 = vmatpush1.msra.mxu0 0.0
  %856 = vmatprep.mubr.f32.mxu0 0.0
  %857 = vmatmul.mubr.f32.gmra.mrb[0].mxu0 %v790
  %v858 = vpop.f32.mrb[0].mxu0
  %v859 = vadd.f32 0.0, %v858
  %v860 = vpop.f32.mrb[0].mxu0
  %861 = vdwg.mxu0
  %v862 = vadd.f32 %v785, %v859
  %s863 = scalar_lea.vmem %s44, 8
  %v864 = vld [vmem:[%s863] sm:$0x3]
  %v865 = vld [vmem:[#allocation4] sm:$0x3]
  %v866 = vld [vmem:[%s3] sm:$0xff]
  %v867 = vld [vmem:[%s3 + $0x8] sm:$0xff]
  %v869 = vsel %vm68, %v865, 0
  %871 = vmatprep.subr.mxu0 0.0
  %872 = vmatpush1.msra.mxu0 %v866
  %873 = vmatprep.subr.mxu0 0.0
  %874 = vmatpush1.msra.mxu0 %v867
  %875 = vmatprep.subr.mxu0 0.0
  %876 = vmatpush1.msra.mxu0 0.0
  %877 = vmatprep.subr.mxu0 0.0
  %878 = vmatpush1.msra.mxu0 0.0
  %879 = vmatprep.subr.mxu0 0.0
  %880 = vmatpush1.msra.mxu0 0.0
  %881 = vmatprep.subr.mxu0 0.0
  %882 = vmatpush1.msra.mxu0 0.0
  %883 = vmatprep.subr.mxu0 0.0
  %884 = vmatpush1.msra.mxu0 0.0
  %885 = vmatprep.subr.mxu0 0.0
  %886 = vmatpush1.msra.mxu0 0.0
  %887 = vmatprep.subr.mxu0 0.0
  %888 = vmatpush1.msra.mxu0 0.0
  %889 = vmatprep.subr.mxu0 0.0
  %890 = vmatpush1.msra.mxu0 0.0
  %891 = vmatprep.subr.mxu0 0.0
  %892 = vmatpush1.msra.mxu0 0.0
  %893 = vmatprep.subr.mxu0 0.0
  %894 = vmatpush1.msra.mxu0 0.0
  %895 = vmatprep.subr.mxu0 0.0
  %896 = vmatpush1.msra.mxu0 0.0
  %897 = vmatprep.subr.mxu0 0.0
  %898 = vmatpush1.msra.mxu0 0.0
  %899 = vmatprep.subr.mxu0 0.0
  %900 = vmatpush1.msra.mxu0 0.0
  %901 = vmatprep.subr.mxu0 0.0
  %902 = vmatpush1.msra.mxu0 0.0
  %903 = vmatprep.subr.mxu0 0.0
  %904 = vmatpush1.msra.mxu0 0.0
  %905 = vmatprep.subr.mxu0 0.0
  %906 = vmatpush1.msra.mxu0 0.0
  %907 = vmatprep.subr.mxu0 0.0
  %908 = vmatpush1.msra.mxu0 0.0
  %909 = vmatprep.subr.mxu0 0.0
  %910 = vmatpush1.msra.mxu0 0.0
  %911 = vmatprep.subr.mxu0 0.0
  %912 = vmatpush1.msra.mxu0 0.0
  %913 = vmatprep.subr.mxu0 0.0
  %914 = vmatpush1.msra.mxu0 0.0
  %915 = vmatprep.subr.mxu0 0.0
  %916 = vmatpush1.msra.mxu0 0.0
  %917 = vmatprep.subr.mxu0 0.0
  %918 = vmatpush1.msra.mxu0 0.0
  %919 = vmatprep.subr.mxu0 0.0
  %920 = vmatpush1.msra.mxu0 0.0
  %921 = vmatprep.subr.mxu0 0.0
  %922 = vmatpush1.msra.mxu0 0.0
  %923 = vmatprep.subr.mxu0 0.0
  %924 = vmatpush1.msra.mxu0 0.0
  %925 = vmatprep.subr.mxu0 0.0
  %926 = vmatpush1.msra.mxu0 0.0
  %927 = vmatprep.subr.mxu0 0.0
  %928 = vmatpush1.msra.mxu0 0.0
  %929 = vmatprep.subr.mxu0 0.0
  %930 = vmatpush1.msra.mxu0 0.0
  %931 = vmatprep.subr.mxu0 0.0
  %932 = vmatpush1.msra.mxu0 0.0
  %933 = vmatprep.subr.mxu0 0.0
  %934 = vmatpush1.msra.mxu0 0.0
  %935 = vmatprep.mubr.f32.mxu0 0.0
  %936 = vmatmul.mubr.f32.gmra.mrb[0].mxu0 %v869
  %v937 = vpop.f32.mrb[0].mxu0
  %v938 = vadd.f32 0.0, %v937
  %v939 = vpop.f32.mrb[0].mxu0
  %940 = vdwg.mxu0
  %v941 = vadd.f32 %v864, %v938
  %v942 = vxor.u32 %v862, 2147483648
  %v943 = vmul.f32 %v942, 1.442695
  %v944 = vpow.pop %v943
  %v945 = vadd.f32 %v944, 1.0
  %v946 = vrcp.pop %v945
  %v947 = vmul.f32 1.0, %v946
  %v948 = vxor.u32 %v941, 2147483648
  %v949 = vmul.f32 %v948, 1.442695
  %v950 = vpow.pop %v949
  %v951 = vadd.f32 %v950, 1.0
  %v952 = vrcp.pop %v951
  %v953 = vmul.f32 1.0, %v952
  %v954 = vtanh.pop %v862
  %v955 = vtanh.pop %v941
  %v956 = vld [vmem:[#allocation3] sm:$0x3]
  %958 = vrot.lane.b32.xlu0 %v956, 16
  %v959 = vpop.permute.xlu0 %958
  %v961 = vmul.f32 %v947, %v959
  %963 = vrot.lane.b32.xlu0 %v954, 80
  %v964 = vpop.permute.xlu0 %963
  %v966 = vmul.f32 %v947, %v964
  %968 = vrot.lane.b32.xlu0 %v966, 16
  %v969 = vpop.permute.xlu0 %968
  %v971 = vadd.f32 %v961, %v969
  %v972 = vld [vmem:[#allocation5] sm:$0x3]
  %974 = vrot.lane.b32.xlu0 %v972, 16
  %v975 = vpop.permute.xlu0 %974
  %v977 = vmul.f32 %v953, %v975
  %979 = vrot.lane.b32.xlu0 %v955, 80
  %v980 = vpop.permute.xlu0 %979
  %v982 = vmul.f32 %v953, %v980
  %984 = vrot.lane.b32.xlu0 %v982, 16
  %v985 = vpop.permute.xlu0 %984
  %v987 = vadd.f32 %v977, %v985
  %v988 = vtanh.pop %v971
  %990 = vrot.lane.b32.xlu0 %v988, 16
  %v991 = vpop.permute.xlu0 %990
  %v993 = vmul.f32 %v947, %v991
  %v994 = vtanh.pop %v987
  %996 = vrot.lane.b32.xlu0 %v994, 16
  %v997 = vpop.permute.xlu0 %996
  %v999 = vmul.f32 %v953, %v997
  %1001 = vrot.lane.b32.xlu0 %v971, 112
  %v1002 = vpop.permute.xlu0 %1001
  %1004 = vst.msk [vmem:[#allocation3] sm:$0x3] %vm284, %v1002
  %1006 = vrot.lane.b32.xlu0 %v987, 112
  %v1007 = vpop.permute.xlu0 %1006
  %1009 = vst.msk [vmem:[#allocation5] sm:$0x3] %vm284, %v1007
  %1011 = vrot.lane.b32.xlu0 %v993, 96
  %v1012 = vpop.permute.xlu0 %1011
  %1014 = vst.msk [vmem:[#allocation2] sm:$0x3] %vm284, %v1012
  %1016 = vrot.lane.b32.xlu0 %v999, 96
  %v1017 = vpop.permute.xlu0 %1016
  %1019 = vst.msk [vmem:[#allocation4] sm:$0x3] %vm284, %v1017
  %s1020 = scalar_lea.vmem %s4, 6
  %1021 = vst.msk [vmem:[%s1020] sm:$0x3] %vm284, %v1012
  %s1022 = scalar_lea.vmem %s52, 8
  %1023 = vst.msk [vmem:[%s1022] sm:$0x3] %vm284, %v1017
  %s1024 = scalar_lea.vmem %s0, 8
  %v1025 = vld [vmem:[%s1024] sm:$0x3]
  %v1026 = vld [vmem:[#allocation2] sm:$0x3]
  %v1027 = vld [vmem:[%s2] sm:$0xff]
  %v1028 = vld [vmem:[%s2 + $0x8] sm:$0xff]
  %v1030 = vsel %vm68, %v1026, 0
  %1032 = vmatprep.subr.mxu0 0.0
  %1033 = vmatpush1.msra.mxu0 %v1027
  %1034 = vmatprep.subr.mxu0 0.0
  %1035 = vmatpush1.msra.mxu0 %v1028
  %1036 = vmatprep.subr.mxu0 0.0
  %1037 = vmatpush1.msra.mxu0 0.0
  %1038 = vmatprep.subr.mxu0 0.0
  %1039 = vmatpush1.msra.mxu0 0.0
  %1040 = vmatprep.subr.mxu0 0.0
  %1041 = vmatpush1.msra.mxu0 0.0
  %1042 = vmatprep.subr.mxu0 0.0
  %1043 = vmatpush1.msra.mxu0 0.0
  %1044 = vmatprep.subr.mxu0 0.0
  %1045 = vmatpush1.msra.mxu0 0.0
  %1046 = vmatprep.subr.mxu0 0.0
  %1047 = vmatpush1.msra.mxu0 0.0
  %1048 = vmatprep.subr.mxu0 0.0
  %1049 = vmatpush1.msra.mxu0 0.0
  %1050 = vmatprep.subr.mxu0 0.0
  %1051 = vmatpush1.msra.mxu0 0.0
  %1052 = vmatprep.subr.mxu0 0.0
  %1053 = vmatpush1.msra.mxu0 0.0
  %1054 = vmatprep.subr.mxu0 0.0
  %1055 = vmatpush1.msra.mxu0 0.0
  %1056 = vmatprep.subr.mxu0 0.0
  %1057 = vmatpush1.msra.mxu0 0.0
  %1058 = vmatprep.subr.mxu0 0.0
  %1059 = vmatpush1.msra.mxu0 0.0
  %1060 = vmatprep.subr.mxu0 0.0
  %1061 = vmatpush1.msra.mxu0 0.0
  %1062 = vmatprep.subr.mxu0 0.0
  %1063 = vmatpush1.msra.mxu0 0.0
  %1064 = vmatprep.subr.mxu0 0.0
  %1065 = vmatpush1.msra.mxu0 0.0
  %1066 = vmatprep.subr.mxu0 0.0
  %1067 = vmatpush1.msra.mxu0 0.0
  %1068 = vmatprep.subr.mxu0 0.0
  %1069 = vmatpush1.msra.mxu0 0.0
  %1070 = vmatprep.subr.mxu0 0.0
  %1071 = vmatpush1.msra.mxu0 0.0
  %1072 = vmatprep.subr.mxu0 0.0
  %1073 = vmatpush1.msra.mxu0 0.0
  %1074 = vmatprep.subr.mxu0 0.0
  %1075 = vmatpush1.msra.mxu0 0.0
  %1076 = vmatprep.subr.mxu0 0.0
  %1077 = vmatpush1.msra.mxu0 0.0
  %1078 = vmatprep.subr.mxu0 0.0
  %1079 = vmatpush1.msra.mxu0 0.0
  %1080 = vmatprep.subr.mxu0 0.0
  %1081 = vmatpush1.msra.mxu0 0.0
  %1082 = vmatprep.subr.mxu0 0.0
  %1083 = vmatpush1.msra.mxu0 0.0
  %1084 = vmatprep.subr.mxu0 0.0
  %1085 = vmatpush1.msra.mxu0 0.0
  %1086 = vmatprep.subr.mxu0 0.0
  %1087 = vmatpush1.msra.mxu0 0.0
  %1088 = vmatprep.subr.mxu0 0.0
  %1089 = vmatpush1.msra.mxu0 0.0
  %1090 = vmatprep.subr.mxu0 0.0
  %1091 = vmatpush1.msra.mxu0 0.0
  %1092 = vmatprep.subr.mxu0 0.0
  %1093 = vmatpush1.msra.mxu0 0.0
  %1094 = vmatprep.subr.mxu0 0.0
  %1095 = vmatpush1.msra.mxu0 0.0
  %1096 = vmatprep.mubr.f32.mxu0 0.0
  %1097 = vmatmul.mubr.f32.gmra.mrb[0].mxu0 %v1030
  %v1098 = vpop.f32.mrb[0].mxu0
  %v1099 = vadd.f32 0.0, %v1098
  %v1100 = vpop.f32.mrb[0].mxu0
  %1101 = vdwg.mxu0
  %v1102 = vadd.f32 %v1025, %v1099
  %s1103 = scalar_lea.vmem %s44, 6
  %v1104 = vld [vmem:[%s1103] sm:$0x3]
  %v1105 = vld [vmem:[#allocation4] sm:$0x3]
  %v1106 = vld [vmem:[%s3] sm:$0xff]
  %v1107 = vld [vmem:[%s3 + $0x8] sm:$0xff]
  %v1109 = vsel %vm68, %v1105, 0
  %1111 = vmatprep.subr.mxu0 0.0
  %1112 = vmatpush1.msra.mxu0 %v1106
  %1113 = vmatprep.subr.mxu0 0.0
  %1114 = vmatpush1.msra.mxu0 %v1107
  %1115 = vmatprep.subr.mxu0 0.0
  %1116 = vmatpush1.msra.mxu0 0.0
  %1117 = vmatprep.subr.mxu0 0.0
  %1118 = vmatpush1.msra.mxu0 0.0
  %1119 = vmatprep.subr.mxu0 0.0
  %1120 = vmatpush1.msra.mxu0 0.0
  %1121 = vmatprep.subr.mxu0 0.0
  %1122 = vmatpush1.msra.mxu0 0.0
  %1123 = vmatprep.subr.mxu0 0.0
  %1124 = vmatpush1.msra.mxu0 0.0
  %1125 = vmatprep.subr.mxu0 0.0
  %1126 = vmatpush1.msra.mxu0 0.0
  %1127 = vmatprep.subr.mxu0 0.0
  %1128 = vmatpush1.msra.mxu0 0.0
  %1129 = vmatprep.subr.mxu0 0.0
  %1130 = vmatpush1.msra.mxu0 0.0
  %1131 = vmatprep.subr.mxu0 0.0
  %1132 = vmatpush1.msra.mxu0 0.0
  %1133 = vmatprep.subr.mxu0 0.0
  %1134 = vmatpush1.msra.mxu0 0.0
  %1135 = vmatprep.subr.mxu0 0.0
  %1136 = vmatpush1.msra.mxu0 0.0
  %1137 = vmatprep.subr.mxu0 0.0
  %1138 = vmatpush1.msra.mxu0 0.0
  %1139 = vmatprep.subr.mxu0 0.0
  %1140 = vmatpush1.msra.mxu0 0.0
  %1141 = vmatprep.subr.mxu0 0.0
  %1142 = vmatpush1.msra.mxu0 0.0
  %1143 = vmatprep.subr.mxu0 0.0
  %1144 = vmatpush1.msra.mxu0 0.0
  %1145 = vmatprep.subr.mxu0 0.0
  %1146 = vmatpush1.msra.mxu0 0.0
  %1147 = vmatprep.subr.mxu0 0.0
  %1148 = vmatpush1.msra.mxu0 0.0
  %1149 = vmatprep.subr.mxu0 0.0
  %1150 = vmatpush1.msra.mxu0 0.0
  %1151 = vmatprep.subr.mxu0 0.0
  %1152 = vmatpush1.msra.mxu0 0.0
  %1153 = vmatprep.subr.mxu0 0.0
  %1154 = vmatpush1.msra.mxu0 0.0
  %1155 = vmatprep.subr.mxu0 0.0
  %1156 = vmatpush1.msra.mxu0 0.0
  %1157 = vmatprep.subr.mxu0 0.0
  %1158 = vmatpush1.msra.mxu0 0.0
  %1159 = vmatprep.subr.mxu0 0.0
  %1160 = vmatpush1.msra.mxu0 0.0
  %1161 = vmatprep.subr.mxu0 0.0
  %1162 = vmatpush1.msra.mxu0 0.0
  %1163 = vmatprep.subr.mxu0 0.0
  %1164 = vmatpush1.msra.mxu0 0.0
  %1165 = vmatprep.subr.mxu0 0.0
  %1166 = vmatpush1.msra.mxu0 0.0
  %1167 = vmatprep.subr.mxu0 0.0
  %1168 = vmatpush1.msra.mxu0 0.0
  %1169 = vmatprep.subr.mxu0 0.0
  %1170 = vmatpush1.msra.mxu0 0.0
  %1171 = vmatprep.subr.mxu0 0.0
  %1172 = vmatpush1.msra.mxu0 0.0
  %1173 = vmatprep.subr.mxu0 0.0
  %1174 = vmatpush1.msra.mxu0 0.0
  %1175 = vmatprep.mubr.f32.mxu0 0.0
  %1176 = vmatmul.mubr.f32.gmra.mrb[0].mxu0 %v1109
  %v1177 = vpop.f32.mrb[0].mxu0
  %v1178 = vadd.f32 0.0, %v1177
  %v1179 = vpop.f32.mrb[0].mxu0
  %1180 = vdwg.mxu0
  %v1181 = vadd.f32 %v1104, %v1178
  %v1182 = vxor.u32 %v1102, 2147483648
  %v1183 = vmul.f32 %v1182, 1.442695
  %v1184 = vpow.pop %v1183
  %v1185 = vadd.f32 %v1184, 1.0
  %v1186 = vrcp.pop %v1185
  %v1187 = vmul.f32 1.0, %v1186
  %v1188 = vxor.u32 %v1181, 2147483648
  %v1189 = vmul.f32 %v1188, 1.442695
  %v1190 = vpow.pop %v1189
  %v1191 = vadd.f32 %v1190, 1.0
  %v1192 = vrcp.pop %v1191
  %v1193 = vmul.f32 1.0, %v1192
  %v1194 = vtanh.pop %v1102
  %v1195 = vtanh.pop %v1181
  %v1196 = vld [vmem:[#allocation3] sm:$0x3]
  %1198 = vrot.lane.b32.xlu0 %v1196, 16
  %v1199 = vpop.permute.xlu0 %1198
  %v1201 = vmul.f32 %v1187, %v1199
  %1203 = vrot.lane.b32.xlu0 %v1194, 80
  %v1204 = vpop.permute.xlu0 %1203
  %v1206 = vmul.f32 %v1187, %v1204
  %1208 = vrot.lane.b32.xlu0 %v1206, 16
  %v1209 = vpop.permute.xlu0 %1208
  %v1211 = vadd.f32 %v1201, %v1209
  %v1212 = vld [vmem:[#allocation5] sm:$0x3]
  %1214 = vrot.lane.b32.xlu0 %v1212, 16
  %v1215 = vpop.permute.xlu0 %1214
  %v1217 = vmul.f32 %v1193, %v1215
  %1219 = vrot.lane.b32.xlu0 %v1195, 80
  %v1220 = vpop.permute.xlu0 %1219
  %v1222 = vmul.f32 %v1193, %v1220
  %1224 = vrot.lane.b32.xlu0 %v1222, 16
  %v1225 = vpop.permute.xlu0 %1224
  %v1227 = vadd.f32 %v1217, %v1225
  %v1228 = vtanh.pop %v1211
  %1230 = vrot.lane.b32.xlu0 %v1228, 16
  %v1231 = vpop.permute.xlu0 %1230
  %v1233 = vmul.f32 %v1187, %v1231
  %v1234 = vtanh.pop %v1227
  %1236 = vrot.lane.b32.xlu0 %v1234, 16
  %v1237 = vpop.permute.xlu0 %1236
  %v1239 = vmul.f32 %v1193, %v1237
  %1241 = vrot.lane.b32.xlu0 %v1211, 112
  %v1242 = vpop.permute.xlu0 %1241
  %1244 = vst.msk [vmem:[#allocation3] sm:$0x3] %vm284, %v1242
  %1246 = vrot.lane.b32.xlu0 %v1227, 112
  %v1247 = vpop.permute.xlu0 %1246
  %1249 = vst.msk [vmem:[#allocation5] sm:$0x3] %vm284, %v1247
  %1251 = vrot.lane.b32.xlu0 %v1233, 96
  %v1252 = vpop.permute.xlu0 %1251
  %1254 = vst.msk [vmem:[#allocation2] sm:$0x3] %vm284, %v1252
  %1256 = vrot.lane.b32.xlu0 %v1239, 96
  %v1257 = vpop.permute.xlu0 %1256
  %1259 = vst.msk [vmem:[#allocation4] sm:$0x3] %vm284, %v1257
  %s1260 = scalar_lea.vmem %s4, 8
  %1261 = vst.msk [vmem:[%s1260] sm:$0x3] %vm284, %v1252
  %s1262 = scalar_lea.vmem %s52, 6
  %1263 = vst.msk [vmem:[%s1262] sm:$0x3] %vm284, %v1257
  %s1264 = scalar_lea.vmem %s0, 10
  %v1265 = vld [vmem:[%s1264] sm:$0x3]
  %v1266 = vld [vmem:[#allocation2] sm:$0x3]
  %v1267 = vld [vmem:[%s2] sm:$0xff]
  %v1268 = vld [vmem:[%s2 + $0x8] sm:$0xff]
  %v1270 = vsel %vm68, %v1266, 0
  %1272 = vmatprep.subr.mxu0 0.0
  %1273 = vmatpush1.msra.mxu0 %v1267
  %1274 = vmatprep.subr.mxu0 0.0
  %1275 = vmatpush1.msra.mxu0 %v1268
  %1276 = vmatprep.subr.mxu0 0.0
  %1277 = vmatpush1.msra.mxu0 0.0
  %1278 = vmatprep.subr.mxu0 0.0
  %1279 = vmatpush1.msra.mxu0 0.0
  %1280 = vmatprep.subr.mxu0 0.0
  %1281 = vmatpush1.msra.mxu0 0.0
  %1282 = vmatprep.subr.mxu0 0.0
  %1283 = vmatpush1.msra.mxu0 0.0
  %1284 = vmatprep.subr.mxu0 0.0
  %1285 = vmatpush1.msra.mxu0 0.0
  %1286 = vmatprep.subr.mxu0 0.0
  %1287 = vmatpush1.msra.mxu0 0.0
  %1288 = vmatprep.subr.mxu0 0.0
  %1289 = vmatpush1.msra.mxu0 0.0
  %1290 = vmatprep.subr.mxu0 0.0
  %1291 = vmatpush1.msra.mxu0 0.0
  %1292 = vmatprep.subr.mxu0 0.0
  %1293 = vmatpush1.msra.mxu0 0.0
  %1294 = vmatprep.subr.mxu0 0.0
  %1295 = vmatpush1.msra.mxu0 0.0
  %1296 = vmatprep.subr.mxu0 0.0
  %1297 = vmatpush1.msra.mxu0 0.0
  %1298 = vmatprep.subr.mxu0 0.0
  %1299 = vmatpush1.msra.mxu0 0.0
  %1300 = vmatprep.subr.mxu0 0.0
  %1301 = vmatpush1.msra.mxu0 0.0
  %1302 = vmatprep.subr.mxu0 0.0
  %1303 = vmatpush1.msra.mxu0 0.0
  %1304 = vmatprep.subr.mxu0 0.0
  %1305 = vmatpush1.msra.mxu0 0.0
  %1306 = vmatprep.subr.mxu0 0.0
  %1307 = vmatpush1.msra.mxu0 0.0
  %1308 = vmatprep.subr.mxu0 0.0
  %1309 = vmatpush1.msra.mxu0 0.0
  %1310 = vmatprep.subr.mxu0 0.0
  %1311 = vmatpush1.msra.mxu0 0.0
  %1312 = vmatprep.subr.mxu0 0.0
  %1313 = vmatpush1.msra.mxu0 0.0
  %1314 = vmatprep.subr.mxu0 0.0
  %1315 = vmatpush1.msra.mxu0 0.0
  %1316 = vmatprep.subr.mxu0 0.0
  %1317 = vmatpush1.msra.mxu0 0.0
  %1318 = vmatprep.subr.mxu0 0.0
  %1319 = vmatpush1.msra.mxu0 0.0
  %1320 = vmatprep.subr.mxu0 0.0
  %1321 = vmatpush1.msra.mxu0 0.0
  %1322 = vmatprep.subr.mxu0 0.0
  %1323 = vmatpush1.msra.mxu0 0.0
  %1324 = vmatprep.subr.mxu0 0.0
  %1325 = vmatpush1.msra.mxu0 0.0
  %1326 = vmatprep.subr.mxu0 0.0
  %1327 = vmatpush1.msra.mxu0 0.0
  %1328 = vmatprep.subr.mxu0 0.0
  %1329 = vmatpush1.msra.mxu0 0.0
  %1330 = vmatprep.subr.mxu0 0.0
  %1331 = vmatpush1.msra.mxu0 0.0
  %1332 = vmatprep.subr.mxu0 0.0
  %1333 = vmatpush1.msra.mxu0 0.0
  %1334 = vmatprep.subr.mxu0 0.0
  %1335 = vmatpush1.msra.mxu0 0.0
  %1336 = vmatprep.mubr.f32.mxu0 0.0
  %1337 = vmatmul.mubr.f32.gmra.mrb[0].mxu0 %v1270
  %v1338 = vpop.f32.mrb[0].mxu0
  %v1339 = vadd.f32 0.0, %v1338
  %v1340 = vpop.f32.mrb[0].mxu0
  %1341 = vdwg.mxu0
  %v1342 = vadd.f32 %v1265, %v1339
  %s1343 = scalar_lea.vmem %s44, 4
  %v1344 = vld [vmem:[%s1343] sm:$0x3]
  %v1345 = vld [vmem:[#allocation4] sm:$0x3]
  %v1346 = vld [vmem:[%s3] sm:$0xff]
  %v1347 = vld [vmem:[%s3 + $0x8] sm:$0xff]
  %v1349 = vsel %vm68, %v1345, 0
  %1351 = vmatprep.subr.mxu0 0.0
  %1352 = vmatpush1.msra.mxu0 %v1346
  %1353 = vmatprep.subr.mxu0 0.0
  %1354 = vmatpush1.msra.mxu0 %v1347
  %1355 = vmatprep.subr.mxu0 0.0
  %1356 = vmatpush1.msra.mxu0 0.0
  %1357 = vmatprep.subr.mxu0 0.0
  %1358 = vmatpush1.msra.mxu0 0.0
  %1359 = vmatprep.subr.mxu0 0.0
  %1360 = vmatpush1.msra.mxu0 0.0
  %1361 = vmatprep.subr.mxu0 0.0
  %1362 = vmatpush1.msra.mxu0 0.0
  %1363 = vmatprep.subr.mxu0 0.0
  %1364 = vmatpush1.msra.mxu0 0.0
  %1365 = vmatprep.subr.mxu0 0.0
  %1366 = vmatpush1.msra.mxu0 0.0
  %1367 = vmatprep.subr.mxu0 0.0
  %1368 = vmatpush1.msra.mxu0 0.0
  %1369 = vmatprep.subr.mxu0 0.0
  %1370 = vmatpush1.msra.mxu0 0.0
  %1371 = vmatprep.subr.mxu0 0.0
  %1372 = vmatpush1.msra.mxu0 0.0
  %1373 = vmatprep.subr.mxu0 0.0
  %1374 = vmatpush1.msra.mxu0 0.0
  %1375 = vmatprep.subr.mxu0 0.0
  %1376 = vmatpush1.msra.mxu0 0.0
  %1377 = vmatprep.subr.mxu0 0.0
  %1378 = vmatpush1.msra.mxu0 0.0
  %1379 = vmatprep.subr.mxu0 0.0
  %1380 = vmatpush1.msra.mxu0 0.0
  %1381 = vmatprep.subr.mxu0 0.0
  %1382 = vmatpush1.msra.mxu0 0.0
  %1383 = vmatprep.subr.mxu0 0.0
  %1384 = vmatpush1.msra.mxu0 0.0
  %1385 = vmatprep.subr.mxu0 0.0
  %1386 = vmatpush1.msra.mxu0 0.0
  %1387 = vmatprep.subr.mxu0 0.0
  %1388 = vmatpush1.msra.mxu0 0.0
  %1389 = vmatprep.subr.mxu0 0.0
  %1390 = vmatpush1.msra.mxu0 0.0
  %1391 = vmatprep.subr.mxu0 0.0
  %1392 = vmatpush1.msra.mxu0 0.0
  %1393 = vmatprep.subr.mxu0 0.0
  %1394 = vmatpush1.msra.mxu0 0.0
  %1395 = vmatprep.subr.mxu0 0.0
  %1396 = vmatpush1.msra.mxu0 0.0
  %1397 = vmatprep.subr.mxu0 0.0
  %1398 = vmatpush1.msra.mxu0 0.0
  %1399 = vmatprep.subr.mxu0 0.0
  %1400 = vmatpush1.msra.mxu0 0.0
  %1401 = vmatprep.subr.mxu0 0.0
  %1402 = vmatpush1.msra.mxu0 0.0
  %1403 = vmatprep.subr.mxu0 0.0
  %1404 = vmatpush1.msra.mxu0 0.0
  %1405 = vmatprep.subr.mxu0 0.0
  %1406 = vmatpush1.msra.mxu0 0.0
  %1407 = vmatprep.subr.mxu0 0.0
  %1408 = vmatpush1.msra.mxu0 0.0
  %1409 = vmatprep.subr.mxu0 0.0
  %1410 = vmatpush1.msra.mxu0 0.0
  %1411 = vmatprep.subr.mxu0 0.0
  %1412 = vmatpush1.msra.mxu0 0.0
  %1413 = vmatprep.subr.mxu0 0.0
  %1414 = vmatpush1.msra.mxu0 0.0
  %1415 = vmatprep.mubr.f32.mxu0 0.0
  %1416 = vmatmul.mubr.f32.gmra.mrb[0].mxu0 %v1349
  %v1417 = vpop.f32.mrb[0].mxu0
  %v1418 = vadd.f32 0.0, %v1417
  %v1419 = vpop.f32.mrb[0].mxu0
  %1420 = vdwg.mxu0
  %v1421 = vadd.f32 %v1344, %v1418
  %v1422 = vxor.u32 %v1342, 2147483648
  %v1423 = vmul.f32 %v1422, 1.442695
  %v1424 = vpow.pop %v1423
  %v1425 = vadd.f32 %v1424, 1.0
  %v1426 = vrcp.pop %v1425
  %v1427 = vmul.f32 1.0, %v1426
  %v1428 = vxor.u32 %v1421, 2147483648
  %v1429 = vmul.f32 %v1428, 1.442695
  %v1430 = vpow.pop %v1429
  %v1431 = vadd.f32 %v1430, 1.0
  %v1432 = vrcp.pop %v1431
  %v1433 = vmul.f32 1.0, %v1432
  %v1434 = vtanh.pop %v1342
  %v1435 = vtanh.pop %v1421
  %v1436 = vld [vmem:[#allocation3] sm:$0x3]
  %1438 = vrot.lane.b32.xlu0 %v1436, 16
  %v1439 = vpop.permute.xlu0 %1438
  %v1441 = vmul.f32 %v1427, %v1439
  %1443 = vrot.lane.b32.xlu0 %v1434, 80
  %v1444 = vpop.permute.xlu0 %1443
  %v1446 = vmul.f32 %v1427, %v1444
  %1448 = vrot.lane.b32.xlu0 %v1446, 16
  %v1449 = vpop.permute.xlu0 %1448
  %v1451 = vadd.f32 %v1441, %v1449
  %v1452 = vld [vmem:[#allocation5] sm:$0x3]
  %1454 = vrot.lane.b32.xlu0 %v1452, 16
  %v1455 = vpop.permute.xlu0 %1454
  %v1457 = vmul.f32 %v1433, %v1455
  %1459 = vrot.lane.b32.xlu0 %v1435, 80
  %v1460 = vpop.permute.xlu0 %1459
  %v1462 = vmul.f32 %v1433, %v1460
  %1464 = vrot.lane.b32.xlu0 %v1462, 16
  %v1465 = vpop.permute.xlu0 %1464
  %v1467 = vadd.f32 %v1457, %v1465
  %v1468 = vtanh.pop %v1451
  %1470 = vrot.lane.b32.xlu0 %v1468, 16
  %v1471 = vpop.permute.xlu0 %1470
  %v1473 = vmul.f32 %v1427, %v1471
  %v1474 = vtanh.pop %v1467
  %1476 = vrot.lane.b32.xlu0 %v1474, 16
  %v1477 = vpop.permute.xlu0 %1476
  %v1479 = vmul.f32 %v1433, %v1477
  %1481 = vrot.lane.b32.xlu0 %v1451, 112
  %v1482 = vpop.permute.xlu0 %1481
  %1484 = vst.msk [vmem:[#allocation3] sm:$0x3] %vm284, %v1482
  %1486 = vrot.lane.b32.xlu0 %v1467, 112
  %v1487 = vpop.permute.xlu0 %1486
  %1489 = vst.msk [vmem:[#allocation5] sm:$0x3] %vm284, %v1487
  %1491 = vrot.lane.b32.xlu0 %v1473, 96
  %v1492 = vpop.permute.xlu0 %1491
  %1494 = vst.msk [vmem:[#allocation2] sm:$0x3] %vm284, %v1492
  %1496 = vrot.lane.b32.xlu0 %v1479, 96
  %v1497 = vpop.permute.xlu0 %1496
  %1499 = vst.msk [vmem:[#allocation4] sm:$0x3] %vm284, %v1497
  %s1500 = scalar_lea.vmem %s4, 10
  %1501 = vst.msk [vmem:[%s1500] sm:$0x3] %vm284, %v1492
  %s1502 = scalar_lea.vmem %s52, 4
  %1503 = vst.msk [vmem:[%s1502] sm:$0x3] %vm284, %v1497
  %s1504 = scalar_lea.vmem %s0, 12
  %v1505 = vld [vmem:[%s1504] sm:$0x3]
  %v1506 = vld [vmem:[#allocation2] sm:$0x3]
  %v1507 = vld [vmem:[%s2] sm:$0xff]
  %v1508 = vld [vmem:[%s2 + $0x8] sm:$0xff]
  %v1510 = vsel %vm68, %v1506, 0
  %1512 = vmatprep.subr.mxu0 0.0
  %1513 = vmatpush1.msra.mxu0 %v1507
  %1514 = vmatprep.subr.mxu0 0.0
  %1515 = vmatpush1.msra.mxu0 %v1508
  %1516 = vmatprep.subr.mxu0 0.0
  %1517 = vmatpush1.msra.mxu0 0.0
  %1518 = vmatprep.subr.mxu0 0.0
  %1519 = vmatpush1.msra.mxu0 0.0
  %1520 = vmatprep.subr.mxu0 0.0
  %1521 = vmatpush1.msra.mxu0 0.0
  %1522 = vmatprep.subr.mxu0 0.0
  %1523 = vmatpush1.msra.mxu0 0.0
  %1524 = vmatprep.subr.mxu0 0.0
  %1525 = vmatpush1.msra.mxu0 0.0
  %1526 = vmatprep.subr.mxu0 0.0
  %1527 = vmatpush1.msra.mxu0 0.0
  %1528 = vmatprep.subr.mxu0 0.0
  %1529 = vmatpush1.msra.mxu0 0.0
  %1530 = vmatprep.subr.mxu0 0.0
  %1531 = vmatpush1.msra.mxu0 0.0
  %1532 = vmatprep.subr.mxu0 0.0
  %1533 = vmatpush1.msra.mxu0 0.0
  %1534 = vmatprep.subr.mxu0 0.0
  %1535 = vmatpush1.msra.mxu0 0.0
  %1536 = vmatprep.subr.mxu0 0.0
  %1537 = vmatpush1.msra.mxu0 0.0
  %1538 = vmatprep.subr.mxu0 0.0
  %1539 = vmatpush1.msra.mxu0 0.0
  %1540 = vmatprep.subr.mxu0 0.0
  %1541 = vmatpush1.msra.mxu0 0.0
  %1542 = vmatprep.subr.mxu0 0.0
  %1543 = vmatpush1.msra.mxu0 0.0
  %1544 = vmatprep.subr.mxu0 0.0
  %1545 = vmatpush1.msra.mxu0 0.0
  %1546 = vmatprep.subr.mxu0 0.0
  %1547 = vmatpush1.msra.mxu0 0.0
  %1548 = vmatprep.subr.mxu0 0.0
  %1549 = vmatpush1.msra.mxu0 0.0
  %1550 = vmatprep.subr.mxu0 0.0
  %1551 = vmatpush1.msra.mxu0 0.0
  %1552 = vmatprep.subr.mxu0 0.0
  %1553 = vmatpush1.msra.mxu0 0.0
  %1554 = vmatprep.subr.mxu0 0.0
  %1555 = vmatpush1.msra.mxu0 0.0
  %1556 = vmatprep.subr.mxu0 0.0
  %1557 = vmatpush1.msra.mxu0 0.0
  %1558 = vmatprep.subr.mxu0 0.0
  %1559 = vmatpush1.msra.mxu0 0.0
  %1560 = vmatprep.subr.mxu0 0.0
  %1561 = vmatpush1.msra.mxu0 0.0
  %1562 = vmatprep.subr.mxu0 0.0
  %1563 = vmatpush1.msra.mxu0 0.0
  %1564 = vmatprep.subr.mxu0 0.0
  %1565 = vmatpush1.msra.mxu0 0.0
  %1566 = vmatprep.subr.mxu0 0.0
  %1567 = vmatpush1.msra.mxu0 0.0
  %1568 = vmatprep.subr.mxu0 0.0
  %1569 = vmatpush1.msra.mxu0 0.0
  %1570 = vmatprep.subr.mxu0 0.0
  %1571 = vmatpush1.msra.mxu0 0.0
  %1572 = vmatprep.subr.mxu0 0.0
  %1573 = vmatpush1.msra.mxu0 0.0
  %1574 = vmatprep.subr.mxu0 0.0
  %1575 = vmatpush1.msra.mxu0 0.0
  %1576 = vmatprep.mubr.f32.mxu0 0.0
  %1577 = vmatmul.mubr.f32.gmra.mrb[0].mxu0 %v1510
  %v1578 = vpop.f32.mrb[0].mxu0
  %v1579 = vadd.f32 0.0, %v1578
  %v1580 = vpop.f32.mrb[0].mxu0
  %1581 = vdwg.mxu0
  %v1582 = vadd.f32 %v1505, %v1579
  %s1583 = scalar_lea.vmem %s44, 2
  %v1584 = vld [vmem:[%s1583] sm:$0x3]
  %v1585 = vld [vmem:[#allocation4] sm:$0x3]
  %v1586 = vld [vmem:[%s3] sm:$0xff]
  %v1587 = vld [vmem:[%s3 + $0x8] sm:$0xff]
  %v1589 = vsel %vm68, %v1585, 0
  %1591 = vmatprep.subr.mxu0 0.0
  %1592 = vmatpush1.msra.mxu0 %v1586
  %1593 = vmatprep.subr.mxu0 0.0
  %1594 = vmatpush1.msra.mxu0 %v1587
  %1595 = vmatprep.subr.mxu0 0.0
  %1596 = vmatpush1.msra.mxu0 0.0
  %1597 = vmatprep.subr.mxu0 0.0
  %1598 = vmatpush1.msra.mxu0 0.0
  %1599 = vmatprep.subr.mxu0 0.0
  %1600 = vmatpush1.msra.mxu0 0.0
  %1601 = vmatprep.subr.mxu0 0.0
  %1602 = vmatpush1.msra.mxu0 0.0
  %1603 = vmatprep.subr.mxu0 0.0
  %1604 = vmatpush1.msra.mxu0 0.0
  %1605 = vmatprep.subr.mxu0 0.0
  %1606 = vmatpush1.msra.mxu0 0.0
  %1607 = vmatprep.subr.mxu0 0.0
  %1608 = vmatpush1.msra.mxu0 0.0
  %1609 = vmatprep.subr.mxu0 0.0
  %1610 = vmatpush1.msra.mxu0 0.0
  %1611 = vmatprep.subr.mxu0 0.0
  %1612 = vmatpush1.msra.mxu0 0.0
  %1613 = vmatprep.subr.mxu0 0.0
  %1614 = vmatpush1.msra.mxu0 0.0
  %1615 = vmatprep.subr.mxu0 0.0
  %1616 = vmatpush1.msra.mxu0 0.0
  %1617 = vmatprep.subr.mxu0 0.0
  %1618 = vmatpush1.msra.mxu0 0.0
  %1619 = vmatprep.subr.mxu0 0.0
  %1620 = vmatpush1.msra.mxu0 0.0
  %1621 = vmatprep.subr.mxu0 0.0
  %1622 = vmatpush1.msra.mxu0 0.0
  %1623 = vmatprep.subr.mxu0 0.0
  %1624 = vmatpush1.msra.mxu0 0.0
  %1625 = vmatprep.subr.mxu0 0.0
  %1626 = vmatpush1.msra.mxu0 0.0
  %1627 = vmatprep.subr.mxu0 0.0
  %1628 = vmatpush1.msra.mxu0 0.0
  %1629 = vmatprep.subr.mxu0 0.0
  %1630 = vmatpush1.msra.mxu0 0.0
  %1631 = vmatprep.subr.mxu0 0.0
  %1632 = vmatpush1.msra.mxu0 0.0
  %1633 = vmatprep.subr.mxu0 0.0
  %1634 = vmatpush1.msra.mxu0 0.0
  %1635 = vmatprep.subr.mxu0 0.0
  %1636 = vmatpush1.msra.mxu0 0.0
  %1637 = vmatprep.subr.mxu0 0.0
  %1638 = vmatpush1.msra.mxu0 0.0
  %1639 = vmatprep.subr.mxu0 0.0
  %1640 = vmatpush1.msra.mxu0 0.0
  %1641 = vmatprep.subr.mxu0 0.0
  %1642 = vmatpush1.msra.mxu0 0.0
  %1643 = vmatprep.subr.mxu0 0.0
  %1644 = vmatpush1.msra.mxu0 0.0
  %1645 = vmatprep.subr.mxu0 0.0
  %1646 = vmatpush1.msra.mxu0 0.0
  %1647 = vmatprep.subr.mxu0 0.0
  %1648 = vmatpush1.msra.mxu0 0.0
  %1649 = vmatprep.subr.mxu0 0.0
  %1650 = vmatpush1.msra.mxu0 0.0
  %1651 = vmatprep.subr.mxu0 0.0
  %1652 = vmatpush1.msra.mxu0 0.0
  %1653 = vmatprep.subr.mxu0 0.0
  %1654 = vmatpush1.msra.mxu0 0.0
  %1655 = vmatprep.mubr.f32.mxu0 0.0
  %1656 = vmatmul.mubr.f32.gmra.mrb[0].mxu0 %v1589
  %v1657 = vpop.f32.mrb[0].mxu0
  %v1658 = vadd.f32 0.0, %v1657
  %v1659 = vpop.f32.mrb[0].mxu0
  %1660 = vdwg.mxu0
  %v1661 = vadd.f32 %v1584, %v1658
  %v1662 = vxor.u32 %v1582, 2147483648
  %v1663 = vmul.f32 %v1662, 1.442695
  %v1664 = vpow.pop %v1663
  %v1665 = vadd.f32 %v1664, 1.0
  %v1666 = vrcp.pop %v1665
  %v1667 = vmul.f32 1.0, %v1666
  %v1668 = vxor.u32 %v1661, 2147483648
  %v1669 = vmul.f32 %v1668, 1.442695
  %v1670 = vpow.pop %v1669
  %v1671 = vadd.f32 %v1670, 1.0
  %v1672 = vrcp.pop %v1671
  %v1673 = vmul.f32 1.0, %v1672
  %v1674 = vtanh.pop %v1582
  %v1675 = vtanh.pop %v1661
  %v1676 = vld [vmem:[#allocation3] sm:$0x3]
  %1678 = vrot.lane.b32.xlu0 %v1676, 16
  %v1679 = vpop.permute.xlu0 %1678
  %v1681 = vmul.f32 %v1667, %v1679
  %1683 = vrot.lane.b32.xlu0 %v1674, 80
  %v1684 = vpop.permute.xlu0 %1683
  %v1686 = vmul.f32 %v1667, %v1684
  %1688 = vrot.lane.b32.xlu0 %v1686, 16
  %v1689 = vpop.permute.xlu0 %1688
  %v1691 = vadd.f32 %v1681, %v1689
  %v1692 = vld [vmem:[#allocation5] sm:$0x3]
  %1694 = vrot.lane.b32.xlu0 %v1692, 16
  %v1695 = vpop.permute.xlu0 %1694
  %v1697 = vmul.f32 %v1673, %v1695
  %1699 = vrot.lane.b32.xlu0 %v1675, 80
  %v1700 = vpop.permute.xlu0 %1699
  %v1702 = vmul.f32 %v1673, %v1700
  %1704 = vrot.lane.b32.xlu0 %v1702, 16
  %v1705 = vpop.permute.xlu0 %1704
  %v1707 = vadd.f32 %v1697, %v1705
  %v1708 = vtanh.pop %v1691
  %1710 = vrot.lane.b32.xlu0 %v1708, 16
  %v1711 = vpop.permute.xlu0 %1710
  %v1713 = vmul.f32 %v1667, %v1711
  %v1714 = vtanh.pop %v1707
  %1716 = vrot.lane.b32.xlu0 %v1714, 16
  %v1717 = vpop.permute.xlu0 %1716
  %v1719 = vmul.f32 %v1673, %v1717
  %1721 = vrot.lane.b32.xlu0 %v1691, 112
  %v1722 = vpop.permute.xlu0 %1721
  %1724 = vst.msk [vmem:[#allocation3] sm:$0x3] %vm284, %v1722
  %1726 = vrot.lane.b32.xlu0 %v1707, 112
  %v1727 = vpop.permute.xlu0 %1726
  %1729 = vst.msk [vmem:[#allocation5] sm:$0x3] %vm284, %v1727
  %1731 = vrot.lane.b32.xlu0 %v1713, 96
  %v1732 = vpop.permute.xlu0 %1731
  %1734 = vst.msk [vmem:[#allocation2] sm:$0x3] %vm284, %v1732
  %1736 = vrot.lane.b32.xlu0 %v1719, 96
  %v1737 = vpop.permute.xlu0 %1736
  %1739 = vst.msk [vmem:[#allocation4] sm:$0x3] %vm284, %v1737
  %s1740 = scalar_lea.vmem %s4, 12
  %1741 = vst.msk [vmem:[%s1740] sm:$0x3] %vm284, %v1732
  %s1742 = scalar_lea.vmem %s52, 2
  %1743 = vst.msk [vmem:[%s1742] sm:$0x3] %vm284, %v1737
  %s1744 = scalar_lea.vmem %s0, 14
  %v1745 = vld [vmem:[%s1744] sm:$0x3]
  %v1746 = vld [vmem:[#allocation2] sm:$0x3]
  %v1747 = vld [vmem:[%s2] sm:$0xff]
  %v1748 = vld [vmem:[%s2 + $0x8] sm:$0xff]
  %v1750 = vsel %vm68, %v1746, 0
  %1752 = vmatprep.subr.mxu0 0.0
  %1753 = vmatpush1.msra.mxu0 %v1747
  %1754 = vmatprep.subr.mxu0 0.0
  %1755 = vmatpush1.msra.mxu0 %v1748
  %1756 = vmatprep.subr.mxu0 0.0
  %1757 = vmatpush1.msra.mxu0 0.0
  %1758 = vmatprep.subr.mxu0 0.0
  %1759 = vmatpush1.msra.mxu0 0.0
  %1760 = vmatprep.subr.mxu0 0.0
  %1761 = vmatpush1.msra.mxu0 0.0
  %1762 = vmatprep.subr.mxu0 0.0
  %1763 = vmatpush1.msra.mxu0 0.0
  %1764 = vmatprep.subr.mxu0 0.0
  %1765 = vmatpush1.msra.mxu0 0.0
  %1766 = vmatprep.subr.mxu0 0.0
  %1767 = vmatpush1.msra.mxu0 0.0
  %1768 = vmatprep.subr.mxu0 0.0
  %1769 = vmatpush1.msra.mxu0 0.0
  %1770 = vmatprep.subr.mxu0 0.0
  %1771 = vmatpush1.msra.mxu0 0.0
  %1772 = vmatprep.subr.mxu0 0.0
  %1773 = vmatpush1.msra.mxu0 0.0
  %1774 = vmatprep.subr.mxu0 0.0
  %1775 = vmatpush1.msra.mxu0 0.0
  %1776 = vmatprep.subr.mxu0 0.0
  %1777 = vmatpush1.msra.mxu0 0.0
  %1778 = vmatprep.subr.mxu0 0.0
  %1779 = vmatpush1.msra.mxu0 0.0
  %1780 = vmatprep.subr.mxu0 0.0
  %1781 = vmatpush1.msra.mxu0 0.0
  %1782 = vmatprep.subr.mxu0 0.0
  %1783 = vmatpush1.msra.mxu0 0.0
  %1784 = vmatprep.subr.mxu0 0.0
  %1785 = vmatpush1.msra.mxu0 0.0
  %1786 = vmatprep.subr.mxu0 0.0
  %1787 = vmatpush1.msra.mxu0 0.0
  %1788 = vmatprep.subr.mxu0 0.0
  %1789 = vmatpush1.msra.mxu0 0.0
  %1790 = vmatprep.subr.mxu0 0.0
  %1791 = vmatpush1.msra.mxu0 0.0
  %1792 = vmatprep.subr.mxu0 0.0
  %1793 = vmatpush1.msra.mxu0 0.0
  %1794 = vmatprep.subr.mxu0 0.0
  %1795 = vmatpush1.msra.mxu0 0.0
  %1796 = vmatprep.subr.mxu0 0.0
  %1797 = vmatpush1.msra.mxu0 0.0
  %1798 = vmatprep.subr.mxu0 0.0
  %1799 = vmatpush1.msra.mxu0 0.0
  %1800 = vmatprep.subr.mxu0 0.0
  %1801 = vmatpush1.msra.mxu0 0.0
  %1802 = vmatprep.subr.mxu0 0.0
  %1803 = vmatpush1.msra.mxu0 0.0
  %1804 = vmatprep.subr.mxu0 0.0
  %1805 = vmatpush1.msra.mxu0 0.0
  %1806 = vmatprep.subr.mxu0 0.0
  %1807 = vmatpush1.msra.mxu0 0.0
  %1808 = vmatprep.subr.mxu0 0.0
  %1809 = vmatpush1.msra.mxu0 0.0
  %1810 = vmatprep.subr.mxu0 0.0
  %1811 = vmatpush1.msra.mxu0 0.0
  %1812 = vmatprep.subr.mxu0 0.0
  %1813 = vmatpush1.msra.mxu0 0.0
  %1814 = vmatprep.subr.mxu0 0.0
  %1815 = vmatpush1.msra.mxu0 0.0
  %1816 = vmatprep.mubr.f32.mxu0 0.0
  %1817 = vmatmul.mubr.f32.gmra.mrb[0].mxu0 %v1750
  %v1818 = vpop.f32.mrb[0].mxu0
  %v1819 = vadd.f32 0.0, %v1818
  %v1820 = vpop.f32.mrb[0].mxu0
  %1821 = vdwg.mxu0
  %v1822 = vadd.f32 %v1745, %v1819
  %v1823 = vld [vmem:[%s44] sm:$0x3]
  %v1824 = vld [vmem:[#allocation4] sm:$0x3]
  %v1825 = vld [vmem:[%s3] sm:$0xff]
  %v1826 = vld [vmem:[%s3 + $0x8] sm:$0xff]
  %v1828 = vsel %vm68, %v1824, 0
  %1830 = vmatprep.subr.mxu0 0.0
  %1831 = vmatpush1.msra.mxu0 %v1825
  %1832 = vmatprep.subr.mxu0 0.0
  %1833 = vmatpush1.msra.mxu0 %v1826
  %1834 = vmatprep.subr.mxu0 0.0
  %1835 = vmatpush1.msra.mxu0 0.0
  %1836 = vmatprep.subr.mxu0 0.0
  %1837 = vmatpush1.msra.mxu0 0.0
  %1838 = vmatprep.subr.mxu0 0.0
  %1839 = vmatpush1.msra.mxu0 0.0
  %1840 = vmatprep.subr.mxu0 0.0
  %1841 = vmatpush1.msra.mxu0 0.0
  %1842 = vmatprep.subr.mxu0 0.0
  %1843 = vmatpush1.msra.mxu0 0.0
  %1844 = vmatprep.subr.mxu0 0.0
  %1845 = vmatpush1.msra.mxu0 0.0
  %1846 = vmatprep.subr.mxu0 0.0
  %1847 = vmatpush1.msra.mxu0 0.0
  %1848 = vmatprep.subr.mxu0 0.0
  %1849 = vmatpush1.msra.mxu0 0.0
  %1850 = vmatprep.subr.mxu0 0.0
  %1851 = vmatpush1.msra.mxu0 0.0
  %1852 = vmatprep.subr.mxu0 0.0
  %1853 = vmatpush1.msra.mxu0 0.0
  %1854 = vmatprep.subr.mxu0 0.0
  %1855 = vmatpush1.msra.mxu0 0.0
  %1856 = vmatprep.subr.mxu0 0.0
  %1857 = vmatpush1.msra.mxu0 0.0
  %1858 = vmatprep.subr.mxu0 0.0
  %1859 = vmatpush1.msra.mxu0 0.0
  %1860 = vmatprep.subr.mxu0 0.0
  %1861 = vmatpush1.msra.mxu0 0.0
  %1862 = vmatprep.subr.mxu0 0.0
  %1863 = vmatpush1.msra.mxu0 0.0
  %1864 = vmatprep.subr.mxu0 0.0
  %1865 = vmatpush1.msra.mxu0 0.0
  %1866 = vmatprep.subr.mxu0 0.0
  %1867 = vmatpush1.msra.mxu0 0.0
  %1868 = vmatprep.subr.mxu0 0.0
  %1869 = vmatpush1.msra.mxu0 0.0
  %1870 = vmatprep.subr.mxu0 0.0
  %1871 = vmatpush1.msra.mxu0 0.0
  %1872 = vmatprep.subr.mxu0 0.0
  %1873 = vmatpush1.msra.mxu0 0.0
  %1874 = vmatprep.subr.mxu0 0.0
  %1875 = vmatpush1.msra.mxu0 0.0
  %1876 = vmatprep.subr.mxu0 0.0
  %1877 = vmatpush1.msra.mxu0 0.0
  %1878 = vmatprep.subr.mxu0 0.0
  %1879 = vmatpush1.msra.mxu0 0.0
  %1880 = vmatprep.subr.mxu0 0.0
  %1881 = vmatpush1.msra.mxu0 0.0
  %1882 = vmatprep.subr.mxu0 0.0
  %1883 = vmatpush1.msra.mxu0 0.0
  %1884 = vmatprep.subr.mxu0 0.0
  %1885 = vmatpush1.msra.mxu0 0.0
  %1886 = vmatprep.subr.mxu0 0.0
  %1887 = vmatpush1.msra.mxu0 0.0
  %1888 = vmatprep.subr.mxu0 0.0
  %1889 = vmatpush1.msra.mxu0 0.0
  %1890 = vmatprep.subr.mxu0 0.0
  %1891 = vmatpush1.msra.mxu0 0.0
  %1892 = vmatprep.subr.mxu0 0.0
  %1893 = vmatpush1.msra.mxu0 0.0
  %1894 = vmatprep.mubr.f32.mxu0 0.0
  %1895 = vmatmul.mubr.f32.gmra.mrb[0].mxu0 %v1828
  %v1896 = vpop.f32.mrb[0].mxu0
  %v1897 = vadd.f32 0.0, %v1896
  %v1898 = vpop.f32.mrb[0].mxu0
  %1899 = vdwg.mxu0
  %v1900 = vadd.f32 %v1823, %v1897
  %v1901 = vxor.u32 %v1822, 2147483648
  %v1902 = vmul.f32 %v1901, 1.442695
  %v1903 = vpow.pop %v1902
  %v1904 = vadd.f32 %v1903, 1.0
  %v1905 = vrcp.pop %v1904
  %v1906 = vmul.f32 1.0, %v1905
  %v1907 = vxor.u32 %v1900, 2147483648
  %v1908 = vmul.f32 %v1907, 1.442695
  %v1909 = vpow.pop %v1908
  %v1910 = vadd.f32 %v1909, 1.0
  %v1911 = vrcp.pop %v1910
  %v1912 = vmul.f32 1.0, %v1911
  %v1913 = vtanh.pop %v1822
  %v1914 = vtanh.pop %v1900
  %v1915 = vld [vmem:[#allocation3] sm:$0x3]
  %1917 = vrot.lane.b32.xlu0 %v1915, 16
  %v1918 = vpop.permute.xlu0 %1917
  %v1920 = vmul.f32 %v1906, %v1918
  %1922 = vrot.lane.b32.xlu0 %v1913, 80
  %v1923 = vpop.permute.xlu0 %1922
  %v1925 = vmul.f32 %v1906, %v1923
  %1927 = vrot.lane.b32.xlu0 %v1925, 16
  %v1928 = vpop.permute.xlu0 %1927
  %v1930 = vadd.f32 %v1920, %v1928
  %v1931 = vld [vmem:[#allocation5] sm:$0x3]
  %1933 = vrot.lane.b32.xlu0 %v1931, 16
  %v1934 = vpop.permute.xlu0 %1933
  %v1936 = vmul.f32 %v1912, %v1934
  %1938 = vrot.lane.b32.xlu0 %v1914, 80
  %v1939 = vpop.permute.xlu0 %1938
  %v1941 = vmul.f32 %v1912, %v1939
  %1943 = vrot.lane.b32.xlu0 %v1941, 16
  %v1944 = vpop.permute.xlu0 %1943
  %v1946 = vadd.f32 %v1936, %v1944
  %v1947 = vtanh.pop %v1930
  %1949 = vrot.lane.b32.xlu0 %v1947, 16
  %v1950 = vpop.permute.xlu0 %1949
  %v1952 = vmul.f32 %v1906, %v1950
  %v1953 = vtanh.pop %v1946
  %1955 = vrot.lane.b32.xlu0 %v1953, 16
  %v1956 = vpop.permute.xlu0 %1955
  %v1958 = vmul.f32 %v1912, %v1956
  %1960 = vrot.lane.b32.xlu0 %v1930, 112
  %v1961 = vpop.permute.xlu0 %1960
  %1963 = vst.msk [vmem:[#allocation3] sm:$0x3] %vm284, %v1961
  %1965 = vrot.lane.b32.xlu0 %v1946, 112
  %v1966 = vpop.permute.xlu0 %1965
  %1968 = vst.msk [vmem:[#allocation5] sm:$0x3] %vm284, %v1966
  %1970 = vrot.lane.b32.xlu0 %v1952, 96
  %v1971 = vpop.permute.xlu0 %1970
  %1973 = vst.msk [vmem:[#allocation2] sm:$0x3] %vm284, %v1971
  %1975 = vrot.lane.b32.xlu0 %v1958, 96
  %v1976 = vpop.permute.xlu0 %1975
  %1978 = vst.msk [vmem:[#allocation4] sm:$0x3] %vm284, %v1976
  %s1979 = scalar_lea.vmem %s4, 14
  %1980 = vst.msk [vmem:[%s1979] sm:$0x3] %vm284, %v1971
  %1981 = vst.msk [vmem:[%s52] sm:$0x3] %vm284, %v1976
  %s1982 = ssub.s32 0, 0
  %s1983 = smul.u32 8, %s1982
  %p1984 = scmp.lt.s32.totalorder %s1983, 7
  %s1985 = scalar_select %p1984, %s1983, 7
  %s1986 = smul.addr %s1985, 2
  %s1987 = scalar_lea.vmem %s5, %s1986
  // Predicated region
  $region22: #{_lambda_.14} parent=0 // pred_check
    _
  $region23: #{_lambda_.14} parent=0 // pred_check_branch
    %1989 = sbr.rel (0) target = $region25
  $region24: #{_lambda_.14} parent=0 // pred_region
    _
  $region25: #{_lambda_.14} parent=0 // pred_fallthru
    _
  // Predicated region
  $region26: #{_lambda_.14} parent=0 // pred_check
    _
  $region27: #{_lambda_.14} parent=0 // pred_check_branch
    %1991 = sbr.rel (0) target = $region29
  $region28: #{_lambda_.14} parent=0 // pred_region
    %s1992 = ssub.s32 0, 0
    %s1993 = smul.u32 8, %s1992
  $region29: #{_lambda_.14} parent=0 // pred_fallthru
    _
  // Predicated region
  $region30: #{_lambda_.14} parent=0 // pred_check
    _
  $region31: #{_lambda_.14} parent=0 // pred_check_branch
    %1995 = sbr.rel (0) target = $region33
  $region32: #{_lambda_.14} parent=0 // pred_region
    _
  $region33: #{_lambda_.14} parent=0 // pred_fallthru
    _
  // Predicated region
  $region34: #{_lambda_.14} parent=0 // pred_check
    _
  $region35: #{_lambda_.14} parent=0 // pred_check_branch
    %1997 = sbr.rel (0) target = $region37
  $region36: #{_lambda_.14} parent=0 // pred_region
    %s1998 = ssub.s32 0, 0
    %s1999 = smul.u32 8, %s1998
    %p2000 = scmp.lt.s32.totalorder %s1999, 7
    %s2001 = scalar_select %p2000, %s1999, 7
    %s2002 = smul.addr %s2001, 2
    %s2003 = scalar_lea.vmem %s5, %s2002
  $region37: #{_lambda_.14} parent=0 // pred_fallthru
    _

</llo_original>
